<compile_context>
chip_gen: v6e
topology: v6e:2x2x1
jax: 0.10.0
libtpu: 0.0.40
codegen_flags: <defaults>
</compile_context>

<pallas_src>
import jax
import jax.numpy as jnp
from jax import lax
from jax.experimental import pallas as pl
from jax.experimental.pallas import tpu as pltpu  # noqa: F401  (TPU backend)

# ---- sizes implied by the module -------------------------------------------
N = 2              # batch
CIN = 3            # Conv2d in channels
COUT = 32          # Conv2d out channels
H = W = 6          # spatial size implied by the 32*3*3 flatten after MaxPool2d(2)
KH = KW = 3
OH = OW = H        # padding=1, stride=1 preserves spatial size
PH = PW = 3        # after 2x2 max pool
HID = 128
NCLS = 10
NCLS_PAD = 128     # lane-dense padded class head
FLAT = COUT * PH * PW  # 288


def _full_spec(shape):
    # single-program kernel: whole array as one VMEM block
    return pl.BlockSpec(shape, lambda: (0,) * len(shape))


# ---------- fused kernel: conv3x3 + maxpool2x2 + ReLU + MLP ------------------
def fused_net2_kernel(xpad_ref, wcb_ref, bc_ref, w1_ref, b1_ref, w2_ref, b2_ref,
                      o_ref):
    # xpad_ref : (N, 8, 8, CIN)     zero-padded NHWC input
    # wcb_ref  : (27, 6, COUT)      conv weight rows (kh,kw,cin), pre-broadcast
    #                               along the sublane (width) axis
    # w1_ref   : (9, COUT, HID)     fc1 weight regrouped per pool position

    # ---- direct 3x3 conv: 9 taps x 3 channels of broadcast FMA (VPU) -------
    acc = jnp.zeros((N, OH, OW, COUT), jnp.float32)
    for kh in range(KH):
        for kw in range(KW):
            xs = xpad_ref[:, kh:kh + OH, kw:kw + OW, :]          # (N,6,6,CIN)
            for c in range(CIN):
                r = (kh * KW + kw) * CIN + c
                acc = acc + xs[..., c:c + 1] * wcb_ref[r]        # (N,6,6,1)*(6,COUT)

    # ---- 2x2 max pool, then bias+ReLU, then fc1 accumulated on the MXU ------
    bc = bc_ref[...]                                             # (1, COUT)
    h = jnp.zeros((N, HID), jnp.float32) + b1_ref[...]           # fc1 accumulator
    for ph in range(PH):
        for pw in range(PW):
            m = jnp.maximum(
                jnp.maximum(acc[:, 2 * ph, 2 * pw, :],
                            acc[:, 2 * ph, 2 * pw + 1, :]),
                jnp.maximum(acc[:, 2 * ph + 1, 2 * pw, :],
                            acc[:, 2 * ph + 1, 2 * pw + 1, :]))  # (N, COUT)
            m = jnp.maximum(m + bc, 0.0)        # bias+ReLU commute with max pool
            p = ph * PW + pw
            h = h + jnp.dot(m, w1_ref[p], preferred_element_type=jnp.float32)

    # ---- ReLU + Linear(128, 128-padded) on the MXU, lane-dense store --------
    h = jnp.maximum(h, 0.0)
    o_ref[...] = jnp.dot(h, w2_ref[...], preferred_element_type=jnp.float32) + b2_ref[...]


def _fused_call(xpad, wcb, bc, w1b, b1r, w2p, b2p):
    flops = 2 * (N * OH * OW * COUT * KH * KW * CIN    # conv
                 + N * FLAT * HID                       # fc1
                 + N * HID * NCLS_PAD)                  # fc2 (padded)
    bytes_accessed = 4 * (xpad.size + wcb.size + bc.size + w1b.size + b1r.size
                          + w2p.size + b2p.size + N * NCLS_PAD)
    return pl.pallas_call(
        fused_net2_kernel,
        out_shape=jax.ShapeDtypeStruct((N, NCLS_PAD), jnp.float32),
        in_specs=[_full_spec(xpad.shape), _full_spec(wcb.shape), _full_spec(bc.shape),
                  _full_spec(w1b.shape), _full_spec(b1r.shape),
                  _full_spec(w2p.shape), _full_spec(b2p.shape)],
        out_specs=_full_spec((N, NCLS_PAD)),
        cost_estimate=pl.CostEstimate(flops=flops, transcendentals=0,
                                      bytes_accessed=bytes_accessed),
    )(xpad, wcb, bc, w1b, b1r, w2p, b2p)


# ---------- parameter preparation (one-time, off the hot path) ---------------
def prepare_params(params):
    w_conv, b_conv, w1, b1, w2, b2 = params
    # conv weight: torch OIHW -> rows ordered (kh, kw, cin), cols = cout,
    # then pre-broadcast each row along the sublane (output-width) axis so the
    # kernel multiplies ready-shaped (6, COUT) operands (no runtime broadcasts).
    wc = jnp.transpose(w_conv, (2, 3, 1, 0)).reshape(KH * KW * CIN, COUT)
    wcb = jnp.tile(wc[:, None, :], (1, OW, 1))                  # (27, 6, COUT)
    bc = b_conv.reshape(1, COUT)
    # fold the PyTorch NCHW flatten order (row index = c*9 + ph*3 + pw) into
    # per-pool-position weight blocks so fc1 accumulates straight off the pool.
    w1b = jnp.transpose(w1.reshape(COUT, PH * PW, HID), (1, 0, 2))  # (9, 32, 128)
    b1r = b1.reshape(1, HID)
    # zero-pad the 10-class head to 128 lanes (lane-dense output store)
    w2p = jnp.zeros((HID, NCLS_PAD), w2.dtype).at[:, :NCLS].set(w2)
    b2p = jnp.zeros((1, NCLS_PAD), b2.dtype).at[0, :NCLS].set(b2)
    return wcb, bc, w1b, b1r, w2p, b2p


# ---------- full forward (single pallas_call, glue fused under one jit) ------
@jax.jit
def net2_forward(x_nchw, wcb, bc, w1b, b1r, w2p, b2p):
    x_nhwc = jnp.transpose(x_nchw, (0, 2, 3, 1))
    xpad = jnp.pad(x_nhwc, ((0, 0), (1, 1), (1, 1), (0, 0)))   # (N, 8, 8, CIN)
    out_pad = _fused_call(xpad, wcb, bc, w1b, b1r, w2p, b2p)   # (N, 128)
    return out_pad[:, :NCLS]


# ---------- pure-JAX reference for a correctness check -----------------------
def net2_reference(x_nchw, params):
    w_conv, b_conv, w1, b1, w2, b2 = params
    y = lax.conv_general_dilated(x_nchw, w_conv, (1, 1), ((1, 1), (1, 1)),
                                 dimension_numbers=("NCHW", "OIHW", "NCHW"))
    y = jnp.maximum(y + b_conv[None, :, None, None], 0.0)
    y = lax.reduce_window(y, -jnp.inf, lax.max, (1, 1, 2, 2), (1, 1, 2, 2), "VALID")
    flat = y.reshape(N, -1)
    h = jnp.maximum(flat @ w1 + b1, 0.0)
    return h @ w2 + b2


if __name__ == "__main__":
    key = jax.random.PRNGKey(0)
    ks = jax.random.split(key, 7)
    x = jax.random.normal(ks[0], (N, CIN, H, W), jnp.float32)
    # deterministic synthetic parameters (shapes match the torch module)
    w_conv = jax.random.normal(ks[1], (COUT, CIN, KH, KW), jnp.float32) * 0.1
    b_conv = jax.random.normal(ks[2], (COUT,), jnp.float32) * 0.1
    w1 = jax.random.normal(ks[3], (FLAT, HID), jnp.float32) * 0.05   # Linear(288,128), stored (in,out)
    b1 = jax.random.normal(ks[4], (HID,), jnp.float32) * 0.05
    w2 = jax.random.normal(ks[5], (HID, NCLS), jnp.float32) * 0.05   # Linear(128,10), stored (in,out)
    b2 = jax.random.normal(ks[6], (NCLS,), jnp.float32) * 0.05
    params = (w_conv, b_conv, w1, b1, w2, b2)

    prepped = prepare_params(params)
    out = jax.block_until_ready(net2_forward(x, *prepped))
    ref = jax.block_until_ready(net2_reference(x, params))
    assert out.shape == (N, NCLS), out.shape
    assert jnp.allclose(out, ref, atol=1e-2, rtol=1e-2), (out, ref)
    print("KERNEL_OK")
</pallas_src>

<mosaic_0001>
module attributes {stable_mosaic.version = 11 : i64} {
  func.func @fused_net2_kernel(%arg0: memref<2x8x8x3xf32, #tpu.memory_space<vmem>>, %arg1: memref<27x6x32xf32, #tpu.memory_space<vmem>>, %arg2: memref<1x32xf32, #tpu.memory_space<vmem>>, %arg3: memref<9x32x128xf32, #tpu.memory_space<vmem>>, %arg4: memref<1x128xf32, #tpu.memory_space<vmem>>, %arg5: memref<128x128xf32, #tpu.memory_space<vmem>>, %arg6: memref<1x128xf32, #tpu.memory_space<vmem>>, %arg7: memref<2x128xf32, #tpu.memory_space<vmem>>) attributes {dimension_semantics = [], scalar_prefetch = 0 : i64, scratch_operands = 0 : i64, tpu.core_type = #tpu.core_type<tc>} {
    %cst = arith.constant 0.000000e+00 : f32
    %0 = vector.broadcast %cst : f32 to vector<2x6x6x32xf32>
    %c0 = arith.constant 0 : index
    %c0_0 = arith.constant 0 : index
    %c0_1 = arith.constant 0 : index
    %c0_2 = arith.constant 0 : index
    %1 = vector.load %arg0[%c0, %c0_0, %c0_1, %c0_2] : memref<2x8x8x3xf32, #tpu.memory_space<vmem>>, vector<2x6x6x3xf32>
    %2 = vector.extract_strided_slice %1 {offsets = [0, 0, 0, 0], sizes = [2, 6, 6, 1], strides = [1, 1, 1, 1]} : vector<2x6x6x3xf32> to vector<2x6x6x1xf32>
    %c0_3 = arith.constant 0 : index
    %c0_4 = arith.constant 0 : index
    %c0_5 = arith.constant 0 : index
    %3 = vector.load %arg1[%c0_3, %c0_4, %c0_5] : memref<27x6x32xf32, #tpu.memory_space<vmem>>, vector<1x6x32xf32>
    %4 = vector.shape_cast %3 : vector<1x6x32xf32> to vector<6x32xf32>
    %5 = vector.shape_cast %4 : vector<6x32xf32> to vector<1x1x6x32xf32>
    %6 = vector.broadcast %2 : vector<2x6x6x1xf32> to vector<2x6x6x32xf32>
    %7 = vector.broadcast %5 : vector<1x1x6x32xf32> to vector<2x6x6x32xf32>
    %8 = arith.mulf %6, %7 : vector<2x6x6x32xf32>
    %9 = arith.addf %0, %8 : vector<2x6x6x32xf32>
    %10 = vector.extract_strided_slice %1 {offsets = [0, 0, 0, 1], sizes = [2, 6, 6, 1], strides = [1, 1, 1, 1]} : vector<2x6x6x3xf32> to vector<2x6x6x1xf32>
    %c1 = arith.constant 1 : index
    %c0_6 = arith.constant 0 : index
    %c0_7 = arith.constant 0 : index
    %11 = vector.load %arg1[%c1, %c0_6, %c0_7] : memref<27x6x32xf32, #tpu.memory_space<vmem>>, vector<1x6x32xf32>
    %12 = vector.shape_cast %11 : vector<1x6x32xf32> to vector<6x32xf32>
    %13 = vector.shape_cast %12 : vector<6x32xf32> to vector<1x1x6x32xf32>
    %14 = vector.broadcast %10 : vector<2x6x6x1xf32> to vector<2x6x6x32xf32>
    %15 = vector.broadcast %13 : vector<1x1x6x32xf32> to vector<2x6x6x32xf32>
    %16 = arith.mulf %14, %15 : vector<2x6x6x32xf32>
    %17 = arith.addf %9, %16 : vector<2x6x6x32xf32>
    %18 = vector.extract_strided_slice %1 {offsets = [0, 0, 0, 2], sizes = [2, 6, 6, 1], strides = [1, 1, 1, 1]} : vector<2x6x6x3xf32> to vector<2x6x6x1xf32>
    %c2 = arith.constant 2 : index
    %c0_8 = arith.constant 0 : index
    %c0_9 = arith.constant 0 : index
    %19 = vector.load %arg1[%c2, %c0_8, %c0_9] : memref<27x6x32xf32, #tpu.memory_space<vmem>>, vector<1x6x32xf32>
    %20 = vector.shape_cast %19 : vector<1x6x32xf32> to vector<6x32xf32>
    %21 = vector.shape_cast %20 : vector<6x32xf32> to vector<1x1x6x32xf32>
    %22 = vector.broadcast %18 : vector<2x6x6x1xf32> to vector<2x6x6x32xf32>
    %23 = vector.broadcast %21 : vector<1x1x6x32xf32> to vector<2x6x6x32xf32>
    %24 = arith.mulf %22, %23 : vector<2x6x6x32xf32>
    %25 = arith.addf %17, %24 : vector<2x6x6x32xf32>
    %c0_10 = arith.constant 0 : index
    %c0_11 = arith.constant 0 : index
    %c1_12 = arith.constant 1 : index
    %c0_13 = arith.constant 0 : index
    %26 = vector.load %arg0[%c0_10, %c0_11, %c1_12, %c0_13] : memref<2x8x8x3xf32, #tpu.memory_space<vmem>>, vector<2x6x6x3xf32>
    %27 = vector.extract_strided_slice %26 {offsets = [0, 0, 0, 0], sizes = [2, 6, 6, 1], strides = [1, 1, 1, 1]} : vector<2x6x6x3xf32> to vector<2x6x6x1xf32>
    %c3 = arith.constant 3 : index
    %c0_14 = arith.constant 0 : index
    %c0_15 = arith.constant 0 : index
    %28 = vector.load %arg1[%c3, %c0_14, %c0_15] : memref<27x6x32xf32, #tpu.memory_space<vmem>>, vector<1x6x32xf32>
    %29 = vector.shape_cast %28 : vector<1x6x32xf32> to vector<6x32xf32>
    %30 = vector.shape_cast %29 : vector<6x32xf32> to vector<1x1x6x32xf32>
    %31 = vector.broadcast %27 : vector<2x6x6x1xf32> to vector<2x6x6x32xf32>
    %32 = vector.broadcast %30 : vector<1x1x6x32xf32> to vector<2x6x6x32xf32>
    %33 = arith.mulf %31, %32 : vector<2x6x6x32xf32>
    %34 = arith.addf %25, %33 : vector<2x6x6x32xf32>
    %35 = vector.extract_strided_slice %26 {offsets = [0, 0, 0, 1], sizes = [2, 6, 6, 1], strides = [1, 1, 1, 1]} : vector<2x6x6x3xf32> to vector<2x6x6x1xf32>
    %c4 = arith.constant 4 : index
    %c0_16 = arith.constant 0 : index
    %c0_17 = arith.constant 0 : index
    %36 = vector.load %arg1[%c4, %c0_16, %c0_17] : memref<27x6x32xf32, #tpu.memory_space<vmem>>, vector<1x6x32xf32>
    %37 = vector.shape_cast %36 : vector<1x6x32xf32> to vector<6x32xf32>
    %38 = vector.shape_cast %37 : vector<6x32xf32> to vector<1x1x6x32xf32>
    %39 = vector.broadcast %35 : vector<2x6x6x1xf32> to vector<2x6x6x32xf32>
    %40 = vector.broadcast %38 : vector<1x1x6x32xf32> to vector<2x6x6x32xf32>
    %41 = arith.mulf %39, %40 : vector<2x6x6x32xf32>
    %42 = arith.addf %34, %41 : vector<2x6x6x32xf32>
    %43 = vector.extract_strided_slice %26 {offsets = [0, 0, 0, 2], sizes = [2, 6, 6, 1], strides = [1, 1, 1, 1]} : vector<2x6x6x3xf32> to vector<2x6x6x1xf32>
    %c5 = arith.constant 5 : index
    %c0_18 = arith.constant 0 : index
    %c0_19 = arith.constant 0 : index
    %44 = vector.load %arg1[%c5, %c0_18, %c0_19] : memref<27x6x32xf32, #tpu.memory_space<vmem>>, vector<1x6x32xf32>
    %45 = vector.shape_cast %44 : vector<1x6x32xf32> to vector<6x32xf32>
    %46 = vector.shape_cast %45 : vector<6x32xf32> to vector<1x1x6x32xf32>
    %47 = vector.broadcast %43 : vector<2x6x6x1xf32> to vector<2x6x6x32xf32>
    %48 = vector.broadcast %46 : vector<1x1x6x32xf32> to vector<2x6x6x32xf32>
    %49 = arith.mulf %47, %48 : vector<2x6x6x32xf32>
    %50 = arith.addf %42, %49 : vector<2x6x6x32xf32>
    %c0_20 = arith.constant 0 : index
    %c0_21 = arith.constant 0 : index
    %c2_22 = arith.constant 2 : index
    %c0_23 = arith.constant 0 : index
    %51 = vector.load %arg0[%c0_20, %c0_21, %c2_22, %c0_23] : memref<2x8x8x3xf32, #tpu.memory_space<vmem>>, vector<2x6x6x3xf32>
    %52 = vector.extract_strided_slice %51 {offsets = [0, 0, 0, 0], sizes = [2, 6, 6, 1], strides = [1, 1, 1, 1]} : vector<2x6x6x3xf32> to vector<2x6x6x1xf32>
    %c6 = arith.constant 6 : index
    %c0_24 = arith.constant 0 : index
    %c0_25 = arith.constant 0 : index
    %53 = vector.load %arg1[%c6, %c0_24, %c0_25] : memref<27x6x32xf32, #tpu.memory_space<vmem>>, vector<1x6x32xf32>
    %54 = vector.shape_cast %53 : vector<1x6x32xf32> to vector<6x32xf32>
    %55 = vector.shape_cast %54 : vector<6x32xf32> to vector<1x1x6x32xf32>
    %56 = vector.broadcast %52 : vector<2x6x6x1xf32> to vector<2x6x6x32xf32>
    %57 = vector.broadcast %55 : vector<1x1x6x32xf32> to vector<2x6x6x32xf32>
    %58 = arith.mulf %56, %57 : vector<2x6x6x32xf32>
    %59 = arith.addf %50, %58 : vector<2x6x6x32xf32>
    %60 = vector.extract_strided_slice %51 {offsets = [0, 0, 0, 1], sizes = [2, 6, 6, 1], strides = [1, 1, 1, 1]} : vector<2x6x6x3xf32> to vector<2x6x6x1xf32>
    %c7 = arith.constant 7 : index
    %c0_26 = arith.constant 0 : index
    %c0_27 = arith.constant 0 : index
    %61 = vector.load %arg1[%c7, %c0_26, %c0_27] : memref<27x6x32xf32, #tpu.memory_space<vmem>>, vector<1x6x32xf32>
    %62 = vector.shape_cast %61 : vector<1x6x32xf32> to vector<6x32xf32>
    %63 = vector.shape_cast %62 : vector<6x32xf32> to vector<1x1x6x32xf32>
    %64 = vector.broadcast %60 : vector<2x6x6x1xf32> to vector<2x6x6x32xf32>
    %65 = vector.broadcast %63 : vector<1x1x6x32xf32> to vector<2x6x6x32xf32>
    %66 = arith.mulf %64, %65 : vector<2x6x6x32xf32>
    %67 = arith.addf %59, %66 : vector<2x6x6x32xf32>
    %68 = vector.extract_strided_slice %51 {offsets = [0, 0, 0, 2], sizes = [2, 6, 6, 1], strides = [1, 1, 1, 1]} : vector<2x6x6x3xf32> to vector<2x6x6x1xf32>
    %c8 = arith.constant 8 : index
    %c0_28 = arith.constant 0 : index
    %c0_29 = arith.constant 0 : index
    %69 = vector.load %arg1[%c8, %c0_28, %c0_29] : memref<27x6x32xf32, #tpu.memory_space<vmem>>, vector<1x6x32xf32>
    %70 = vector.shape_cast %69 : vector<1x6x32xf32> to vector<6x32xf32>
    %71 = vector.shape_cast %70 : vector<6x32xf32> to vector<1x1x6x32xf32>
    %72 = vector.broadcast %68 : vector<2x6x6x1xf32> to vector<2x6x6x32xf32>
    %73 = vector.broadcast %71 : vector<1x1x6x32xf32> to vector<2x6x6x32xf32>
    %74 = arith.mulf %72, %73 : vector<2x6x6x32xf32>
    %75 = arith.addf %67, %74 : vector<2x6x6x32xf32>
    %c0_30 = arith.constant 0 : index
    %c1_31 = arith.constant 1 : index
    %c0_32 = arith.constant 0 : index
    %c0_33 = arith.constant 0 : index
    %76 = vector.load %arg0[%c0_30, %c1_31, %c0_32, %c0_33] : memref<2x8x8x3xf32, #tpu.memory_space<vmem>>, vector<2x6x6x3xf32>
    %77 = vector.extract_strided_slice %76 {offsets = [0, 0, 0, 0], sizes = [2, 6, 6, 1], strides = [1, 1, 1, 1]} : vector<2x6x6x3xf32> to vector<2x6x6x1xf32>
    %c9 = arith.constant 9 : index
    %c0_34 = arith.constant 0 : index
    %c0_35 = arith.constant 0 : index
    %78 = vector.load %arg1[%c9, %c0_34, %c0_35] : memref<27x6x32xf32, #tpu.memory_space<vmem>>, vector<1x6x32xf32>
    %79 = vector.shape_cast %78 : vector<1x6x32xf32> to vector<6x32xf32>
    %80 = vector.shape_cast %79 : vector<6x32xf32> to vector<1x1x6x32xf32>
    %81 = vector.broadcast %77 : vector<2x6x6x1xf32> to vector<2x6x6x32xf32>
    %82 = vector.broadcast %80 : vector<1x1x6x32xf32> to vector<2x6x6x32xf32>
    %83 = arith.mulf %81, %82 : vector<2x6x6x32xf32>
    %84 = arith.addf %75, %83 : vector<2x6x6x32xf32>
    %85 = vector.extract_strided_slice %76 {offsets = [0, 0, 0, 1], sizes = [2, 6, 6, 1], strides = [1, 1, 1, 1]} : vector<2x6x6x3xf32> to vector<2x6x6x1xf32>
    %c10 = arith.constant 10 : index
    %c0_36 = arith.constant 0 : index
    %c0_37 = arith.constant 0 : index
    %86 = vector.load %arg1[%c10, %c0_36, %c0_37] : memref<27x6x32xf32, #tpu.memory_space<vmem>>, vector<1x6x32xf32>
    %87 = vector.shape_cast %86 : vector<1x6x32xf32> to vector<6x32xf32>
    %88 = vector.shape_cast %87 : vector<6x32xf32> to vector<1x1x6x32xf32>
    %89 = vector.broadcast %85 : vector<2x6x6x1xf32> to vector<2x6x6x32xf32>
    %90 = vector.broadcast %88 : vector<1x1x6x32xf32> to vector<2x6x6x32xf32>
    %91 = arith.mulf %89, %90 : vector<2x6x6x32xf32>
    %92 = arith.addf %84, %91 : vector<2x6x6x32xf32>
    %93 = vector.extract_strided_slice %76 {offsets = [0, 0, 0, 2], sizes = [2, 6, 6, 1], strides = [1, 1, 1, 1]} : vector<2x6x6x3xf32> to vector<2x6x6x1xf32>
    %c11 = arith.constant 11 : index
    %c0_38 = arith.constant 0 : index
    %c0_39 = arith.constant 0 : index
    %94 = vector.load %arg1[%c11, %c0_38, %c0_39] : memref<27x6x32xf32, #tpu.memory_space<vmem>>, vector<1x6x32xf32>
    %95 = vector.shape_cast %94 : vector<1x6x32xf32> to vector<6x32xf32>
    %96 = vector.shape_cast %95 : vector<6x32xf32> to vector<1x1x6x32xf32>
    %97 = vector.broadcast %93 : vector<2x6x6x1xf32> to vector<2x6x6x32xf32>
    %98 = vector.broadcast %96 : vector<1x1x6x32xf32> to vector<2x6x6x32xf32>
    %99 = arith.mulf %97, %98 : vector<2x6x6x32xf32>
    %100 = arith.addf %92, %99 : vector<2x6x6x32xf32>
    %c0_40 = arith.constant 0 : index
    %c1_41 = arith.constant 1 : index
    %c1_42 = arith.constant 1 : index
    %c0_43 = arith.constant 0 : index
    %101 = vector.load %arg0[%c0_40, %c1_41, %c1_42, %c0_43] : memref<2x8x8x3xf32, #tpu.memory_space<vmem>>, vector<2x6x6x3xf32>
    %102 = vector.extract_strided_slice %101 {offsets = [0, 0, 0, 0], sizes = [2, 6, 6, 1], strides = [1, 1, 1, 1]} : vector<2x6x6x3xf32> to vector<2x6x6x1xf32>
    %c12 = arith.constant 12 : index
    %c0_44 = arith.constant 0 : index
    %c0_45 = arith.constant 0 : index
    %103 = vector.load %arg1[%c12, %c0_44, %c0_45] : memref<27x6x32xf32, #tpu.memory_space<vmem>>, vector<1x6x32xf32>
    %104 = vector.shape_cast %103 : vector<1x6x32xf32> to vector<6x32xf32>
    %105 = vector.shape_cast %104 : vector<6x32xf32> to vector<1x1x6x32xf32>
    %106 = vector.broadcast %102 : vector<2x6x6x1xf32> to vector<2x6x6x32xf32>
    %107 = vector.broadcast %105 : vector<1x1x6x32xf32> to vector<2x6x6x32xf32>
    %108 = arith.mulf %106, %107 : vector<2x6x6x32xf32>
    %109 = arith.addf %100, %108 : vector<2x6x6x32xf32>
    %110 = vector.extract_strided_slice %101 {offsets = [0, 0, 0, 1], sizes = [2, 6, 6, 1], strides = [1, 1, 1, 1]} : vector<2x6x6x3xf32> to vector<2x6x6x1xf32>
    %c13 = arith.constant 13 : index
    %c0_46 = arith.constant 0 : index
    %c0_47 = arith.constant 0 : index
    %111 = vector.load %arg1[%c13, %c0_46, %c0_47] : memref<27x6x32xf32, #tpu.memory_space<vmem>>, vector<1x6x32xf32>
    %112 = vector.shape_cast %111 : vector<1x6x32xf32> to vector<6x32xf32>
    %113 = vector.shape_cast %112 : vector<6x32xf32> to vector<1x1x6x32xf32>
    %114 = vector.broadcast %110 : vector<2x6x6x1xf32> to vector<2x6x6x32xf32>
    %115 = vector.broadcast %113 : vector<1x1x6x32xf32> to vector<2x6x6x32xf32>
    %116 = arith.mulf %114, %115 : vector<2x6x6x32xf32>
    %117 = arith.addf %109, %116 : vector<2x6x6x32xf32>
    %118 = vector.extract_strided_slice %101 {offsets = [0, 0, 0, 2], sizes = [2, 6, 6, 1], strides = [1, 1, 1, 1]} : vector<2x6x6x3xf32> to vector<2x6x6x1xf32>
    %c14 = arith.constant 14 : index
    %c0_48 = arith.constant 0 : index
    %c0_49 = arith.constant 0 : index
    %119 = vector.load %arg1[%c14, %c0_48, %c0_49] : memref<27x6x32xf32, #tpu.memory_space<vmem>>, vector<1x6x32xf32>
    %120 = vector.shape_cast %119 : vector<1x6x32xf32> to vector<6x32xf32>
    %121 = vector.shape_cast %120 : vector<6x32xf32> to vector<1x1x6x32xf32>
    %122 = vector.broadcast %118 : vector<2x6x6x1xf32> to vector<2x6x6x32xf32>
    %123 = vector.broadcast %121 : vector<1x1x6x32xf32> to vector<2x6x6x32xf32>
    %124 = arith.mulf %122, %123 : vector<2x6x6x32xf32>
    %125 = arith.addf %117, %124 : vector<2x6x6x32xf32>
    %c0_50 = arith.constant 0 : index
    %c1_51 = arith.constant 1 : index
    %c2_52 = arith.constant 2 : index
    %c0_53 = arith.constant 0 : index
    %126 = vector.load %arg0[%c0_50, %c1_51, %c2_52, %c0_53] : memref<2x8x8x3xf32, #tpu.memory_space<vmem>>, vector<2x6x6x3xf32>
    %127 = vector.extract_strided_slice %126 {offsets = [0, 0, 0, 0], sizes = [2, 6, 6, 1], strides = [1, 1, 1, 1]} : vector<2x6x6x3xf32> to vector<2x6x6x1xf32>
    %c15 = arith.constant 15 : index
    %c0_54 = arith.constant 0 : index
    %c0_55 = arith.constant 0 : index
    %128 = vector.load %arg1[%c15, %c0_54, %c0_55] : memref<27x6x32xf32, #tpu.memory_space<vmem>>, vector<1x6x32xf32>
    %129 = vector.shape_cast %128 : vector<1x6x32xf32> to vector<6x32xf32>
    %130 = vector.shape_cast %129 : vector<6x32xf32> to vector<1x1x6x32xf32>
    %131 = vector.broadcast %127 : vector<2x6x6x1xf32> to vector<2x6x6x32xf32>
    %132 = vector.broadcast %130 : vector<1x1x6x32xf32> to vector<2x6x6x32xf32>
    %133 = arith.mulf %131, %132 : vector<2x6x6x32xf32>
    %134 = arith.addf %125, %133 : vector<2x6x6x32xf32>
    %135 = vector.extract_strided_slice %126 {offsets = [0, 0, 0, 1], sizes = [2, 6, 6, 1], strides = [1, 1, 1, 1]} : vector<2x6x6x3xf32> to vector<2x6x6x1xf32>
    %c16 = arith.constant 16 : index
    %c0_56 = arith.constant 0 : index
    %c0_57 = arith.constant 0 : index
    %136 = vector.load %arg1[%c16, %c0_56, %c0_57] : memref<27x6x32xf32, #tpu.memory_space<vmem>>, vector<1x6x32xf32>
    %137 = vector.shape_cast %136 : vector<1x6x32xf32> to vector<6x32xf32>
    %138 = vector.shape_cast %137 : vector<6x32xf32> to vector<1x1x6x32xf32>
    %139 = vector.broadcast %135 : vector<2x6x6x1xf32> to vector<2x6x6x32xf32>
    %140 = vector.broadcast %138 : vector<1x1x6x32xf32> to vector<2x6x6x32xf32>
    %141 = arith.mulf %139, %140 : vector<2x6x6x32xf32>
    %142 = arith.addf %134, %141 : vector<2x6x6x32xf32>
    %143 = vector.extract_strided_slice %126 {offsets = [0, 0, 0, 2], sizes = [2, 6, 6, 1], strides = [1, 1, 1, 1]} : vector<2x6x6x3xf32> to vector<2x6x6x1xf32>
    %c17 = arith.constant 17 : index
    %c0_58 = arith.constant 0 : index
    %c0_59 = arith.constant 0 : index
    %144 = vector.load %arg1[%c17, %c0_58, %c0_59] : memref<27x6x32xf32, #tpu.memory_space<vmem>>, vector<1x6x32xf32>
    %145 = vector.shape_cast %144 : vector<1x6x32xf32> to vector<6x32xf32>
    %146 = vector.shape_cast %145 : vector<6x32xf32> to vector<1x1x6x32xf32>
    %147 = vector.broadcast %143 : vector<2x6x6x1xf32> to vector<2x6x6x32xf32>
    %148 = vector.broadcast %146 : vector<1x1x6x32xf32> to vector<2x6x6x32xf32>
    %149 = arith.mulf %147, %148 : vector<2x6x6x32xf32>
    %150 = arith.addf %142, %149 : vector<2x6x6x32xf32>
    %c0_60 = arith.constant 0 : index
    %c2_61 = arith.constant 2 : index
    %c0_62 = arith.constant 0 : index
    %c0_63 = arith.constant 0 : index
    %151 = vector.load %arg0[%c0_60, %c2_61, %c0_62, %c0_63] : memref<2x8x8x3xf32, #tpu.memory_space<vmem>>, vector<2x6x6x3xf32>
    %152 = vector.extract_strided_slice %151 {offsets = [0, 0, 0, 0], sizes = [2, 6, 6, 1], strides = [1, 1, 1, 1]} : vector<2x6x6x3xf32> to vector<2x6x6x1xf32>
    %c18 = arith.constant 18 : index
    %c0_64 = arith.constant 0 : index
    %c0_65 = arith.constant 0 : index
    %153 = vector.load %arg1[%c18, %c0_64, %c0_65] : memref<27x6x32xf32, #tpu.memory_space<vmem>>, vector<1x6x32xf32>
    %154 = vector.shape_cast %153 : vector<1x6x32xf32> to vector<6x32xf32>
    %155 = vector.shape_cast %154 : vector<6x32xf32> to vector<1x1x6x32xf32>
    %156 = vector.broadcast %152 : vector<2x6x6x1xf32> to vector<2x6x6x32xf32>
    %157 = vector.broadcast %155 : vector<1x1x6x32xf32> to vector<2x6x6x32xf32>
    %158 = arith.mulf %156, %157 : vector<2x6x6x32xf32>
    %159 = arith.addf %150, %158 : vector<2x6x6x32xf32>
    %160 = vector.extract_strided_slice %151 {offsets = [0, 0, 0, 1], sizes = [2, 6, 6, 1], strides = [1, 1, 1, 1]} : vector<2x6x6x3xf32> to vector<2x6x6x1xf32>
    %c19 = arith.constant 19 : index
    %c0_66 = arith.constant 0 : index
    %c0_67 = arith.constant 0 : index
    %161 = vector.load %arg1[%c19, %c0_66, %c0_67] : memref<27x6x32xf32, #tpu.memory_space<vmem>>, vector<1x6x32xf32>
    %162 = vector.shape_cast %161 : vector<1x6x32xf32> to vector<6x32xf32>
    %163 = vector.shape_cast %162 : vector<6x32xf32> to vector<1x1x6x32xf32>
    %164 = vector.broadcast %160 : vector<2x6x6x1xf32> to vector<2x6x6x32xf32>
    %165 = vector.broadcast %163 : vector<1x1x6x32xf32> to vector<2x6x6x32xf32>
    %166 = arith.mulf %164, %165 : vector<2x6x6x32xf32>
    %167 = arith.addf %159, %166 : vector<2x6x6x32xf32>
    %168 = vector.extract_strided_slice %151 {offsets = [0, 0, 0, 2], sizes = [2, 6, 6, 1], strides = [1, 1, 1, 1]} : vector<2x6x6x3xf32> to vector<2x6x6x1xf32>
    %c20 = arith.constant 20 : index
    %c0_68 = arith.constant 0 : index
    %c0_69 = arith.constant 0 : index
    %169 = vector.load %arg1[%c20, %c0_68, %c0_69] : memref<27x6x32xf32, #tpu.memory_space<vmem>>, vector<1x6x32xf32>
    %170 = vector.shape_cast %169 : vector<1x6x32xf32> to vector<6x32xf32>
    %171 = vector.shape_cast %170 : vector<6x32xf32> to vector<1x1x6x32xf32>
    %172 = vector.broadcast %168 : vector<2x6x6x1xf32> to vector<2x6x6x32xf32>
    %173 = vector.broadcast %171 : vector<1x1x6x32xf32> to vector<2x6x6x32xf32>
    %174 = arith.mulf %172, %173 : vector<2x6x6x32xf32>
    %175 = arith.addf %167, %174 : vector<2x6x6x32xf32>
    %c0_70 = arith.constant 0 : index
    %c2_71 = arith.constant 2 : index
    %c1_72 = arith.constant 1 : index
    %c0_73 = arith.constant 0 : index
    %176 = vector.load %arg0[%c0_70, %c2_71, %c1_72, %c0_73] : memref<2x8x8x3xf32, #tpu.memory_space<vmem>>, vector<2x6x6x3xf32>
    %177 = vector.extract_strided_slice %176 {offsets = [0, 0, 0, 0], sizes = [2, 6, 6, 1], strides = [1, 1, 1, 1]} : vector<2x6x6x3xf32> to vector<2x6x6x1xf32>
    %c21 = arith.constant 21 : index
    %c0_74 = arith.constant 0 : index
    %c0_75 = arith.constant 0 : index
    %178 = vector.load %arg1[%c21, %c0_74, %c0_75] : memref<27x6x32xf32, #tpu.memory_space<vmem>>, vector<1x6x32xf32>
    %179 = vector.shape_cast %178 : vector<1x6x32xf32> to vector<6x32xf32>
    %180 = vector.shape_cast %179 : vector<6x32xf32> to vector<1x1x6x32xf32>
    %181 = vector.broadcast %177 : vector<2x6x6x1xf32> to vector<2x6x6x32xf32>
    %182 = vector.broadcast %180 : vector<1x1x6x32xf32> to vector<2x6x6x32xf32>
    %183 = arith.mulf %181, %182 : vector<2x6x6x32xf32>
    %184 = arith.addf %175, %183 : vector<2x6x6x32xf32>
    %185 = vector.extract_strided_slice %176 {offsets = [0, 0, 0, 1], sizes = [2, 6, 6, 1], strides = [1, 1, 1, 1]} : vector<2x6x6x3xf32> to vector<2x6x6x1xf32>
    %c22 = arith.constant 22 : index
    %c0_76 = arith.constant 0 : index
    %c0_77 = arith.constant 0 : index
    %186 = vector.load %arg1[%c22, %c0_76, %c0_77] : memref<27x6x32xf32, #tpu.memory_space<vmem>>, vector<1x6x32xf32>
    %187 = vector.shape_cast %186 : vector<1x6x32xf32> to vector<6x32xf32>
    %188 = vector.shape_cast %187 : vector<6x32xf32> to vector<1x1x6x32xf32>
    %189 = vector.broadcast %185 : vector<2x6x6x1xf32> to vector<2x6x6x32xf32>
    %190 = vector.broadcast %188 : vector<1x1x6x32xf32> to vector<2x6x6x32xf32>
    %191 = arith.mulf %189, %190 : vector<2x6x6x32xf32>
    %192 = arith.addf %184, %191 : vector<2x6x6x32xf32>
    %193 = vector.extract_strided_slice %176 {offsets = [0, 0, 0, 2], sizes = [2, 6, 6, 1], strides = [1, 1, 1, 1]} : vector<2x6x6x3xf32> to vector<2x6x6x1xf32>
    %c23 = arith.constant 23 : index
    %c0_78 = arith.constant 0 : index
    %c0_79 = arith.constant 0 : index
    %194 = vector.load %arg1[%c23, %c0_78, %c0_79] : memref<27x6x32xf32, #tpu.memory_space<vmem>>, vector<1x6x32xf32>
    %195 = vector.shape_cast %194 : vector<1x6x32xf32> to vector<6x32xf32>
    %196 = vector.shape_cast %195 : vector<6x32xf32> to vector<1x1x6x32xf32>
    %197 = vector.broadcast %193 : vector<2x6x6x1xf32> to vector<2x6x6x32xf32>
    %198 = vector.broadcast %196 : vector<1x1x6x32xf32> to vector<2x6x6x32xf32>
    %199 = arith.mulf %197, %198 : vector<2x6x6x32xf32>
    %200 = arith.addf %192, %199 : vector<2x6x6x32xf32>
    %c0_80 = arith.constant 0 : index
    %c2_81 = arith.constant 2 : index
    %c2_82 = arith.constant 2 : index
    %c0_83 = arith.constant 0 : index
    %201 = vector.load %arg0[%c0_80, %c2_81, %c2_82, %c0_83] : memref<2x8x8x3xf32, #tpu.memory_space<vmem>>, vector<2x6x6x3xf32>
    %202 = vector.extract_strided_slice %201 {offsets = [0, 0, 0, 0], sizes = [2, 6, 6, 1], strides = [1, 1, 1, 1]} : vector<2x6x6x3xf32> to vector<2x6x6x1xf32>
    %c24 = arith.constant 24 : index
    %c0_84 = arith.constant 0 : index
    %c0_85 = arith.constant 0 : index
    %203 = vector.load %arg1[%c24, %c0_84, %c0_85] : memref<27x6x32xf32, #tpu.memory_space<vmem>>, vector<1x6x32xf32>
    %204 = vector.shape_cast %203 : vector<1x6x32xf32> to vector<6x32xf32>
    %205 = vector.shape_cast %204 : vector<6x32xf32> to vector<1x1x6x32xf32>
    %206 = vector.broadcast %202 : vector<2x6x6x1xf32> to vector<2x6x6x32xf32>
    %207 = vector.broadcast %205 : vector<1x1x6x32xf32> to vector<2x6x6x32xf32>
    %208 = arith.mulf %206, %207 : vector<2x6x6x32xf32>
    %209 = arith.addf %200, %208 : vector<2x6x6x32xf32>
    %210 = vector.extract_strided_slice %201 {offsets = [0, 0, 0, 1], sizes = [2, 6, 6, 1], strides = [1, 1, 1, 1]} : vector<2x6x6x3xf32> to vector<2x6x6x1xf32>
    %c25 = arith.constant 25 : index
    %c0_86 = arith.constant 0 : index
    %c0_87 = arith.constant 0 : index
    %211 = vector.load %arg1[%c25, %c0_86, %c0_87] : memref<27x6x32xf32, #tpu.memory_space<vmem>>, vector<1x6x32xf32>
    %212 = vector.shape_cast %211 : vector<1x6x32xf32> to vector<6x32xf32>
    %213 = vector.shape_cast %212 : vector<6x32xf32> to vector<1x1x6x32xf32>
    %214 = vector.broadcast %210 : vector<2x6x6x1xf32> to vector<2x6x6x32xf32>
    %215 = vector.broadcast %213 : vector<1x1x6x32xf32> to vector<2x6x6x32xf32>
    %216 = arith.mulf %214, %215 : vector<2x6x6x32xf32>
    %217 = arith.addf %209, %216 : vector<2x6x6x32xf32>
    %218 = vector.extract_strided_slice %201 {offsets = [0, 0, 0, 2], sizes = [2, 6, 6, 1], strides = [1, 1, 1, 1]} : vector<2x6x6x3xf32> to vector<2x6x6x1xf32>
    %c26 = arith.constant 26 : index
    %c0_88 = arith.constant 0 : index
    %c0_89 = arith.constant 0 : index
    %219 = vector.load %arg1[%c26, %c0_88, %c0_89] : memref<27x6x32xf32, #tpu.memory_space<vmem>>, vector<1x6x32xf32>
    %220 = vector.shape_cast %219 : vector<1x6x32xf32> to vector<6x32xf32>
    %221 = vector.shape_cast %220 : vector<6x32xf32> to vector<1x1x6x32xf32>
    %222 = vector.broadcast %218 : vector<2x6x6x1xf32> to vector<2x6x6x32xf32>
    %223 = vector.broadcast %221 : vector<1x1x6x32xf32> to vector<2x6x6x32xf32>
    %224 = arith.mulf %222, %223 : vector<2x6x6x32xf32>
    %225 = arith.addf %217, %224 : vector<2x6x6x32xf32>
    %c0_90 = arith.constant 0 : index
    %c0_91 = arith.constant 0 : index
    %226 = vector.load %arg2[%c0_90, %c0_91] : memref<1x32xf32, #tpu.memory_space<vmem>>, vector<1x32xf32>
    %cst_92 = arith.constant 0.000000e+00 : f32
    %227 = vector.broadcast %cst_92 : f32 to vector<2x128xf32>
    %c0_93 = arith.constant 0 : index
    %c0_94 = arith.constant 0 : index
    %228 = vector.load %arg4[%c0_93, %c0_94] : memref<1x128xf32, #tpu.memory_space<vmem>>, vector<1x128xf32>
    %229 = vector.broadcast %228 : vector<1x128xf32> to vector<2x128xf32>
    %230 = arith.addf %227, %229 : vector<2x128xf32>
    %231 = vector.extract_strided_slice %225 {offsets = [0, 0, 0, 0], sizes = [2, 1, 1, 32], strides = [1, 1, 1, 1]} : vector<2x6x6x32xf32> to vector<2x1x1x32xf32>
    %232 = vector.shape_cast %231 : vector<2x1x1x32xf32> to vector<2x32xf32>
    %233 = vector.extract_strided_slice %225 {offsets = [0, 0, 1, 0], sizes = [2, 1, 1, 32], strides = [1, 1, 1, 1]} : vector<2x6x6x32xf32> to vector<2x1x1x32xf32>
    %234 = vector.shape_cast %233 : vector<2x1x1x32xf32> to vector<2x32xf32>
    %235 = arith.maximumf %232, %234 : vector<2x32xf32>
    %236 = vector.extract_strided_slice %225 {offsets = [0, 1, 0, 0], sizes = [2, 1, 1, 32], strides = [1, 1, 1, 1]} : vector<2x6x6x32xf32> to vector<2x1x1x32xf32>
    %237 = vector.shape_cast %236 : vector<2x1x1x32xf32> to vector<2x32xf32>
    %238 = vector.extract_strided_slice %225 {offsets = [0, 1, 1, 0], sizes = [2, 1, 1, 32], strides = [1, 1, 1, 1]} : vector<2x6x6x32xf32> to vector<2x1x1x32xf32>
    %239 = vector.shape_cast %238 : vector<2x1x1x32xf32> to vector<2x32xf32>
    %240 = arith.maximumf %237, %239 : vector<2x32xf32>
    %241 = arith.maximumf %235, %240 : vector<2x32xf32>
    %242 = vector.broadcast %226 : vector<1x32xf32> to vector<2x32xf32>
    %243 = arith.addf %241, %242 : vector<2x32xf32>
    %cst_95 = arith.constant 0.000000e+00 : f32
    %244 = vector.broadcast %cst_95 : f32 to vector<2x32xf32>
    %245 = arith.maximumf %243, %244 : vector<2x32xf32>
    %c0_96 = arith.constant 0 : index
    %c0_97 = arith.constant 0 : index
    %c0_98 = arith.constant 0 : index
    %246 = vector.load %arg3[%c0_96, %c0_97, %c0_98] : memref<9x32x128xf32, #tpu.memory_space<vmem>>, vector<1x32x128xf32>
    %247 = vector.shape_cast %246 : vector<1x32x128xf32> to vector<32x128xf32>
    %cst_99 = arith.constant dense<0.000000e+00> : vector<2x128xf32>
    %248 = tpu.matmul %245, %247, %cst_99 {dimension_numbers = #tpu.dot_dimension_numbers<[1], [0], [0], [1], [0, 0, 1, 1], [], []>} : vector<2x32xf32>, vector<32x128xf32>, vector<2x128xf32> -> vector<2x128xf32>
    %249 = arith.addf %230, %248 : vector<2x128xf32>
    %250 = vector.extract_strided_slice %225 {offsets = [0, 0, 2, 0], sizes = [2, 1, 1, 32], strides = [1, 1, 1, 1]} : vector<2x6x6x32xf32> to vector<2x1x1x32xf32>
    %251 = vector.shape_cast %250 : vector<2x1x1x32xf32> to vector<2x32xf32>
    %252 = vector.extract_strided_slice %225 {offsets = [0, 0, 3, 0], sizes = [2, 1, 1, 32], strides = [1, 1, 1, 1]} : vector<2x6x6x32xf32> to vector<2x1x1x32xf32>
    %253 = vector.shape_cast %252 : vector<2x1x1x32xf32> to vector<2x32xf32>
    %254 = arith.maximumf %251, %253 : vector<2x32xf32>
    %255 = vector.extract_strided_slice %225 {offsets = [0, 1, 2, 0], sizes = [2, 1, 1, 32], strides = [1, 1, 1, 1]} : vector<2x6x6x32xf32> to vector<2x1x1x32xf32>
    %256 = vector.shape_cast %255 : vector<2x1x1x32xf32> to vector<2x32xf32>
    %257 = vector.extract_strided_slice %225 {offsets = [0, 1, 3, 0], sizes = [2, 1, 1, 32], strides = [1, 1, 1, 1]} : vector<2x6x6x32xf32> to vector<2x1x1x32xf32>
    %258 = vector.shape_cast %257 : vector<2x1x1x32xf32> to vector<2x32xf32>
    %259 = arith.maximumf %256, %258 : vector<2x32xf32>
    %260 = arith.maximumf %254, %259 : vector<2x32xf32>
    %261 = vector.broadcast %226 : vector<1x32xf32> to vector<2x32xf32>
    %262 = arith.addf %260, %261 : vector<2x32xf32>
    %cst_100 = arith.constant 0.000000e+00 : f32
    %263 = vector.broadcast %cst_100 : f32 to vector<2x32xf32>
    %264 = arith.maximumf %262, %263 : vector<2x32xf32>
    %c1_101 = arith.constant 1 : index
    %c0_102 = arith.constant 0 : index
    %c0_103 = arith.constant 0 : index
    %265 = vector.load %arg3[%c1_101, %c0_102, %c0_103] : memref<9x32x128xf32, #tpu.memory_space<vmem>>, vector<1x32x128xf32>
    %266 = vector.shape_cast %265 : vector<1x32x128xf32> to vector<32x128xf32>
    %cst_104 = arith.constant dense<0.000000e+00> : vector<2x128xf32>
    %267 = tpu.matmul %264, %266, %cst_104 {dimension_numbers = #tpu.dot_dimension_numbers<[1], [0], [0], [1], [0, 0, 1, 1], [], []>} : vector<2x32xf32>, vector<32x128xf32>, vector<2x128xf32> -> vector<2x128xf32>
    %268 = arith.addf %249, %267 : vector<2x128xf32>
    %269 = vector.extract_strided_slice %225 {offsets = [0, 0, 4, 0], sizes = [2, 1, 1, 32], strides = [1, 1, 1, 1]} : vector<2x6x6x32xf32> to vector<2x1x1x32xf32>
    %270 = vector.shape_cast %269 : vector<2x1x1x32xf32> to vector<2x32xf32>
    %271 = vector.extract_strided_slice %225 {offsets = [0, 0, 5, 0], sizes = [2, 1, 1, 32], strides = [1, 1, 1, 1]} : vector<2x6x6x32xf32> to vector<2x1x1x32xf32>
    %272 = vector.shape_cast %271 : vector<2x1x1x32xf32> to vector<2x32xf32>
    %273 = arith.maximumf %270, %272 : vector<2x32xf32>
    %274 = vector.extract_strided_slice %225 {offsets = [0, 1, 4, 0], sizes = [2, 1, 1, 32], strides = [1, 1, 1, 1]} : vector<2x6x6x32xf32> to vector<2x1x1x32xf32>
    %275 = vector.shape_cast %274 : vector<2x1x1x32xf32> to vector<2x32xf32>
    %276 = vector.extract_strided_slice %225 {offsets = [0, 1, 5, 0], sizes = [2, 1, 1, 32], strides = [1, 1, 1, 1]} : vector<2x6x6x32xf32> to vector<2x1x1x32xf32>
    %277 = vector.shape_cast %276 : vector<2x1x1x32xf32> to vector<2x32xf32>
    %278 = arith.maximumf %275, %277 : vector<2x32xf32>
    %279 = arith.maximumf %273, %278 : vector<2x32xf32>
    %280 = vector.broadcast %226 : vector<1x32xf32> to vector<2x32xf32>
    %281 = arith.addf %279, %280 : vector<2x32xf32>
    %cst_105 = arith.constant 0.000000e+00 : f32
    %282 = vector.broadcast %cst_105 : f32 to vector<2x32xf32>
    %283 = arith.maximumf %281, %282 : vector<2x32xf32>
    %c2_106 = arith.constant 2 : index
    %c0_107 = arith.constant 0 : index
    %c0_108 = arith.constant 0 : index
    %284 = vector.load %arg3[%c2_106, %c0_107, %c0_108] : memref<9x32x128xf32, #tpu.memory_space<vmem>>, vector<1x32x128xf32>
    %285 = vector.shape_cast %284 : vector<1x32x128xf32> to vector<32x128xf32>
    %cst_109 = arith.constant dense<0.000000e+00> : vector<2x128xf32>
    %286 = tpu.matmul %283, %285, %cst_109 {dimension_numbers = #tpu.dot_dimension_numbers<[1], [0], [0], [1], [0, 0, 1, 1], [], []>} : vector<2x32xf32>, vector<32x128xf32>, vector<2x128xf32> -> vector<2x128xf32>
    %287 = arith.addf %268, %286 : vector<2x128xf32>
    %288 = vector.extract_strided_slice %225 {offsets = [0, 2, 0, 0], sizes = [2, 1, 1, 32], strides = [1, 1, 1, 1]} : vector<2x6x6x32xf32> to vector<2x1x1x32xf32>
    %289 = vector.shape_cast %288 : vector<2x1x1x32xf32> to vector<2x32xf32>
    %290 = vector.extract_strided_slice %225 {offsets = [0, 2, 1, 0], sizes = [2, 1, 1, 32], strides = [1, 1, 1, 1]} : vector<2x6x6x32xf32> to vector<2x1x1x32xf32>
    %291 = vector.shape_cast %290 : vector<2x1x1x32xf32> to vector<2x32xf32>
    %292 = arith.maximumf %289, %291 : vector<2x32xf32>
    %293 = vector.extract_strided_slice %225 {offsets = [0, 3, 0, 0], sizes = [2, 1, 1, 32], strides = [1, 1, 1, 1]} : vector<2x6x6x32xf32> to vector<2x1x1x32xf32>
    %294 = vector.shape_cast %293 : vector<2x1x1x32xf32> to vector<2x32xf32>
    %295 = vector.extract_strided_slice %225 {offsets = [0, 3, 1, 0], sizes = [2, 1, 1, 32], strides = [1, 1, 1, 1]} : vector<2x6x6x32xf32> to vector<2x1x1x32xf32>
    %296 = vector.shape_cast %295 : vector<2x1x1x32xf32> to vector<2x32xf32>
    %297 = arith.maximumf %294, %296 : vector<2x32xf32>
    %298 = arith.maximumf %292, %297 : vector<2x32xf32>
    %299 = vector.broadcast %226 : vector<1x32xf32> to vector<2x32xf32>
    %300 = arith.addf %298, %299 : vector<2x32xf32>
    %cst_110 = arith.constant 0.000000e+00 : f32
    %301 = vector.broadcast %cst_110 : f32 to vector<2x32xf32>
    %302 = arith.maximumf %300, %301 : vector<2x32xf32>
    %c3_111 = arith.constant 3 : index
    %c0_112 = arith.constant 0 : index
    %c0_113 = arith.constant 0 : index
    %303 = vector.load %arg3[%c3_111, %c0_112, %c0_113] : memref<9x32x128xf32, #tpu.memory_space<vmem>>, vector<1x32x128xf32>
    %304 = vector.shape_cast %303 : vector<1x32x128xf32> to vector<32x128xf32>
    %cst_114 = arith.constant dense<0.000000e+00> : vector<2x128xf32>
    %305 = tpu.matmul %302, %304, %cst_114 {dimension_numbers = #tpu.dot_dimension_numbers<[1], [0], [0], [1], [0, 0, 1, 1], [], []>} : vector<2x32xf32>, vector<32x128xf32>, vector<2x128xf32> -> vector<2x128xf32>
    %306 = arith.addf %287, %305 : vector<2x128xf32>
    %307 = vector.extract_strided_slice %225 {offsets = [0, 2, 2, 0], sizes = [2, 1, 1, 32], strides = [1, 1, 1, 1]} : vector<2x6x6x32xf32> to vector<2x1x1x32xf32>
    %308 = vector.shape_cast %307 : vector<2x1x1x32xf32> to vector<2x32xf32>
    %309 = vector.extract_strided_slice %225 {offsets = [0, 2, 3, 0], sizes = [2, 1, 1, 32], strides = [1, 1, 1, 1]} : vector<2x6x6x32xf32> to vector<2x1x1x32xf32>
    %310 = vector.shape_cast %309 : vector<2x1x1x32xf32> to vector<2x32xf32>
    %311 = arith.maximumf %308, %310 : vector<2x32xf32>
    %312 = vector.extract_strided_slice %225 {offsets = [0, 3, 2, 0], sizes = [2, 1, 1, 32], strides = [1, 1, 1, 1]} : vector<2x6x6x32xf32> to vector<2x1x1x32xf32>
    %313 = vector.shape_cast %312 : vector<2x1x1x32xf32> to vector<2x32xf32>
    %314 = vector.extract_strided_slice %225 {offsets = [0, 3, 3, 0], sizes = [2, 1, 1, 32], strides = [1, 1, 1, 1]} : vector<2x6x6x32xf32> to vector<2x1x1x32xf32>
    %315 = vector.shape_cast %314 : vector<2x1x1x32xf32> to vector<2x32xf32>
    %316 = arith.maximumf %313, %315 : vector<2x32xf32>
    %317 = arith.maximumf %311, %316 : vector<2x32xf32>
    %318 = vector.broadcast %226 : vector<1x32xf32> to vector<2x32xf32>
    %319 = arith.addf %317, %318 : vector<2x32xf32>
    %cst_115 = arith.constant 0.000000e+00 : f32
    %320 = vector.broadcast %cst_115 : f32 to vector<2x32xf32>
    %321 = arith.maximumf %319, %320 : vector<2x32xf32>
    %c4_116 = arith.constant 4 : index
    %c0_117 = arith.constant 0 : index
    %c0_118 = arith.constant 0 : index
    %322 = vector.load %arg3[%c4_116, %c0_117, %c0_118] : memref<9x32x128xf32, #tpu.memory_space<vmem>>, vector<1x32x128xf32>
    %323 = vector.shape_cast %322 : vector<1x32x128xf32> to vector<32x128xf32>
    %cst_119 = arith.constant dense<0.000000e+00> : vector<2x128xf32>
    %324 = tpu.matmul %321, %323, %cst_119 {dimension_numbers = #tpu.dot_dimension_numbers<[1], [0], [0], [1], [0, 0, 1, 1], [], []>} : vector<2x32xf32>, vector<32x128xf32>, vector<2x128xf32> -> vector<2x128xf32>
    %325 = arith.addf %306, %324 : vector<2x128xf32>
    %326 = vector.extract_strided_slice %225 {offsets = [0, 2, 4, 0], sizes = [2, 1, 1, 32], strides = [1, 1, 1, 1]} : vector<2x6x6x32xf32> to vector<2x1x1x32xf32>
    %327 = vector.shape_cast %326 : vector<2x1x1x32xf32> to vector<2x32xf32>
    %328 = vector.extract_strided_slice %225 {offsets = [0, 2, 5, 0], sizes = [2, 1, 1, 32], strides = [1, 1, 1, 1]} : vector<2x6x6x32xf32> to vector<2x1x1x32xf32>
    %329 = vector.shape_cast %328 : vector<2x1x1x32xf32> to vector<2x32xf32>
    %330 = arith.maximumf %327, %329 : vector<2x32xf32>
    %331 = vector.extract_strided_slice %225 {offsets = [0, 3, 4, 0], sizes = [2, 1, 1, 32], strides = [1, 1, 1, 1]} : vector<2x6x6x32xf32> to vector<2x1x1x32xf32>
    %332 = vector.shape_cast %331 : vector<2x1x1x32xf32> to vector<2x32xf32>
    %333 = vector.extract_strided_slice %225 {offsets = [0, 3, 5, 0], sizes = [2, 1, 1, 32], strides = [1, 1, 1, 1]} : vector<2x6x6x32xf32> to vector<2x1x1x32xf32>
    %334 = vector.shape_cast %333 : vector<2x1x1x32xf32> to vector<2x32xf32>
    %335 = arith.maximumf %332, %334 : vector<2x32xf32>
    %336 = arith.maximumf %330, %335 : vector<2x32xf32>
    %337 = vector.broadcast %226 : vector<1x32xf32> to vector<2x32xf32>
    %338 = arith.addf %336, %337 : vector<2x32xf32>
    %cst_120 = arith.constant 0.000000e+00 : f32
    %339 = vector.broadcast %cst_120 : f32 to vector<2x32xf32>
    %340 = arith.maximumf %338, %339 : vector<2x32xf32>
    %c5_121 = arith.constant 5 : index
    %c0_122 = arith.constant 0 : index
    %c0_123 = arith.constant 0 : index
    %341 = vector.load %arg3[%c5_121, %c0_122, %c0_123] : memref<9x32x128xf32, #tpu.memory_space<vmem>>, vector<1x32x128xf32>
    %342 = vector.shape_cast %341 : vector<1x32x128xf32> to vector<32x128xf32>
    %cst_124 = arith.constant dense<0.000000e+00> : vector<2x128xf32>
    %343 = tpu.matmul %340, %342, %cst_124 {dimension_numbers = #tpu.dot_dimension_numbers<[1], [0], [0], [1], [0, 0, 1, 1], [], []>} : vector<2x32xf32>, vector<32x128xf32>, vector<2x128xf32> -> vector<2x128xf32>
    %344 = arith.addf %325, %343 : vector<2x128xf32>
    %345 = vector.extract_strided_slice %225 {offsets = [0, 4, 0, 0], sizes = [2, 1, 1, 32], strides = [1, 1, 1, 1]} : vector<2x6x6x32xf32> to vector<2x1x1x32xf32>
    %346 = vector.shape_cast %345 : vector<2x1x1x32xf32> to vector<2x32xf32>
    %347 = vector.extract_strided_slice %225 {offsets = [0, 4, 1, 0], sizes = [2, 1, 1, 32], strides = [1, 1, 1, 1]} : vector<2x6x6x32xf32> to vector<2x1x1x32xf32>
    %348 = vector.shape_cast %347 : vector<2x1x1x32xf32> to vector<2x32xf32>
    %349 = arith.maximumf %346, %348 : vector<2x32xf32>
    %350 = vector.extract_strided_slice %225 {offsets = [0, 5, 0, 0], sizes = [2, 1, 1, 32], strides = [1, 1, 1, 1]} : vector<2x6x6x32xf32> to vector<2x1x1x32xf32>
    %351 = vector.shape_cast %350 : vector<2x1x1x32xf32> to vector<2x32xf32>
    %352 = vector.extract_strided_slice %225 {offsets = [0, 5, 1, 0], sizes = [2, 1, 1, 32], strides = [1, 1, 1, 1]} : vector<2x6x6x32xf32> to vector<2x1x1x32xf32>
    %353 = vector.shape_cast %352 : vector<2x1x1x32xf32> to vector<2x32xf32>
    %354 = arith.maximumf %351, %353 : vector<2x32xf32>
    %355 = arith.maximumf %349, %354 : vector<2x32xf32>
    %356 = vector.broadcast %226 : vector<1x32xf32> to vector<2x32xf32>
    %357 = arith.addf %355, %356 : vector<2x32xf32>
    %cst_125 = arith.constant 0.000000e+00 : f32
    %358 = vector.broadcast %cst_125 : f32 to vector<2x32xf32>
    %359 = arith.maximumf %357, %358 : vector<2x32xf32>
    %c6_126 = arith.constant 6 : index
    %c0_127 = arith.constant 0 : index
    %c0_128 = arith.constant 0 : index
    %360 = vector.load %arg3[%c6_126, %c0_127, %c0_128] : memref<9x32x128xf32, #tpu.memory_space<vmem>>, vector<1x32x128xf32>
    %361 = vector.shape_cast %360 : vector<1x32x128xf32> to vector<32x128xf32>
    %cst_129 = arith.constant dense<0.000000e+00> : vector<2x128xf32>
    %362 = tpu.matmul %359, %361, %cst_129 {dimension_numbers = #tpu.dot_dimension_numbers<[1], [0], [0], [1], [0, 0, 1, 1], [], []>} : vector<2x32xf32>, vector<32x128xf32>, vector<2x128xf32> -> vector<2x128xf32>
    %363 = arith.addf %344, %362 : vector<2x128xf32>
    %364 = vector.extract_strided_slice %225 {offsets = [0, 4, 2, 0], sizes = [2, 1, 1, 32], strides = [1, 1, 1, 1]} : vector<2x6x6x32xf32> to vector<2x1x1x32xf32>
    %365 = vector.shape_cast %364 : vector<2x1x1x32xf32> to vector<2x32xf32>
    %366 = vector.extract_strided_slice %225 {offsets = [0, 4, 3, 0], sizes = [2, 1, 1, 32], strides = [1, 1, 1, 1]} : vector<2x6x6x32xf32> to vector<2x1x1x32xf32>
    %367 = vector.shape_cast %366 : vector<2x1x1x32xf32> to vector<2x32xf32>
    %368 = arith.maximumf %365, %367 : vector<2x32xf32>
    %369 = vector.extract_strided_slice %225 {offsets = [0, 5, 2, 0], sizes = [2, 1, 1, 32], strides = [1, 1, 1, 1]} : vector<2x6x6x32xf32> to vector<2x1x1x32xf32>
    %370 = vector.shape_cast %369 : vector<2x1x1x32xf32> to vector<2x32xf32>
    %371 = vector.extract_strided_slice %225 {offsets = [0, 5, 3, 0], sizes = [2, 1, 1, 32], strides = [1, 1, 1, 1]} : vector<2x6x6x32xf32> to vector<2x1x1x32xf32>
    %372 = vector.shape_cast %371 : vector<2x1x1x32xf32> to vector<2x32xf32>
    %373 = arith.maximumf %370, %372 : vector<2x32xf32>
    %374 = arith.maximumf %368, %373 : vector<2x32xf32>
    %375 = vector.broadcast %226 : vector<1x32xf32> to vector<2x32xf32>
    %376 = arith.addf %374, %375 : vector<2x32xf32>
    %cst_130 = arith.constant 0.000000e+00 : f32
    %377 = vector.broadcast %cst_130 : f32 to vector<2x32xf32>
    %378 = arith.maximumf %376, %377 : vector<2x32xf32>
    %c7_131 = arith.constant 7 : index
    %c0_132 = arith.constant 0 : index
    %c0_133 = arith.constant 0 : index
    %379 = vector.load %arg3[%c7_131, %c0_132, %c0_133] : memref<9x32x128xf32, #tpu.memory_space<vmem>>, vector<1x32x128xf32>
    %380 = vector.shape_cast %379 : vector<1x32x128xf32> to vector<32x128xf32>
    %cst_134 = arith.constant dense<0.000000e+00> : vector<2x128xf32>
    %381 = tpu.matmul %378, %380, %cst_134 {dimension_numbers = #tpu.dot_dimension_numbers<[1], [0], [0], [1], [0, 0, 1, 1], [], []>} : vector<2x32xf32>, vector<32x128xf32>, vector<2x128xf32> -> vector<2x128xf32>
    %382 = arith.addf %363, %381 : vector<2x128xf32>
    %383 = vector.extract_strided_slice %225 {offsets = [0, 4, 4, 0], sizes = [2, 1, 1, 32], strides = [1, 1, 1, 1]} : vector<2x6x6x32xf32> to vector<2x1x1x32xf32>
    %384 = vector.shape_cast %383 : vector<2x1x1x32xf32> to vector<2x32xf32>
    %385 = vector.extract_strided_slice %225 {offsets = [0, 4, 5, 0], sizes = [2, 1, 1, 32], strides = [1, 1, 1, 1]} : vector<2x6x6x32xf32> to vector<2x1x1x32xf32>
    %386 = vector.shape_cast %385 : vector<2x1x1x32xf32> to vector<2x32xf32>
    %387 = arith.maximumf %384, %386 : vector<2x32xf32>
    %388 = vector.extract_strided_slice %225 {offsets = [0, 5, 4, 0], sizes = [2, 1, 1, 32], strides = [1, 1, 1, 1]} : vector<2x6x6x32xf32> to vector<2x1x1x32xf32>
    %389 = vector.shape_cast %388 : vector<2x1x1x32xf32> to vector<2x32xf32>
    %390 = vector.extract_strided_slice %225 {offsets = [0, 5, 5, 0], sizes = [2, 1, 1, 32], strides = [1, 1, 1, 1]} : vector<2x6x6x32xf32> to vector<2x1x1x32xf32>
    %391 = vector.shape_cast %390 : vector<2x1x1x32xf32> to vector<2x32xf32>
    %392 = arith.maximumf %389, %391 : vector<2x32xf32>
    %393 = arith.maximumf %387, %392 : vector<2x32xf32>
    %394 = vector.broadcast %226 : vector<1x32xf32> to vector<2x32xf32>
    %395 = arith.addf %393, %394 : vector<2x32xf32>
    %cst_135 = arith.constant 0.000000e+00 : f32
    %396 = vector.broadcast %cst_135 : f32 to vector<2x32xf32>
    %397 = arith.maximumf %395, %396 : vector<2x32xf32>
    %c8_136 = arith.constant 8 : index
    %c0_137 = arith.constant 0 : index
    %c0_138 = arith.constant 0 : index
    %398 = vector.load %arg3[%c8_136, %c0_137, %c0_138] : memref<9x32x128xf32, #tpu.memory_space<vmem>>, vector<1x32x128xf32>
    %399 = vector.shape_cast %398 : vector<1x32x128xf32> to vector<32x128xf32>
    %cst_139 = arith.constant dense<0.000000e+00> : vector<2x128xf32>
    %400 = tpu.matmul %397, %399, %cst_139 {dimension_numbers = #tpu.dot_dimension_numbers<[1], [0], [0], [1], [0, 0, 1, 1], [], []>} : vector<2x32xf32>, vector<32x128xf32>, vector<2x128xf32> -> vector<2x128xf32>
    %401 = arith.addf %382, %400 : vector<2x128xf32>
    %cst_140 = arith.constant 0.000000e+00 : f32
    %402 = vector.broadcast %cst_140 : f32 to vector<2x128xf32>
    %403 = arith.maximumf %401, %402 : vector<2x128xf32>
    %c0_141 = arith.constant 0 : index
    %c0_142 = arith.constant 0 : index
    %404 = vector.load %arg5[%c0_141, %c0_142] : memref<128x128xf32, #tpu.memory_space<vmem>>, vector<128x128xf32>
    %cst_143 = arith.constant dense<0.000000e+00> : vector<2x128xf32>
    %405 = tpu.matmul %403, %404, %cst_143 {dimension_numbers = #tpu.dot_dimension_numbers<[1], [0], [0], [1], [0, 0, 1, 1], [], []>} : vector<2x128xf32>, vector<128x128xf32>, vector<2x128xf32> -> vector<2x128xf32>
    %c0_144 = arith.constant 0 : index
    %c0_145 = arith.constant 0 : index
    %406 = vector.load %arg6[%c0_144, %c0_145] : memref<1x128xf32, #tpu.memory_space<vmem>>, vector<1x128xf32>
    %407 = vector.broadcast %406 : vector<1x128xf32> to vector<2x128xf32>
    %408 = arith.addf %405, %407 : vector<2x128xf32>
    %c0_146 = arith.constant 0 : index
    %c0_147 = arith.constant 0 : index
    %409 = vector.load %arg7[%c0_146, %c0_147] : memref<2x128xf32, #tpu.memory_space<vmem>>, vector<2x128xf32>
    tpu.vector_store %arg7[%c0_146, %c0_147], %408 {strides = array<i32>} : memref<2x128xf32, #tpu.memory_space<vmem>>, vector<2x128xf32>,
    return
  }
}

</mosaic_0001>

<llo_original>
// kernel: net2_forward.1
$region0: #{net2_forward.1}
  #allocation0 [shape = 'u32[]', space=smem, size = 0x4, offset = 0x4, fixed_abs, tag = 'smem constant byte address 0x4 - core index']
  #allocation1 [shape = 'u32[144,128]{1,0:T(1,128)}', space=vmem, size = 0x12000, scoped, tag = 'internal scratch']
  %s0 = inlined_call_operand.vmem [shape: f32[2,8,8,3], index: 0, kind: input, shape index: {}]
  %s1 = inlined_call_operand.vmem [shape: f32[27,6,32], index: 1, kind: input, shape index: {}]
  %s2 = inlined_call_operand.vmem [shape: f32[1,32], index: 2, kind: input, shape index: {}]
  %s3 = inlined_call_operand.vmem [shape: f32[9,32,128], index: 3, kind: input, shape index: {}]
  %s4 = inlined_call_operand.vmem [shape: f32[1,128], index: 4, kind: input, shape index: {}]
  %s5 = inlined_call_operand.vmem [shape: f32[128,128], index: 5, kind: input, shape index: {}]
  %s6 = inlined_call_operand.vmem [shape: f32[1,128], index: 6, kind: input, shape index: {}]
  %s7 = inlined_call_operand.hbm [shape: f32[2,128], index: 7, kind: output, shape index: {}]
  %s8 = sld [smem:[#allocation0]]
  $region38: #{net2_forward.1} parent=0
    _
  %s10 = ssub.s32 1, %s8
  %s11 = scalar_select 0, %s10, %s8
  $region1: #{net2_forward.1} parent=0
    #allocation2 [shape = 'u8[1024]{0}', space=vmem, size = 0x400, scoped, tag = 'output window, operand 0, single buffered']
    #allocation3 [shape = 's32[1]{0}', space=sflag, size = 0x4, scoped, tag = 'scoped memory for net2_forward.1']
    %12 = vsyncpa [#allocation3], 0
    // Predicated region
    $region2: #{net2_forward.1} parent=1 // pred_check
      _
    $region3: #{net2_forward.1} parent=1 // pred_check_branch
      %14 = sbr.rel (0) target = $region5
    $region4: #{net2_forward.1} parent=1 // pred_region
      _
    $region5: #{net2_forward.1} parent=1 // pred_fallthru
      _
    // Predicated region
    $region6: #{net2_forward.1} parent=1 // pred_check
      _
    $region7: #{net2_forward.1} parent=1 // pred_check_branch
      %16 = sbr.rel (0) target = $region9
    $region8: #{net2_forward.1} parent=1 // pred_region
      _
    $region9: #{net2_forward.1} parent=1 // pred_fallthru
      _
    // Predicated region
    $region10: #{net2_forward.1} parent=1 // pred_check
      _
    $region11: #{net2_forward.1} parent=1 // pred_check_branch
      %18 = sbr.rel (0) target = $region13
    $region12: #{net2_forward.1} parent=1 // pred_region
      _
    $region13: #{net2_forward.1} parent=1 // pred_fallthru
      _
    // Predicated region
    $region14: #{net2_forward.1} parent=1 // pred_check
      _
    $region15: #{net2_forward.1} parent=1 // pred_check_branch
      %20 = sbr.rel (0) target = $region17
    $region16: #{net2_forward.1} parent=1 // pred_region
      _
    $region17: #{net2_forward.1} parent=1 // pred_fallthru
      _
    // Predicated region
    $region18: #{net2_forward.1} parent=1 // pred_check
      _
    $region19: #{net2_forward.1} parent=1 // pred_check_branch
      %22 = sbr.rel (0) target = $region21
    $region20: #{net2_forward.1} parent=1 // pred_region
      _
    $region21: #{net2_forward.1} parent=1 // pred_fallthru
      _
    // Predicated region
    $region22: #{net2_forward.1} parent=1 // pred_check
      _
    $region23: #{net2_forward.1} parent=1 // pred_check_branch
      %24 = sbr.rel (0) target = $region25
    $region24: #{net2_forward.1} parent=1 // pred_region
      _
    $region25: #{net2_forward.1} parent=1 // pred_fallthru
      _
    // Predicated region
    $region26: #{net2_forward.1} parent=1 // pred_check
      _
    $region27: #{net2_forward.1} parent=1 // pred_check_branch
      %26 = sbr.rel (0) target = $region29
    $region28: #{net2_forward.1} parent=1 // pred_region
      _
    $region29: #{net2_forward.1} parent=1 // pred_fallthru
      _
    %v27 = vld [vmem:[%s0] sm:$0x3f]
    %v28 = vld [vmem:[%s0 + $0x8] sm:$0x3f]
    %v29 = vld [vmem:[%s0 + $0x10] sm:$0x3f]
    %v30 = vld [vmem:[%s0 + $0x18] sm:$0x3f]
    %v31 = vld [vmem:[%s0 + $0x20] sm:$0x3f]
    %v32 = vld [vmem:[%s0 + $0x28] sm:$0x3f]
    %v33 = vld [vmem:[%s0 + $0x40] sm:$0x3f]
    %v34 = vld [vmem:[%s0 + $0x48] sm:$0x3f]
    %v35 = vld [vmem:[%s0 + $0x50] sm:$0x3f]
    %v36 = vld [vmem:[%s0 + $0x58] sm:$0x3f]
    %v37 = vld [vmem:[%s0 + $0x60] sm:$0x3f]
    %v38 = vld [vmem:[%s0 + $0x68] sm:$0x3f]
    %v39 = vld [vmem:[%s1] sm:$0x3f]
    %41 = vset.pattern.permute.xlu0 0
    %42 = vperm.xlu0 %41, %v27
    %v43 = vpop.permute.xlu0 %42
    %46 = vset.pattern.permute.xlu0 0
    %47 = vperm.xlu0 %46, %v28
    %v48 = vpop.permute.xlu0 %47
    %51 = vset.pattern.permute.xlu0 0
    %52 = vperm.xlu0 %51, %v29
    %v53 = vpop.permute.xlu0 %52
    %56 = vset.pattern.permute.xlu0 0
    %57 = vperm.xlu0 %56, %v30
    %v58 = vpop.permute.xlu0 %57
    %61 = vset.pattern.permute.xlu0 0
    %62 = vperm.xlu0 %61, %v31
    %v63 = vpop.permute.xlu0 %62
    %66 = vset.pattern.permute.xlu0 0
    %67 = vperm.xlu0 %66, %v32
    %v68 = vpop.permute.xlu0 %67
    %71 = vset.pattern.permute.xlu0 0
    %72 = vperm.xlu0 %71, %v33
    %v73 = vpop.permute.xlu0 %72
    %76 = vset.pattern.permute.xlu0 0
    %77 = vperm.xlu0 %76, %v34
    %v78 = vpop.permute.xlu0 %77
    %81 = vset.pattern.permute.xlu0 0
    %82 = vperm.xlu0 %81, %v35
    %v83 = vpop.permute.xlu0 %82
    %86 = vset.pattern.permute.xlu0 0
    %87 = vperm.xlu0 %86, %v36
    %v88 = vpop.permute.xlu0 %87
    %91 = vset.pattern.permute.xlu0 0
    %92 = vperm.xlu0 %91, %v37
    %v93 = vpop.permute.xlu0 %92
    %96 = vset.pattern.permute.xlu0 0
    %97 = vperm.xlu0 %96, %v38
    %v98 = vpop.permute.xlu0 %97
    %v100 = vmul.f32 %v43, %v39
    %v101 = vmul.f32 %v48, %v39
    %v102 = vmul.f32 %v53, %v39
    %v103 = vmul.f32 %v58, %v39
    %v104 = vmul.f32 %v63, %v39
    %v105 = vmul.f32 %v68, %v39
    %v106 = vmul.f32 %v73, %v39
    %v107 = vmul.f32 %v78, %v39
    %v108 = vmul.f32 %v83, %v39
    %v109 = vmul.f32 %v88, %v39
    %v110 = vmul.f32 %v93, %v39
    %v111 = vmul.f32 %v98, %v39
    %v112 = vadd.f32 %v100, 0.0
    %v113 = vadd.f32 %v101, 0.0
    %v114 = vadd.f32 %v102, 0.0
    %v115 = vadd.f32 %v103, 0.0
    %v116 = vadd.f32 %v104, 0.0
    %v117 = vadd.f32 %v105, 0.0
    %v118 = vadd.f32 %v106, 0.0
    %v119 = vadd.f32 %v107, 0.0
    %v120 = vadd.f32 %v108, 0.0
    %v121 = vadd.f32 %v109, 0.0
    %v122 = vadd.f32 %v110, 0.0
    %v123 = vadd.f32 %v111, 0.0
    %s124 = scalar_lea.vmem %s1, 8
    %v125 = vld [vmem:[%s124] sm:$0x3f]
    %126 = vset.pattern.permute.xlu0 1
    %127 = vperm.xlu0 %126, %v27
    %v128 = vpop.permute.xlu0 %127
    %130 = vset.pattern.permute.xlu0 1
    %131 = vperm.xlu0 %130, %v28
    %v132 = vpop.permute.xlu0 %131
    %134 = vset.pattern.permute.xlu0 1
    %135 = vperm.xlu0 %134, %v29
    %v136 = vpop.permute.xlu0 %135
    %138 = vset.pattern.permute.xlu0 1
    %139 = vperm.xlu0 %138, %v30
    %v140 = vpop.permute.xlu0 %139
    %142 = vset.pattern.permute.xlu0 1
    %143 = vperm.xlu0 %142, %v31
    %v144 = vpop.permute.xlu0 %143
    %146 = vset.pattern.permute.xlu0 1
    %147 = vperm.xlu0 %146, %v32
    %v148 = vpop.permute.xlu0 %147
    %150 = vset.pattern.permute.xlu0 1
    %151 = vperm.xlu0 %150, %v33
    %v152 = vpop.permute.xlu0 %151
    %154 = vset.pattern.permute.xlu0 1
    %155 = vperm.xlu0 %154, %v34
    %v156 = vpop.permute.xlu0 %155
    %158 = vset.pattern.permute.xlu0 1
    %159 = vperm.xlu0 %158, %v35
    %v160 = vpop.permute.xlu0 %159
    %162 = vset.pattern.permute.xlu0 1
    %163 = vperm.xlu0 %162, %v36
    %v164 = vpop.permute.xlu0 %163
    %166 = vset.pattern.permute.xlu0 1
    %167 = vperm.xlu0 %166, %v37
    %v168 = vpop.permute.xlu0 %167
    %170 = vset.pattern.permute.xlu0 1
    %171 = vperm.xlu0 %170, %v38
    %v172 = vpop.permute.xlu0 %171
    %v174 = vmul.f32 %v128, %v125
    %v175 = vmul.f32 %v132, %v125
    %v176 = vmul.f32 %v136, %v125
    %v177 = vmul.f32 %v140, %v125
    %v178 = vmul.f32 %v144, %v125
    %v179 = vmul.f32 %v148, %v125
    %v180 = vmul.f32 %v152, %v125
    %v181 = vmul.f32 %v156, %v125
    %v182 = vmul.f32 %v160, %v125
    %v183 = vmul.f32 %v164, %v125
    %v184 = vmul.f32 %v168, %v125
    %v185 = vmul.f32 %v172, %v125
    %v186 = vadd.f32 %v112, %v174
    %v187 = vadd.f32 %v113, %v175
    %v188 = vadd.f32 %v114, %v176
    %v189 = vadd.f32 %v115, %v177
    %v190 = vadd.f32 %v116, %v178
    %v191 = vadd.f32 %v117, %v179
    %v192 = vadd.f32 %v118, %v180
    %v193 = vadd.f32 %v119, %v181
    %v194 = vadd.f32 %v120, %v182
    %v195 = vadd.f32 %v121, %v183
    %v196 = vadd.f32 %v122, %v184
    %v197 = vadd.f32 %v123, %v185
    %s198 = scalar_lea.vmem %s1, 16
    %v199 = vld [vmem:[%s198] sm:$0x3f]
    %200 = vset.pattern.permute.xlu0 2
    %201 = vperm.xlu0 %200, %v27
    %v202 = vpop.permute.xlu0 %201
    %204 = vset.pattern.permute.xlu0 2
    %205 = vperm.xlu0 %204, %v28
    %v206 = vpop.permute.xlu0 %205
    %208 = vset.pattern.permute.xlu0 2
    %209 = vperm.xlu0 %208, %v29
    %v210 = vpop.permute.xlu0 %209
    %212 = vset.pattern.permute.xlu0 2
    %213 = vperm.xlu0 %212, %v30
    %v214 = vpop.permute.xlu0 %213
    %216 = vset.pattern.permute.xlu0 2
    %217 = vperm.xlu0 %216, %v31
    %v218 = vpop.permute.xlu0 %217
    %220 = vset.pattern.permute.xlu0 2
    %221 = vperm.xlu0 %220, %v32
    %v222 = vpop.permute.xlu0 %221
    %224 = vset.pattern.permute.xlu0 2
    %225 = vperm.xlu0 %224, %v33
    %v226 = vpop.permute.xlu0 %225
    %228 = vset.pattern.permute.xlu0 2
    %229 = vperm.xlu0 %228, %v34
    %v230 = vpop.permute.xlu0 %229
    %232 = vset.pattern.permute.xlu0 2
    %233 = vperm.xlu0 %232, %v35
    %v234 = vpop.permute.xlu0 %233
    %236 = vset.pattern.permute.xlu0 2
    %237 = vperm.xlu0 %236, %v36
    %v238 = vpop.permute.xlu0 %237
    %240 = vset.pattern.permute.xlu0 2
    %241 = vperm.xlu0 %240, %v37
    %v242 = vpop.permute.xlu0 %241
    %244 = vset.pattern.permute.xlu0 2
    %245 = vperm.xlu0 %244, %v38
    %v246 = vpop.permute.xlu0 %245
    %v248 = vmul.f32 %v202, %v199
    %v249 = vmul.f32 %v206, %v199
    %v250 = vmul.f32 %v210, %v199
    %v251 = vmul.f32 %v214, %v199
    %v252 = vmul.f32 %v218, %v199
    %v253 = vmul.f32 %v222, %v199
    %v254 = vmul.f32 %v226, %v199
    %v255 = vmul.f32 %v230, %v199
    %v256 = vmul.f32 %v234, %v199
    %v257 = vmul.f32 %v238, %v199
    %v258 = vmul.f32 %v242, %v199
    %v259 = vmul.f32 %v246, %v199
    %v260 = vadd.f32 %v186, %v248
    %v261 = vadd.f32 %v187, %v249
    %v262 = vadd.f32 %v188, %v250
    %v263 = vadd.f32 %v189, %v251
    %v264 = vadd.f32 %v190, %v252
    %v265 = vadd.f32 %v191, %v253
    %v266 = vadd.f32 %v192, %v254
    %v267 = vadd.f32 %v193, %v255
    %v268 = vadd.f32 %v194, %v256
    %v269 = vadd.f32 %v195, %v257
    %v270 = vadd.f32 %v196, %v258
    %v271 = vadd.f32 %v197, %v259
    %v272 = vld [vmem:[%s0 + $0x1] sm:$0x3f]
    %v273 = vld [vmem:[%s0 + $0x9] sm:$0x3f]
    %v274 = vld [vmem:[%s0 + $0x11] sm:$0x3f]
    %v275 = vld [vmem:[%s0 + $0x19] sm:$0x3f]
    %v276 = vld [vmem:[%s0 + $0x21] sm:$0x3f]
    %v277 = vld [vmem:[%s0 + $0x29] sm:$0x3f]
    %v278 = vld [vmem:[%s0 + $0x41] sm:$0x3f]
    %v279 = vld [vmem:[%s0 + $0x49] sm:$0x3f]
    %v280 = vld [vmem:[%s0 + $0x51] sm:$0x3f]
    %v281 = vld [vmem:[%s0 + $0x59] sm:$0x3f]
    %v282 = vld [vmem:[%s0 + $0x61] sm:$0x3f]
    %v283 = vld [vmem:[%s0 + $0x69] sm:$0x3f]
    %s284 = scalar_lea.vmem %s1, 24
    %v285 = vld [vmem:[%s284] sm:$0x3f]
    %287 = vset.pattern.permute.xlu0 0
    %288 = vperm.xlu0 %287, %v272
    %v289 = vpop.permute.xlu0 %288
    %292 = vset.pattern.permute.xlu0 0
    %293 = vperm.xlu0 %292, %v273
    %v294 = vpop.permute.xlu0 %293
    %297 = vset.pattern.permute.xlu0 0
    %298 = vperm.xlu0 %297, %v274
    %v299 = vpop.permute.xlu0 %298
    %302 = vset.pattern.permute.xlu0 0
    %303 = vperm.xlu0 %302, %v275
    %v304 = vpop.permute.xlu0 %303
    %307 = vset.pattern.permute.xlu0 0
    %308 = vperm.xlu0 %307, %v276
    %v309 = vpop.permute.xlu0 %308
    %312 = vset.pattern.permute.xlu0 0
    %313 = vperm.xlu0 %312, %v277
    %v314 = vpop.permute.xlu0 %313
    %317 = vset.pattern.permute.xlu0 0
    %318 = vperm.xlu0 %317, %v278
    %v319 = vpop.permute.xlu0 %318
    %322 = vset.pattern.permute.xlu0 0
    %323 = vperm.xlu0 %322, %v279
    %v324 = vpop.permute.xlu0 %323
    %327 = vset.pattern.permute.xlu0 0
    %328 = vperm.xlu0 %327, %v280
    %v329 = vpop.permute.xlu0 %328
    %332 = vset.pattern.permute.xlu0 0
    %333 = vperm.xlu0 %332, %v281
    %v334 = vpop.permute.xlu0 %333
    %337 = vset.pattern.permute.xlu0 0
    %338 = vperm.xlu0 %337, %v282
    %v339 = vpop.permute.xlu0 %338
    %342 = vset.pattern.permute.xlu0 0
    %343 = vperm.xlu0 %342, %v283
    %v344 = vpop.permute.xlu0 %343
    %v346 = vmul.f32 %v289, %v285
    %v347 = vmul.f32 %v294, %v285
    %v348 = vmul.f32 %v299, %v285
    %v349 = vmul.f32 %v304, %v285
    %v350 = vmul.f32 %v309, %v285
    %v351 = vmul.f32 %v314, %v285
    %v352 = vmul.f32 %v319, %v285
    %v353 = vmul.f32 %v324, %v285
    %v354 = vmul.f32 %v329, %v285
    %v355 = vmul.f32 %v334, %v285
    %v356 = vmul.f32 %v339, %v285
    %v357 = vmul.f32 %v344, %v285
    %v358 = vadd.f32 %v260, %v346
    %v359 = vadd.f32 %v261, %v347
    %v360 = vadd.f32 %v262, %v348
    %v361 = vadd.f32 %v263, %v349
    %v362 = vadd.f32 %v264, %v350
    %v363 = vadd.f32 %v265, %v351
    %v364 = vadd.f32 %v266, %v352
    %v365 = vadd.f32 %v267, %v353
    %v366 = vadd.f32 %v268, %v354
    %v367 = vadd.f32 %v269, %v355
    %v368 = vadd.f32 %v270, %v356
    %v369 = vadd.f32 %v271, %v357
    %s370 = scalar_lea.vmem %s1, 32
    %v371 = vld [vmem:[%s370] sm:$0x3f]
    %372 = vset.pattern.permute.xlu0 1
    %373 = vperm.xlu0 %372, %v272
    %v374 = vpop.permute.xlu0 %373
    %376 = vset.pattern.permute.xlu0 1
    %377 = vperm.xlu0 %376, %v273
    %v378 = vpop.permute.xlu0 %377
    %380 = vset.pattern.permute.xlu0 1
    %381 = vperm.xlu0 %380, %v274
    %v382 = vpop.permute.xlu0 %381
    %384 = vset.pattern.permute.xlu0 1
    %385 = vperm.xlu0 %384, %v275
    %v386 = vpop.permute.xlu0 %385
    %388 = vset.pattern.permute.xlu0 1
    %389 = vperm.xlu0 %388, %v276
    %v390 = vpop.permute.xlu0 %389
    %392 = vset.pattern.permute.xlu0 1
    %393 = vperm.xlu0 %392, %v277
    %v394 = vpop.permute.xlu0 %393
    %396 = vset.pattern.permute.xlu0 1
    %397 = vperm.xlu0 %396, %v278
    %v398 = vpop.permute.xlu0 %397
    %400 = vset.pattern.permute.xlu0 1
    %401 = vperm.xlu0 %400, %v279
    %v402 = vpop.permute.xlu0 %401
    %404 = vset.pattern.permute.xlu0 1
    %405 = vperm.xlu0 %404, %v280
    %v406 = vpop.permute.xlu0 %405
    %408 = vset.pattern.permute.xlu0 1
    %409 = vperm.xlu0 %408, %v281
    %v410 = vpop.permute.xlu0 %409
    %412 = vset.pattern.permute.xlu0 1
    %413 = vperm.xlu0 %412, %v282
    %v414 = vpop.permute.xlu0 %413
    %416 = vset.pattern.permute.xlu0 1
    %417 = vperm.xlu0 %416, %v283
    %v418 = vpop.permute.xlu0 %417
    %v420 = vmul.f32 %v374, %v371
    %v421 = vmul.f32 %v378, %v371
    %v422 = vmul.f32 %v382, %v371
    %v423 = vmul.f32 %v386, %v371
    %v424 = vmul.f32 %v390, %v371
    %v425 = vmul.f32 %v394, %v371
    %v426 = vmul.f32 %v398, %v371
    %v427 = vmul.f32 %v402, %v371
    %v428 = vmul.f32 %v406, %v371
    %v429 = vmul.f32 %v410, %v371
    %v430 = vmul.f32 %v414, %v371
    %v431 = vmul.f32 %v418, %v371
    %v432 = vadd.f32 %v358, %v420
    %v433 = vadd.f32 %v359, %v421
    %v434 = vadd.f32 %v360, %v422
    %v435 = vadd.f32 %v361, %v423
    %v436 = vadd.f32 %v362, %v424
    %v437 = vadd.f32 %v363, %v425
    %v438 = vadd.f32 %v364, %v426
    %v439 = vadd.f32 %v365, %v427
    %v440 = vadd.f32 %v366, %v428
    %v441 = vadd.f32 %v367, %v429
    %v442 = vadd.f32 %v368, %v430
    %v443 = vadd.f32 %v369, %v431
    %s444 = scalar_lea.vmem %s1, 40
    %v445 = vld [vmem:[%s444] sm:$0x3f]
    %446 = vset.pattern.permute.xlu0 2
    %447 = vperm.xlu0 %446, %v272
    %v448 = vpop.permute.xlu0 %447
    %450 = vset.pattern.permute.xlu0 2
    %451 = vperm.xlu0 %450, %v273
    %v452 = vpop.permute.xlu0 %451
    %454 = vset.pattern.permute.xlu0 2
    %455 = vperm.xlu0 %454, %v274
    %v456 = vpop.permute.xlu0 %455
    %458 = vset.pattern.permute.xlu0 2
    %459 = vperm.xlu0 %458, %v275
    %v460 = vpop.permute.xlu0 %459
    %462 = vset.pattern.permute.xlu0 2
    %463 = vperm.xlu0 %462, %v276
    %v464 = vpop.permute.xlu0 %463
    %466 = vset.pattern.permute.xlu0 2
    %467 = vperm.xlu0 %466, %v277
    %v468 = vpop.permute.xlu0 %467
    %470 = vset.pattern.permute.xlu0 2
    %471 = vperm.xlu0 %470, %v278
    %v472 = vpop.permute.xlu0 %471
    %474 = vset.pattern.permute.xlu0 2
    %475 = vperm.xlu0 %474, %v279
    %v476 = vpop.permute.xlu0 %475
    %478 = vset.pattern.permute.xlu0 2
    %479 = vperm.xlu0 %478, %v280
    %v480 = vpop.permute.xlu0 %479
    %482 = vset.pattern.permute.xlu0 2
    %483 = vperm.xlu0 %482, %v281
    %v484 = vpop.permute.xlu0 %483
    %486 = vset.pattern.permute.xlu0 2
    %487 = vperm.xlu0 %486, %v282
    %v488 = vpop.permute.xlu0 %487
    %490 = vset.pattern.permute.xlu0 2
    %491 = vperm.xlu0 %490, %v283
    %v492 = vpop.permute.xlu0 %491
    %v494 = vmul.f32 %v448, %v445
    %v495 = vmul.f32 %v452, %v445
    %v496 = vmul.f32 %v456, %v445
    %v497 = vmul.f32 %v460, %v445
    %v498 = vmul.f32 %v464, %v445
    %v499 = vmul.f32 %v468, %v445
    %v500 = vmul.f32 %v472, %v445
    %v501 = vmul.f32 %v476, %v445
    %v502 = vmul.f32 %v480, %v445
    %v503 = vmul.f32 %v484, %v445
    %v504 = vmul.f32 %v488, %v445
    %v505 = vmul.f32 %v492, %v445
    %v506 = vadd.f32 %v432, %v494
    %v507 = vadd.f32 %v433, %v495
    %v508 = vadd.f32 %v434, %v496
    %v509 = vadd.f32 %v435, %v497
    %v510 = vadd.f32 %v436, %v498
    %v511 = vadd.f32 %v437, %v499
    %v512 = vadd.f32 %v438, %v500
    %v513 = vadd.f32 %v439, %v501
    %v514 = vadd.f32 %v440, %v502
    %v515 = vadd.f32 %v441, %v503
    %v516 = vadd.f32 %v442, %v504
    %v517 = vadd.f32 %v443, %v505
    %v518 = vld [vmem:[%s0 + $0x2] sm:$0x3f]
    %v519 = vld [vmem:[%s0 + $0xa] sm:$0x3f]
    %v520 = vld [vmem:[%s0 + $0x12] sm:$0x3f]
    %v521 = vld [vmem:[%s0 + $0x1a] sm:$0x3f]
    %v522 = vld [vmem:[%s0 + $0x22] sm:$0x3f]
    %v523 = vld [vmem:[%s0 + $0x2a] sm:$0x3f]
    %v524 = vld [vmem:[%s0 + $0x42] sm:$0x3f]
    %v525 = vld [vmem:[%s0 + $0x4a] sm:$0x3f]
    %v526 = vld [vmem:[%s0 + $0x52] sm:$0x3f]
    %v527 = vld [vmem:[%s0 + $0x5a] sm:$0x3f]
    %v528 = vld [vmem:[%s0 + $0x62] sm:$0x3f]
    %v529 = vld [vmem:[%s0 + $0x6a] sm:$0x3f]
    %s530 = scalar_lea.vmem %s1, 48
    %v531 = vld [vmem:[%s530] sm:$0x3f]
    %533 = vset.pattern.permute.xlu0 0
    %534 = vperm.xlu0 %533, %v518
    %v535 = vpop.permute.xlu0 %534
    %538 = vset.pattern.permute.xlu0 0
    %539 = vperm.xlu0 %538, %v519
    %v540 = vpop.permute.xlu0 %539
    %543 = vset.pattern.permute.xlu0 0
    %544 = vperm.xlu0 %543, %v520
    %v545 = vpop.permute.xlu0 %544
    %548 = vset.pattern.permute.xlu0 0
    %549 = vperm.xlu0 %548, %v521
    %v550 = vpop.permute.xlu0 %549
    %553 = vset.pattern.permute.xlu0 0
    %554 = vperm.xlu0 %553, %v522
    %v555 = vpop.permute.xlu0 %554
    %558 = vset.pattern.permute.xlu0 0
    %559 = vperm.xlu0 %558, %v523
    %v560 = vpop.permute.xlu0 %559
    %563 = vset.pattern.permute.xlu0 0
    %564 = vperm.xlu0 %563, %v524
    %v565 = vpop.permute.xlu0 %564
    %568 = vset.pattern.permute.xlu0 0
    %569 = vperm.xlu0 %568, %v525
    %v570 = vpop.permute.xlu0 %569
    %573 = vset.pattern.permute.xlu0 0
    %574 = vperm.xlu0 %573, %v526
    %v575 = vpop.permute.xlu0 %574
    %578 = vset.pattern.permute.xlu0 0
    %579 = vperm.xlu0 %578, %v527
    %v580 = vpop.permute.xlu0 %579
    %583 = vset.pattern.permute.xlu0 0
    %584 = vperm.xlu0 %583, %v528
    %v585 = vpop.permute.xlu0 %584
    %588 = vset.pattern.permute.xlu0 0
    %589 = vperm.xlu0 %588, %v529
    %v590 = vpop.permute.xlu0 %589
    %v592 = vmul.f32 %v535, %v531
    %v593 = vmul.f32 %v540, %v531
    %v594 = vmul.f32 %v545, %v531
    %v595 = vmul.f32 %v550, %v531
    %v596 = vmul.f32 %v555, %v531
    %v597 = vmul.f32 %v560, %v531
    %v598 = vmul.f32 %v565, %v531
    %v599 = vmul.f32 %v570, %v531
    %v600 = vmul.f32 %v575, %v531
    %v601 = vmul.f32 %v580, %v531
    %v602 = vmul.f32 %v585, %v531
    %v603 = vmul.f32 %v590, %v531
    %v604 = vadd.f32 %v506, %v592
    %v605 = vadd.f32 %v507, %v593
    %v606 = vadd.f32 %v508, %v594
    %v607 = vadd.f32 %v509, %v595
    %v608 = vadd.f32 %v510, %v596
    %v609 = vadd.f32 %v511, %v597
    %v610 = vadd.f32 %v512, %v598
    %v611 = vadd.f32 %v513, %v599
    %v612 = vadd.f32 %v514, %v600
    %v613 = vadd.f32 %v515, %v601
    %v614 = vadd.f32 %v516, %v602
    %v615 = vadd.f32 %v517, %v603
    %s616 = scalar_lea.vmem %s1, 56
    %v617 = vld [vmem:[%s616] sm:$0x3f]
    %618 = vset.pattern.permute.xlu0 1
    %619 = vperm.xlu0 %618, %v518
    %v620 = vpop.permute.xlu0 %619
    %622 = vset.pattern.permute.xlu0 1
    %623 = vperm.xlu0 %622, %v519
    %v624 = vpop.permute.xlu0 %623
    %626 = vset.pattern.permute.xlu0 1
    %627 = vperm.xlu0 %626, %v520
    %v628 = vpop.permute.xlu0 %627
    %630 = vset.pattern.permute.xlu0 1
    %631 = vperm.xlu0 %630, %v521
    %v632 = vpop.permute.xlu0 %631
    %634 = vset.pattern.permute.xlu0 1
    %635 = vperm.xlu0 %634, %v522
    %v636 = vpop.permute.xlu0 %635
    %638 = vset.pattern.permute.xlu0 1
    %639 = vperm.xlu0 %638, %v523
    %v640 = vpop.permute.xlu0 %639
    %642 = vset.pattern.permute.xlu0 1
    %643 = vperm.xlu0 %642, %v524
    %v644 = vpop.permute.xlu0 %643
    %646 = vset.pattern.permute.xlu0 1
    %647 = vperm.xlu0 %646, %v525
    %v648 = vpop.permute.xlu0 %647
    %650 = vset.pattern.permute.xlu0 1
    %651 = vperm.xlu0 %650, %v526
    %v652 = vpop.permute.xlu0 %651
    %654 = vset.pattern.permute.xlu0 1
    %655 = vperm.xlu0 %654, %v527
    %v656 = vpop.permute.xlu0 %655
    %658 = vset.pattern.permute.xlu0 1
    %659 = vperm.xlu0 %658, %v528
    %v660 = vpop.permute.xlu0 %659
    %662 = vset.pattern.permute.xlu0 1
    %663 = vperm.xlu0 %662, %v529
    %v664 = vpop.permute.xlu0 %663
    %v666 = vmul.f32 %v620, %v617
    %v667 = vmul.f32 %v624, %v617
    %v668 = vmul.f32 %v628, %v617
    %v669 = vmul.f32 %v632, %v617
    %v670 = vmul.f32 %v636, %v617
    %v671 = vmul.f32 %v640, %v617
    %v672 = vmul.f32 %v644, %v617
    %v673 = vmul.f32 %v648, %v617
    %v674 = vmul.f32 %v652, %v617
    %v675 = vmul.f32 %v656, %v617
    %v676 = vmul.f32 %v660, %v617
    %v677 = vmul.f32 %v664, %v617
    %v678 = vadd.f32 %v604, %v666
    %v679 = vadd.f32 %v605, %v667
    %v680 = vadd.f32 %v606, %v668
    %v681 = vadd.f32 %v607, %v669
    %v682 = vadd.f32 %v608, %v670
    %v683 = vadd.f32 %v609, %v671
    %v684 = vadd.f32 %v610, %v672
    %v685 = vadd.f32 %v611, %v673
    %v686 = vadd.f32 %v612, %v674
    %v687 = vadd.f32 %v613, %v675
    %v688 = vadd.f32 %v614, %v676
    %v689 = vadd.f32 %v615, %v677
    %s690 = scalar_lea.vmem %s1, 64
    %v691 = vld [vmem:[%s690] sm:$0x3f]
    %692 = vset.pattern.permute.xlu0 2
    %693 = vperm.xlu0 %692, %v518
    %v694 = vpop.permute.xlu0 %693
    %696 = vset.pattern.permute.xlu0 2
    %697 = vperm.xlu0 %696, %v519
    %v698 = vpop.permute.xlu0 %697
    %700 = vset.pattern.permute.xlu0 2
    %701 = vperm.xlu0 %700, %v520
    %v702 = vpop.permute.xlu0 %701
    %704 = vset.pattern.permute.xlu0 2
    %705 = vperm.xlu0 %704, %v521
    %v706 = vpop.permute.xlu0 %705
    %708 = vset.pattern.permute.xlu0 2
    %709 = vperm.xlu0 %708, %v522
    %v710 = vpop.permute.xlu0 %709
    %712 = vset.pattern.permute.xlu0 2
    %713 = vperm.xlu0 %712, %v523
    %v714 = vpop.permute.xlu0 %713
    %716 = vset.pattern.permute.xlu0 2
    %717 = vperm.xlu0 %716, %v524
    %v718 = vpop.permute.xlu0 %717
    %720 = vset.pattern.permute.xlu0 2
    %721 = vperm.xlu0 %720, %v525
    %v722 = vpop.permute.xlu0 %721
    %724 = vset.pattern.permute.xlu0 2
    %725 = vperm.xlu0 %724, %v526
    %v726 = vpop.permute.xlu0 %725
    %728 = vset.pattern.permute.xlu0 2
    %729 = vperm.xlu0 %728, %v527
    %v730 = vpop.permute.xlu0 %729
    %732 = vset.pattern.permute.xlu0 2
    %733 = vperm.xlu0 %732, %v528
    %v734 = vpop.permute.xlu0 %733
    %736 = vset.pattern.permute.xlu0 2
    %737 = vperm.xlu0 %736, %v529
    %v738 = vpop.permute.xlu0 %737
    %v740 = vmul.f32 %v694, %v691
    %v741 = vmul.f32 %v698, %v691
    %v742 = vmul.f32 %v702, %v691
    %v743 = vmul.f32 %v706, %v691
    %v744 = vmul.f32 %v710, %v691
    %v745 = vmul.f32 %v714, %v691
    %v746 = vmul.f32 %v718, %v691
    %v747 = vmul.f32 %v722, %v691
    %v748 = vmul.f32 %v726, %v691
    %v749 = vmul.f32 %v730, %v691
    %v750 = vmul.f32 %v734, %v691
    %v751 = vmul.f32 %v738, %v691
    %v752 = vadd.f32 %v678, %v740
    %v753 = vadd.f32 %v679, %v741
    %v754 = vadd.f32 %v680, %v742
    %v755 = vadd.f32 %v681, %v743
    %v756 = vadd.f32 %v682, %v744
    %v757 = vadd.f32 %v683, %v745
    %v758 = vadd.f32 %v684, %v746
    %v759 = vadd.f32 %v685, %v747
    %v760 = vadd.f32 %v686, %v748
    %v761 = vadd.f32 %v687, %v749
    %v762 = vadd.f32 %v688, %v750
    %v763 = vadd.f32 %v689, %v751
    %s764 = scalar_lea.vmem %s0, 8
    %v765 = vld [vmem:[%s764] sm:$0x3f]
    %v766 = vld [vmem:[%s764 + $0x8] sm:$0x3f]
    %v767 = vld [vmem:[%s764 + $0x10] sm:$0x3f]
    %v768 = vld [vmem:[%s764 + $0x18] sm:$0x3f]
    %v769 = vld [vmem:[%s764 + $0x20] sm:$0x3f]
    %v770 = vld [vmem:[%s764 + $0x28] sm:$0x3f]
    %v771 = vld [vmem:[%s764 + $0x40] sm:$0x3f]
    %v772 = vld [vmem:[%s764 + $0x48] sm:$0x3f]
    %v773 = vld [vmem:[%s764 + $0x50] sm:$0x3f]
    %v774 = vld [vmem:[%s764 + $0x58] sm:$0x3f]
    %v775 = vld [vmem:[%s764 + $0x60] sm:$0x3f]
    %v776 = vld [vmem:[%s764 + $0x68] sm:$0x3f]
    %s777 = scalar_lea.vmem %s1, 72
    %v778 = vld [vmem:[%s777] sm:$0x3f]
    %780 = vset.pattern.permute.xlu0 0
    %781 = vperm.xlu0 %780, %v765
    %v782 = vpop.permute.xlu0 %781
    %785 = vset.pattern.permute.xlu0 0
    %786 = vperm.xlu0 %785, %v766
    %v787 = vpop.permute.xlu0 %786
    %790 = vset.pattern.permute.xlu0 0
    %791 = vperm.xlu0 %790, %v767
    %v792 = vpop.permute.xlu0 %791
    %795 = vset.pattern.permute.xlu0 0
    %796 = vperm.xlu0 %795, %v768
    %v797 = vpop.permute.xlu0 %796
    %800 = vset.pattern.permute.xlu0 0
    %801 = vperm.xlu0 %800, %v769
    %v802 = vpop.permute.xlu0 %801
    %805 = vset.pattern.permute.xlu0 0
    %806 = vperm.xlu0 %805, %v770
    %v807 = vpop.permute.xlu0 %806
    %810 = vset.pattern.permute.xlu0 0
    %811 = vperm.xlu0 %810, %v771
    %v812 = vpop.permute.xlu0 %811
    %815 = vset.pattern.permute.xlu0 0
    %816 = vperm.xlu0 %815, %v772
    %v817 = vpop.permute.xlu0 %816
    %820 = vset.pattern.permute.xlu0 0
    %821 = vperm.xlu0 %820, %v773
    %v822 = vpop.permute.xlu0 %821
    %825 = vset.pattern.permute.xlu0 0
    %826 = vperm.xlu0 %825, %v774
    %v827 = vpop.permute.xlu0 %826
    %830 = vset.pattern.permute.xlu0 0
    %831 = vperm.xlu0 %830, %v775
    %v832 = vpop.permute.xlu0 %831
    %835 = vset.pattern.permute.xlu0 0
    %836 = vperm.xlu0 %835, %v776
    %v837 = vpop.permute.xlu0 %836
    %v839 = vmul.f32 %v782, %v778
    %v840 = vmul.f32 %v787, %v778
    %v841 = vmul.f32 %v792, %v778
    %v842 = vmul.f32 %v797, %v778
    %v843 = vmul.f32 %v802, %v778
    %v844 = vmul.f32 %v807, %v778
    %v845 = vmul.f32 %v812, %v778
    %v846 = vmul.f32 %v817, %v778
    %v847 = vmul.f32 %v822, %v778
    %v848 = vmul.f32 %v827, %v778
    %v849 = vmul.f32 %v832, %v778
    %v850 = vmul.f32 %v837, %v778
    %v851 = vadd.f32 %v752, %v839
    %v852 = vadd.f32 %v753, %v840
    %v853 = vadd.f32 %v754, %v841
    %v854 = vadd.f32 %v755, %v842
    %v855 = vadd.f32 %v756, %v843
    %v856 = vadd.f32 %v757, %v844
    %v857 = vadd.f32 %v758, %v845
    %v858 = vadd.f32 %v759, %v846
    %v859 = vadd.f32 %v760, %v847
    %v860 = vadd.f32 %v761, %v848
    %v861 = vadd.f32 %v762, %v849
    %v862 = vadd.f32 %v763, %v850
    %s863 = scalar_lea.vmem %s1, 80
    %v864 = vld [vmem:[%s863] sm:$0x3f]
    %865 = vset.pattern.permute.xlu0 1
    %866 = vperm.xlu0 %865, %v765
    %v867 = vpop.permute.xlu0 %866
    %869 = vset.pattern.permute.xlu0 1
    %870 = vperm.xlu0 %869, %v766
    %v871 = vpop.permute.xlu0 %870
    %873 = vset.pattern.permute.xlu0 1
    %874 = vperm.xlu0 %873, %v767
    %v875 = vpop.permute.xlu0 %874
    %877 = vset.pattern.permute.xlu0 1
    %878 = vperm.xlu0 %877, %v768
    %v879 = vpop.permute.xlu0 %878
    %881 = vset.pattern.permute.xlu0 1
    %882 = vperm.xlu0 %881, %v769
    %v883 = vpop.permute.xlu0 %882
    %885 = vset.pattern.permute.xlu0 1
    %886 = vperm.xlu0 %885, %v770
    %v887 = vpop.permute.xlu0 %886
    %889 = vset.pattern.permute.xlu0 1
    %890 = vperm.xlu0 %889, %v771
    %v891 = vpop.permute.xlu0 %890
    %893 = vset.pattern.permute.xlu0 1
    %894 = vperm.xlu0 %893, %v772
    %v895 = vpop.permute.xlu0 %894
    %897 = vset.pattern.permute.xlu0 1
    %898 = vperm.xlu0 %897, %v773
    %v899 = vpop.permute.xlu0 %898
    %901 = vset.pattern.permute.xlu0 1
    %902 = vperm.xlu0 %901, %v774
    %v903 = vpop.permute.xlu0 %902
    %905 = vset.pattern.permute.xlu0 1
    %906 = vperm.xlu0 %905, %v775
    %v907 = vpop.permute.xlu0 %906
    %909 = vset.pattern.permute.xlu0 1
    %910 = vperm.xlu0 %909, %v776
    %v911 = vpop.permute.xlu0 %910
    %v913 = vmul.f32 %v867, %v864
    %v914 = vmul.f32 %v871, %v864
    %v915 = vmul.f32 %v875, %v864
    %v916 = vmul.f32 %v879, %v864
    %v917 = vmul.f32 %v883, %v864
    %v918 = vmul.f32 %v887, %v864
    %v919 = vmul.f32 %v891, %v864
    %v920 = vmul.f32 %v895, %v864
    %v921 = vmul.f32 %v899, %v864
    %v922 = vmul.f32 %v903, %v864
    %v923 = vmul.f32 %v907, %v864
    %v924 = vmul.f32 %v911, %v864
    %v925 = vadd.f32 %v851, %v913
    %v926 = vadd.f32 %v852, %v914
    %v927 = vadd.f32 %v853, %v915
    %v928 = vadd.f32 %v854, %v916
    %v929 = vadd.f32 %v855, %v917
    %v930 = vadd.f32 %v856, %v918
    %v931 = vadd.f32 %v857, %v919
    %v932 = vadd.f32 %v858, %v920
    %v933 = vadd.f32 %v859, %v921
    %v934 = vadd.f32 %v860, %v922
    %v935 = vadd.f32 %v861, %v923
    %v936 = vadd.f32 %v862, %v924
    %s937 = scalar_lea.vmem %s1, 88
    %v938 = vld [vmem:[%s937] sm:$0x3f]
    %939 = vset.pattern.permute.xlu0 2
    %940 = vperm.xlu0 %939, %v765
    %v941 = vpop.permute.xlu0 %940
    %943 = vset.pattern.permute.xlu0 2
    %944 = vperm.xlu0 %943, %v766
    %v945 = vpop.permute.xlu0 %944
    %947 = vset.pattern.permute.xlu0 2
    %948 = vperm.xlu0 %947, %v767
    %v949 = vpop.permute.xlu0 %948
    %951 = vset.pattern.permute.xlu0 2
    %952 = vperm.xlu0 %951, %v768
    %v953 = vpop.permute.xlu0 %952
    %955 = vset.pattern.permute.xlu0 2
    %956 = vperm.xlu0 %955, %v769
    %v957 = vpop.permute.xlu0 %956
    %959 = vset.pattern.permute.xlu0 2
    %960 = vperm.xlu0 %959, %v770
    %v961 = vpop.permute.xlu0 %960
    %963 = vset.pattern.permute.xlu0 2
    %964 = vperm.xlu0 %963, %v771
    %v965 = vpop.permute.xlu0 %964
    %967 = vset.pattern.permute.xlu0 2
    %968 = vperm.xlu0 %967, %v772
    %v969 = vpop.permute.xlu0 %968
    %971 = vset.pattern.permute.xlu0 2
    %972 = vperm.xlu0 %971, %v773
    %v973 = vpop.permute.xlu0 %972
    %975 = vset.pattern.permute.xlu0 2
    %976 = vperm.xlu0 %975, %v774
    %v977 = vpop.permute.xlu0 %976
    %979 = vset.pattern.permute.xlu0 2
    %980 = vperm.xlu0 %979, %v775
    %v981 = vpop.permute.xlu0 %980
    %983 = vset.pattern.permute.xlu0 2
    %984 = vperm.xlu0 %983, %v776
    %v985 = vpop.permute.xlu0 %984
    %v987 = vmul.f32 %v941, %v938
    %v988 = vmul.f32 %v945, %v938
    %v989 = vmul.f32 %v949, %v938
    %v990 = vmul.f32 %v953, %v938
    %v991 = vmul.f32 %v957, %v938
    %v992 = vmul.f32 %v961, %v938
    %v993 = vmul.f32 %v965, %v938
    %v994 = vmul.f32 %v969, %v938
    %v995 = vmul.f32 %v973, %v938
    %v996 = vmul.f32 %v977, %v938
    %v997 = vmul.f32 %v981, %v938
    %v998 = vmul.f32 %v985, %v938
    %v999 = vadd.f32 %v925, %v987
    %v1000 = vadd.f32 %v926, %v988
    %v1001 = vadd.f32 %v927, %v989
    %v1002 = vadd.f32 %v928, %v990
    %v1003 = vadd.f32 %v929, %v991
    %v1004 = vadd.f32 %v930, %v992
    %v1005 = vadd.f32 %v931, %v993
    %v1006 = vadd.f32 %v932, %v994
    %v1007 = vadd.f32 %v933, %v995
    %v1008 = vadd.f32 %v934, %v996
    %v1009 = vadd.f32 %v935, %v997
    %v1010 = vadd.f32 %v936, %v998
    %v1011 = vld [vmem:[%s764 + $0x1] sm:$0x3f]
    %v1012 = vld [vmem:[%s764 + $0x9] sm:$0x3f]
    %v1013 = vld [vmem:[%s764 + $0x11] sm:$0x3f]
    %v1014 = vld [vmem:[%s764 + $0x19] sm:$0x3f]
    %v1015 = vld [vmem:[%s764 + $0x21] sm:$0x3f]
    %v1016 = vld [vmem:[%s764 + $0x29] sm:$0x3f]
    %v1017 = vld [vmem:[%s764 + $0x41] sm:$0x3f]
    %v1018 = vld [vmem:[%s764 + $0x49] sm:$0x3f]
    %v1019 = vld [vmem:[%s764 + $0x51] sm:$0x3f]
    %v1020 = vld [vmem:[%s764 + $0x59] sm:$0x3f]
    %v1021 = vld [vmem:[%s764 + $0x61] sm:$0x3f]
    %v1022 = vld [vmem:[%s764 + $0x69] sm:$0x3f]
    %s1023 = scalar_lea.vmem %s1, 96
    %v1024 = vld [vmem:[%s1023] sm:$0x3f]
    %1026 = vset.pattern.permute.xlu0 0
    %1027 = vperm.xlu0 %1026, %v1011
    %v1028 = vpop.permute.xlu0 %1027
    %1031 = vset.pattern.permute.xlu0 0
    %1032 = vperm.xlu0 %1031, %v1012
    %v1033 = vpop.permute.xlu0 %1032
    %1036 = vset.pattern.permute.xlu0 0
    %1037 = vperm.xlu0 %1036, %v1013
    %v1038 = vpop.permute.xlu0 %1037
    %1041 = vset.pattern.permute.xlu0 0
    %1042 = vperm.xlu0 %1041, %v1014
    %v1043 = vpop.permute.xlu0 %1042
    %1046 = vset.pattern.permute.xlu0 0
    %1047 = vperm.xlu0 %1046, %v1015
    %v1048 = vpop.permute.xlu0 %1047
    %1051 = vset.pattern.permute.xlu0 0
    %1052 = vperm.xlu0 %1051, %v1016
    %v1053 = vpop.permute.xlu0 %1052
    %1056 = vset.pattern.permute.xlu0 0
    %1057 = vperm.xlu0 %1056, %v1017
    %v1058 = vpop.permute.xlu0 %1057
    %1061 = vset.pattern.permute.xlu0 0
    %1062 = vperm.xlu0 %1061, %v1018
    %v1063 = vpop.permute.xlu0 %1062
    %1066 = vset.pattern.permute.xlu0 0
    %1067 = vperm.xlu0 %1066, %v1019
    %v1068 = vpop.permute.xlu0 %1067
    %1071 = vset.pattern.permute.xlu0 0
    %1072 = vperm.xlu0 %1071, %v1020
    %v1073 = vpop.permute.xlu0 %1072
    %1076 = vset.pattern.permute.xlu0 0
    %1077 = vperm.xlu0 %1076, %v1021
    %v1078 = vpop.permute.xlu0 %1077
    %1081 = vset.pattern.permute.xlu0 0
    %1082 = vperm.xlu0 %1081, %v1022
    %v1083 = vpop.permute.xlu0 %1082
    %v1085 = vmul.f32 %v1028, %v1024
    %v1086 = vmul.f32 %v1033, %v1024
    %v1087 = vmul.f32 %v1038, %v1024
    %v1088 = vmul.f32 %v1043, %v1024
    %v1089 = vmul.f32 %v1048, %v1024
    %v1090 = vmul.f32 %v1053, %v1024
    %v1091 = vmul.f32 %v1058, %v1024
    %v1092 = vmul.f32 %v1063, %v1024
    %v1093 = vmul.f32 %v1068, %v1024
    %v1094 = vmul.f32 %v1073, %v1024
    %v1095 = vmul.f32 %v1078, %v1024
    %v1096 = vmul.f32 %v1083, %v1024
    %v1097 = vadd.f32 %v999, %v1085
    %v1098 = vadd.f32 %v1000, %v1086
    %v1099 = vadd.f32 %v1001, %v1087
    %v1100 = vadd.f32 %v1002, %v1088
    %v1101 = vadd.f32 %v1003, %v1089
    %v1102 = vadd.f32 %v1004, %v1090
    %v1103 = vadd.f32 %v1005, %v1091
    %v1104 = vadd.f32 %v1006, %v1092
    %v1105 = vadd.f32 %v1007, %v1093
    %v1106 = vadd.f32 %v1008, %v1094
    %v1107 = vadd.f32 %v1009, %v1095
    %v1108 = vadd.f32 %v1010, %v1096
    %s1109 = scalar_lea.vmem %s1, 104
    %v1110 = vld [vmem:[%s1109] sm:$0x3f]
    %1111 = vset.pattern.permute.xlu0 1
    %1112 = vperm.xlu0 %1111, %v1011
    %v1113 = vpop.permute.xlu0 %1112
    %1115 = vset.pattern.permute.xlu0 1
    %1116 = vperm.xlu0 %1115, %v1012
    %v1117 = vpop.permute.xlu0 %1116
    %1119 = vset.pattern.permute.xlu0 1
    %1120 = vperm.xlu0 %1119, %v1013
    %v1121 = vpop.permute.xlu0 %1120
    %1123 = vset.pattern.permute.xlu0 1
    %1124 = vperm.xlu0 %1123, %v1014
    %v1125 = vpop.permute.xlu0 %1124
    %1127 = vset.pattern.permute.xlu0 1
    %1128 = vperm.xlu0 %1127, %v1015
    %v1129 = vpop.permute.xlu0 %1128
    %1131 = vset.pattern.permute.xlu0 1
    %1132 = vperm.xlu0 %1131, %v1016
    %v1133 = vpop.permute.xlu0 %1132
    %1135 = vset.pattern.permute.xlu0 1
    %1136 = vperm.xlu0 %1135, %v1017
    %v1137 = vpop.permute.xlu0 %1136
    %1139 = vset.pattern.permute.xlu0 1
    %1140 = vperm.xlu0 %1139, %v1018
    %v1141 = vpop.permute.xlu0 %1140
    %1143 = vset.pattern.permute.xlu0 1
    %1144 = vperm.xlu0 %1143, %v1019
    %v1145 = vpop.permute.xlu0 %1144
    %1147 = vset.pattern.permute.xlu0 1
    %1148 = vperm.xlu0 %1147, %v1020
    %v1149 = vpop.permute.xlu0 %1148
    %1151 = vset.pattern.permute.xlu0 1
    %1152 = vperm.xlu0 %1151, %v1021
    %v1153 = vpop.permute.xlu0 %1152
    %1155 = vset.pattern.permute.xlu0 1
    %1156 = vperm.xlu0 %1155, %v1022
    %v1157 = vpop.permute.xlu0 %1156
    %v1159 = vmul.f32 %v1113, %v1110
    %v1160 = vmul.f32 %v1117, %v1110
    %v1161 = vmul.f32 %v1121, %v1110
    %v1162 = vmul.f32 %v1125, %v1110
    %v1163 = vmul.f32 %v1129, %v1110
    %v1164 = vmul.f32 %v1133, %v1110
    %v1165 = vmul.f32 %v1137, %v1110
    %v1166 = vmul.f32 %v1141, %v1110
    %v1167 = vmul.f32 %v1145, %v1110
    %v1168 = vmul.f32 %v1149, %v1110
    %v1169 = vmul.f32 %v1153, %v1110
    %v1170 = vmul.f32 %v1157, %v1110
    %v1171 = vadd.f32 %v1097, %v1159
    %v1172 = vadd.f32 %v1098, %v1160
    %v1173 = vadd.f32 %v1099, %v1161
    %v1174 = vadd.f32 %v1100, %v1162
    %v1175 = vadd.f32 %v1101, %v1163
    %v1176 = vadd.f32 %v1102, %v1164
    %v1177 = vadd.f32 %v1103, %v1165
    %v1178 = vadd.f32 %v1104, %v1166
    %v1179 = vadd.f32 %v1105, %v1167
    %v1180 = vadd.f32 %v1106, %v1168
    %v1181 = vadd.f32 %v1107, %v1169
    %v1182 = vadd.f32 %v1108, %v1170
    %s1183 = scalar_lea.vmem %s1, 112
    %v1184 = vld [vmem:[%s1183] sm:$0x3f]
    %1185 = vset.pattern.permute.xlu0 2
    %1186 = vperm.xlu0 %1185, %v1011
    %v1187 = vpop.permute.xlu0 %1186
    %1189 = vset.pattern.permute.xlu0 2
    %1190 = vperm.xlu0 %1189, %v1012
    %v1191 = vpop.permute.xlu0 %1190
    %1193 = vset.pattern.permute.xlu0 2
    %1194 = vperm.xlu0 %1193, %v1013
    %v1195 = vpop.permute.xlu0 %1194
    %1197 = vset.pattern.permute.xlu0 2
    %1198 = vperm.xlu0 %1197, %v1014
    %v1199 = vpop.permute.xlu0 %1198
    %1201 = vset.pattern.permute.xlu0 2
    %1202 = vperm.xlu0 %1201, %v1015
    %v1203 = vpop.permute.xlu0 %1202
    %1205 = vset.pattern.permute.xlu0 2
    %1206 = vperm.xlu0 %1205, %v1016
    %v1207 = vpop.permute.xlu0 %1206
    %1209 = vset.pattern.permute.xlu0 2
    %1210 = vperm.xlu0 %1209, %v1017
    %v1211 = vpop.permute.xlu0 %1210
    %1213 = vset.pattern.permute.xlu0 2
    %1214 = vperm.xlu0 %1213, %v1018
    %v1215 = vpop.permute.xlu0 %1214
    %1217 = vset.pattern.permute.xlu0 2
    %1218 = vperm.xlu0 %1217, %v1019
    %v1219 = vpop.permute.xlu0 %1218
    %1221 = vset.pattern.permute.xlu0 2
    %1222 = vperm.xlu0 %1221, %v1020
    %v1223 = vpop.permute.xlu0 %1222
    %1225 = vset.pattern.permute.xlu0 2
    %1226 = vperm.xlu0 %1225, %v1021
    %v1227 = vpop.permute.xlu0 %1226
    %1229 = vset.pattern.permute.xlu0 2
    %1230 = vperm.xlu0 %1229, %v1022
    %v1231 = vpop.permute.xlu0 %1230
    %v1233 = vmul.f32 %v1187, %v1184
    %v1234 = vmul.f32 %v1191, %v1184
    %v1235 = vmul.f32 %v1195, %v1184
    %v1236 = vmul.f32 %v1199, %v1184
    %v1237 = vmul.f32 %v1203, %v1184
    %v1238 = vmul.f32 %v1207, %v1184
    %v1239 = vmul.f32 %v1211, %v1184
    %v1240 = vmul.f32 %v1215, %v1184
    %v1241 = vmul.f32 %v1219, %v1184
    %v1242 = vmul.f32 %v1223, %v1184
    %v1243 = vmul.f32 %v1227, %v1184
    %v1244 = vmul.f32 %v1231, %v1184
    %v1245 = vadd.f32 %v1171, %v1233
    %v1246 = vadd.f32 %v1172, %v1234
    %v1247 = vadd.f32 %v1173, %v1235
    %v1248 = vadd.f32 %v1174, %v1236
    %v1249 = vadd.f32 %v1175, %v1237
    %v1250 = vadd.f32 %v1176, %v1238
    %v1251 = vadd.f32 %v1177, %v1239
    %v1252 = vadd.f32 %v1178, %v1240
    %v1253 = vadd.f32 %v1179, %v1241
    %v1254 = vadd.f32 %v1180, %v1242
    %v1255 = vadd.f32 %v1181, %v1243
    %v1256 = vadd.f32 %v1182, %v1244
    %v1257 = vld [vmem:[%s764 + $0x2] sm:$0x3f]
    %v1258 = vld [vmem:[%s764 + $0xa] sm:$0x3f]
    %v1259 = vld [vmem:[%s764 + $0x12] sm:$0x3f]
    %v1260 = vld [vmem:[%s764 + $0x1a] sm:$0x3f]
    %v1261 = vld [vmem:[%s764 + $0x22] sm:$0x3f]
    %v1262 = vld [vmem:[%s764 + $0x2a] sm:$0x3f]
    %v1263 = vld [vmem:[%s764 + $0x42] sm:$0x3f]
    %v1264 = vld [vmem:[%s764 + $0x4a] sm:$0x3f]
    %v1265 = vld [vmem:[%s764 + $0x52] sm:$0x3f]
    %v1266 = vld [vmem:[%s764 + $0x5a] sm:$0x3f]
    %v1267 = vld [vmem:[%s764 + $0x62] sm:$0x3f]
    %v1268 = vld [vmem:[%s764 + $0x6a] sm:$0x3f]
    %s1269 = scalar_lea.vmem %s1, 120
    %v1270 = vld [vmem:[%s1269] sm:$0x3f]
    %1272 = vset.pattern.permute.xlu0 0
    %1273 = vperm.xlu0 %1272, %v1257
    %v1274 = vpop.permute.xlu0 %1273
    %1277 = vset.pattern.permute.xlu0 0
    %1278 = vperm.xlu0 %1277, %v1258
    %v1279 = vpop.permute.xlu0 %1278
    %1282 = vset.pattern.permute.xlu0 0
    %1283 = vperm.xlu0 %1282, %v1259
    %v1284 = vpop.permute.xlu0 %1283
    %1287 = vset.pattern.permute.xlu0 0
    %1288 = vperm.xlu0 %1287, %v1260
    %v1289 = vpop.permute.xlu0 %1288
    %1292 = vset.pattern.permute.xlu0 0
    %1293 = vperm.xlu0 %1292, %v1261
    %v1294 = vpop.permute.xlu0 %1293
    %1297 = vset.pattern.permute.xlu0 0
    %1298 = vperm.xlu0 %1297, %v1262
    %v1299 = vpop.permute.xlu0 %1298
    %1302 = vset.pattern.permute.xlu0 0
    %1303 = vperm.xlu0 %1302, %v1263
    %v1304 = vpop.permute.xlu0 %1303
    %1307 = vset.pattern.permute.xlu0 0
    %1308 = vperm.xlu0 %1307, %v1264
    %v1309 = vpop.permute.xlu0 %1308
    %1312 = vset.pattern.permute.xlu0 0
    %1313 = vperm.xlu0 %1312, %v1265
    %v1314 = vpop.permute.xlu0 %1313
    %1317 = vset.pattern.permute.xlu0 0
    %1318 = vperm.xlu0 %1317, %v1266
    %v1319 = vpop.permute.xlu0 %1318
    %1322 = vset.pattern.permute.xlu0 0
    %1323 = vperm.xlu0 %1322, %v1267
    %v1324 = vpop.permute.xlu0 %1323
    %1327 = vset.pattern.permute.xlu0 0
    %1328 = vperm.xlu0 %1327, %v1268
    %v1329 = vpop.permute.xlu0 %1328
    %v1331 = vmul.f32 %v1274, %v1270
    %v1332 = vmul.f32 %v1279, %v1270
    %v1333 = vmul.f32 %v1284, %v1270
    %v1334 = vmul.f32 %v1289, %v1270
    %v1335 = vmul.f32 %v1294, %v1270
    %v1336 = vmul.f32 %v1299, %v1270
    %v1337 = vmul.f32 %v1304, %v1270
    %v1338 = vmul.f32 %v1309, %v1270
    %v1339 = vmul.f32 %v1314, %v1270
    %v1340 = vmul.f32 %v1319, %v1270
    %v1341 = vmul.f32 %v1324, %v1270
    %v1342 = vmul.f32 %v1329, %v1270
    %v1343 = vadd.f32 %v1245, %v1331
    %v1344 = vadd.f32 %v1246, %v1332
    %v1345 = vadd.f32 %v1247, %v1333
    %v1346 = vadd.f32 %v1248, %v1334
    %v1347 = vadd.f32 %v1249, %v1335
    %v1348 = vadd.f32 %v1250, %v1336
    %v1349 = vadd.f32 %v1251, %v1337
    %v1350 = vadd.f32 %v1252, %v1338
    %v1351 = vadd.f32 %v1253, %v1339
    %v1352 = vadd.f32 %v1254, %v1340
    %v1353 = vadd.f32 %v1255, %v1341
    %v1354 = vadd.f32 %v1256, %v1342
    %s1355 = scalar_lea.vmem %s1, 128
    %v1356 = vld [vmem:[%s1355] sm:$0x3f]
    %1357 = vset.pattern.permute.xlu0 1
    %1358 = vperm.xlu0 %1357, %v1257
    %v1359 = vpop.permute.xlu0 %1358
    %1361 = vset.pattern.permute.xlu0 1
    %1362 = vperm.xlu0 %1361, %v1258
    %v1363 = vpop.permute.xlu0 %1362
    %1365 = vset.pattern.permute.xlu0 1
    %1366 = vperm.xlu0 %1365, %v1259
    %v1367 = vpop.permute.xlu0 %1366
    %1369 = vset.pattern.permute.xlu0 1
    %1370 = vperm.xlu0 %1369, %v1260
    %v1371 = vpop.permute.xlu0 %1370
    %1373 = vset.pattern.permute.xlu0 1
    %1374 = vperm.xlu0 %1373, %v1261
    %v1375 = vpop.permute.xlu0 %1374
    %1377 = vset.pattern.permute.xlu0 1
    %1378 = vperm.xlu0 %1377, %v1262
    %v1379 = vpop.permute.xlu0 %1378
    %1381 = vset.pattern.permute.xlu0 1
    %1382 = vperm.xlu0 %1381, %v1263
    %v1383 = vpop.permute.xlu0 %1382
    %1385 = vset.pattern.permute.xlu0 1
    %1386 = vperm.xlu0 %1385, %v1264
    %v1387 = vpop.permute.xlu0 %1386
    %1389 = vset.pattern.permute.xlu0 1
    %1390 = vperm.xlu0 %1389, %v1265
    %v1391 = vpop.permute.xlu0 %1390
    %1393 = vset.pattern.permute.xlu0 1
    %1394 = vperm.xlu0 %1393, %v1266
    %v1395 = vpop.permute.xlu0 %1394
    %1397 = vset.pattern.permute.xlu0 1
    %1398 = vperm.xlu0 %1397, %v1267
    %v1399 = vpop.permute.xlu0 %1398
    %1401 = vset.pattern.permute.xlu0 1
    %1402 = vperm.xlu0 %1401, %v1268
    %v1403 = vpop.permute.xlu0 %1402
    %v1405 = vmul.f32 %v1359, %v1356
    %v1406 = vmul.f32 %v1363, %v1356
    %v1407 = vmul.f32 %v1367, %v1356
    %v1408 = vmul.f32 %v1371, %v1356
    %v1409 = vmul.f32 %v1375, %v1356
    %v1410 = vmul.f32 %v1379, %v1356
    %v1411 = vmul.f32 %v1383, %v1356
    %v1412 = vmul.f32 %v1387, %v1356
    %v1413 = vmul.f32 %v1391, %v1356
    %v1414 = vmul.f32 %v1395, %v1356
    %v1415 = vmul.f32 %v1399, %v1356
    %v1416 = vmul.f32 %v1403, %v1356
    %v1417 = vadd.f32 %v1343, %v1405
    %v1418 = vadd.f32 %v1344, %v1406
    %v1419 = vadd.f32 %v1345, %v1407
    %v1420 = vadd.f32 %v1346, %v1408
    %v1421 = vadd.f32 %v1347, %v1409
    %v1422 = vadd.f32 %v1348, %v1410
    %v1423 = vadd.f32 %v1349, %v1411
    %v1424 = vadd.f32 %v1350, %v1412
    %v1425 = vadd.f32 %v1351, %v1413
    %v1426 = vadd.f32 %v1352, %v1414
    %v1427 = vadd.f32 %v1353, %v1415
    %v1428 = vadd.f32 %v1354, %v1416
    %s1429 = scalar_lea.vmem %s1, 136
    %v1430 = vld [vmem:[%s1429] sm:$0x3f]
    %1431 = vset.pattern.permute.xlu0 2
    %1432 = vperm.xlu0 %1431, %v1257
    %v1433 = vpop.permute.xlu0 %1432
    %1435 = vset.pattern.permute.xlu0 2
    %1436 = vperm.xlu0 %1435, %v1258
    %v1437 = vpop.permute.xlu0 %1436
    %1439 = vset.pattern.permute.xlu0 2
    %1440 = vperm.xlu0 %1439, %v1259
    %v1441 = vpop.permute.xlu0 %1440
    %1443 = vset.pattern.permute.xlu0 2
    %1444 = vperm.xlu0 %1443, %v1260
    %v1445 = vpop.permute.xlu0 %1444
    %1447 = vset.pattern.permute.xlu0 2
    %1448 = vperm.xlu0 %1447, %v1261
    %v1449 = vpop.permute.xlu0 %1448
    %1451 = vset.pattern.permute.xlu0 2
    %1452 = vperm.xlu0 %1451, %v1262
    %v1453 = vpop.permute.xlu0 %1452
    %1455 = vset.pattern.permute.xlu0 2
    %1456 = vperm.xlu0 %1455, %v1263
    %v1457 = vpop.permute.xlu0 %1456
    %1459 = vset.pattern.permute.xlu0 2
    %1460 = vperm.xlu0 %1459, %v1264
    %v1461 = vpop.permute.xlu0 %1460
    %1463 = vset.pattern.permute.xlu0 2
    %1464 = vperm.xlu0 %1463, %v1265
    %v1465 = vpop.permute.xlu0 %1464
    %1467 = vset.pattern.permute.xlu0 2
    %1468 = vperm.xlu0 %1467, %v1266
    %v1469 = vpop.permute.xlu0 %1468
    %1471 = vset.pattern.permute.xlu0 2
    %1472 = vperm.xlu0 %1471, %v1267
    %v1473 = vpop.permute.xlu0 %1472
    %1475 = vset.pattern.permute.xlu0 2
    %1476 = vperm.xlu0 %1475, %v1268
    %v1477 = vpop.permute.xlu0 %1476
    %v1479 = vmul.f32 %v1433, %v1430
    %v1480 = vmul.f32 %v1437, %v1430
    %v1481 = vmul.f32 %v1441, %v1430
    %v1482 = vmul.f32 %v1445, %v1430
    %v1483 = vmul.f32 %v1449, %v1430
    %v1484 = vmul.f32 %v1453, %v1430
    %v1485 = vmul.f32 %v1457, %v1430
    %v1486 = vmul.f32 %v1461, %v1430
    %v1487 = vmul.f32 %v1465, %v1430
    %v1488 = vmul.f32 %v1469, %v1430
    %v1489 = vmul.f32 %v1473, %v1430
    %v1490 = vmul.f32 %v1477, %v1430
    %v1491 = vadd.f32 %v1417, %v1479
    %v1492 = vadd.f32 %v1418, %v1480
    %v1493 = vadd.f32 %v1419, %v1481
    %v1494 = vadd.f32 %v1420, %v1482
    %v1495 = vadd.f32 %v1421, %v1483
    %v1496 = vadd.f32 %v1422, %v1484
    %v1497 = vadd.f32 %v1423, %v1485
    %v1498 = vadd.f32 %v1424, %v1486
    %v1499 = vadd.f32 %v1425, %v1487
    %v1500 = vadd.f32 %v1426, %v1488
    %v1501 = vadd.f32 %v1427, %v1489
    %v1502 = vadd.f32 %v1428, %v1490
    %s1503 = scalar_lea.vmem %s0, 16
    %v1504 = vld [vmem:[%s1503] sm:$0x3f]
    %v1505 = vld [vmem:[%s1503 + $0x8] sm:$0x3f]
    %v1506 = vld [vmem:[%s1503 + $0x10] sm:$0x3f]
    %v1507 = vld [vmem:[%s1503 + $0x18] sm:$0x3f]
    %v1508 = vld [vmem:[%s1503 + $0x20] sm:$0x3f]
    %v1509 = vld [vmem:[%s1503 + $0x28] sm:$0x3f]
    %v1510 = vld [vmem:[%s1503 + $0x40] sm:$0x3f]
    %v1511 = vld [vmem:[%s1503 + $0x48] sm:$0x3f]
    %v1512 = vld [vmem:[%s1503 + $0x50] sm:$0x3f]
    %v1513 = vld [vmem:[%s1503 + $0x58] sm:$0x3f]
    %v1514 = vld [vmem:[%s1503 + $0x60] sm:$0x3f]
    %v1515 = vld [vmem:[%s1503 + $0x68] sm:$0x3f]
    %s1516 = scalar_lea.vmem %s1, 144
    %v1517 = vld [vmem:[%s1516] sm:$0x3f]
    %1519 = vset.pattern.permute.xlu0 0
    %1520 = vperm.xlu0 %1519, %v1504
    %v1521 = vpop.permute.xlu0 %1520
    %1524 = vset.pattern.permute.xlu0 0
    %1525 = vperm.xlu0 %1524, %v1505
    %v1526 = vpop.permute.xlu0 %1525
    %1529 = vset.pattern.permute.xlu0 0
    %1530 = vperm.xlu0 %1529, %v1506
    %v1531 = vpop.permute.xlu0 %1530
    %1534 = vset.pattern.permute.xlu0 0
    %1535 = vperm.xlu0 %1534, %v1507
    %v1536 = vpop.permute.xlu0 %1535
    %1539 = vset.pattern.permute.xlu0 0
    %1540 = vperm.xlu0 %1539, %v1508
    %v1541 = vpop.permute.xlu0 %1540
    %1544 = vset.pattern.permute.xlu0 0
    %1545 = vperm.xlu0 %1544, %v1509
    %v1546 = vpop.permute.xlu0 %1545
    %1549 = vset.pattern.permute.xlu0 0
    %1550 = vperm.xlu0 %1549, %v1510
    %v1551 = vpop.permute.xlu0 %1550
    %1554 = vset.pattern.permute.xlu0 0
    %1555 = vperm.xlu0 %1554, %v1511
    %v1556 = vpop.permute.xlu0 %1555
    %1559 = vset.pattern.permute.xlu0 0
    %1560 = vperm.xlu0 %1559, %v1512
    %v1561 = vpop.permute.xlu0 %1560
    %1564 = vset.pattern.permute.xlu0 0
    %1565 = vperm.xlu0 %1564, %v1513
    %v1566 = vpop.permute.xlu0 %1565
    %1569 = vset.pattern.permute.xlu0 0
    %1570 = vperm.xlu0 %1569, %v1514
    %v1571 = vpop.permute.xlu0 %1570
    %1574 = vset.pattern.permute.xlu0 0
    %1575 = vperm.xlu0 %1574, %v1515
    %v1576 = vpop.permute.xlu0 %1575
    %v1578 = vmul.f32 %v1521, %v1517
    %v1579 = vmul.f32 %v1526, %v1517
    %v1580 = vmul.f32 %v1531, %v1517
    %v1581 = vmul.f32 %v1536, %v1517
    %v1582 = vmul.f32 %v1541, %v1517
    %v1583 = vmul.f32 %v1546, %v1517
    %v1584 = vmul.f32 %v1551, %v1517
    %v1585 = vmul.f32 %v1556, %v1517
    %v1586 = vmul.f32 %v1561, %v1517
    %v1587 = vmul.f32 %v1566, %v1517
    %v1588 = vmul.f32 %v1571, %v1517
    %v1589 = vmul.f32 %v1576, %v1517
    %v1590 = vadd.f32 %v1491, %v1578
    %v1591 = vadd.f32 %v1492, %v1579
    %v1592 = vadd.f32 %v1493, %v1580
    %v1593 = vadd.f32 %v1494, %v1581
    %v1594 = vadd.f32 %v1495, %v1582
    %v1595 = vadd.f32 %v1496, %v1583
    %v1596 = vadd.f32 %v1497, %v1584
    %v1597 = vadd.f32 %v1498, %v1585
    %v1598 = vadd.f32 %v1499, %v1586
    %v1599 = vadd.f32 %v1500, %v1587
    %v1600 = vadd.f32 %v1501, %v1588
    %v1601 = vadd.f32 %v1502, %v1589
    %s1602 = scalar_lea.vmem %s1, 152
    %v1603 = vld [vmem:[%s1602] sm:$0x3f]
    %1604 = vset.pattern.permute.xlu0 1
    %1605 = vperm.xlu0 %1604, %v1504
    %v1606 = vpop.permute.xlu0 %1605
    %1608 = vset.pattern.permute.xlu0 1
    %1609 = vperm.xlu0 %1608, %v1505
    %v1610 = vpop.permute.xlu0 %1609
    %1612 = vset.pattern.permute.xlu0 1
    %1613 = vperm.xlu0 %1612, %v1506
    %v1614 = vpop.permute.xlu0 %1613
    %1616 = vset.pattern.permute.xlu0 1
    %1617 = vperm.xlu0 %1616, %v1507
    %v1618 = vpop.permute.xlu0 %1617
    %1620 = vset.pattern.permute.xlu0 1
    %1621 = vperm.xlu0 %1620, %v1508
    %v1622 = vpop.permute.xlu0 %1621
    %1624 = vset.pattern.permute.xlu0 1
    %1625 = vperm.xlu0 %1624, %v1509
    %v1626 = vpop.permute.xlu0 %1625
    %1628 = vset.pattern.permute.xlu0 1
    %1629 = vperm.xlu0 %1628, %v1510
    %v1630 = vpop.permute.xlu0 %1629
    %1632 = vset.pattern.permute.xlu0 1
    %1633 = vperm.xlu0 %1632, %v1511
    %v1634 = vpop.permute.xlu0 %1633
    %1636 = vset.pattern.permute.xlu0 1
    %1637 = vperm.xlu0 %1636, %v1512
    %v1638 = vpop.permute.xlu0 %1637
    %1640 = vset.pattern.permute.xlu0 1
    %1641 = vperm.xlu0 %1640, %v1513
    %v1642 = vpop.permute.xlu0 %1641
    %1644 = vset.pattern.permute.xlu0 1
    %1645 = vperm.xlu0 %1644, %v1514
    %v1646 = vpop.permute.xlu0 %1645
    %1648 = vset.pattern.permute.xlu0 1
    %1649 = vperm.xlu0 %1648, %v1515
    %v1650 = vpop.permute.xlu0 %1649
    %v1652 = vmul.f32 %v1606, %v1603
    %v1653 = vmul.f32 %v1610, %v1603
    %v1654 = vmul.f32 %v1614, %v1603
    %v1655 = vmul.f32 %v1618, %v1603
    %v1656 = vmul.f32 %v1622, %v1603
    %v1657 = vmul.f32 %v1626, %v1603
    %v1658 = vmul.f32 %v1630, %v1603
    %v1659 = vmul.f32 %v1634, %v1603
    %v1660 = vmul.f32 %v1638, %v1603
    %v1661 = vmul.f32 %v1642, %v1603
    %v1662 = vmul.f32 %v1646, %v1603
    %v1663 = vmul.f32 %v1650, %v1603
    %v1664 = vadd.f32 %v1590, %v1652
    %v1665 = vadd.f32 %v1591, %v1653
    %v1666 = vadd.f32 %v1592, %v1654
    %v1667 = vadd.f32 %v1593, %v1655
    %v1668 = vadd.f32 %v1594, %v1656
    %v1669 = vadd.f32 %v1595, %v1657
    %v1670 = vadd.f32 %v1596, %v1658
    %v1671 = vadd.f32 %v1597, %v1659
    %v1672 = vadd.f32 %v1598, %v1660
    %v1673 = vadd.f32 %v1599, %v1661
    %v1674 = vadd.f32 %v1600, %v1662
    %v1675 = vadd.f32 %v1601, %v1663
    %s1676 = scalar_lea.vmem %s1, 160
    %v1677 = vld [vmem:[%s1676] sm:$0x3f]
    %1678 = vset.pattern.permute.xlu0 2
    %1679 = vperm.xlu0 %1678, %v1504
    %v1680 = vpop.permute.xlu0 %1679
    %1682 = vset.pattern.permute.xlu0 2
    %1683 = vperm.xlu0 %1682, %v1505
    %v1684 = vpop.permute.xlu0 %1683
    %1686 = vset.pattern.permute.xlu0 2
    %1687 = vperm.xlu0 %1686, %v1506
    %v1688 = vpop.permute.xlu0 %1687
    %1690 = vset.pattern.permute.xlu0 2
    %1691 = vperm.xlu0 %1690, %v1507
    %v1692 = vpop.permute.xlu0 %1691
    %1694 = vset.pattern.permute.xlu0 2
    %1695 = vperm.xlu0 %1694, %v1508
    %v1696 = vpop.permute.xlu0 %1695
    %1698 = vset.pattern.permute.xlu0 2
    %1699 = vperm.xlu0 %1698, %v1509
    %v1700 = vpop.permute.xlu0 %1699
    %1702 = vset.pattern.permute.xlu0 2
    %1703 = vperm.xlu0 %1702, %v1510
    %v1704 = vpop.permute.xlu0 %1703
    %1706 = vset.pattern.permute.xlu0 2
    %1707 = vperm.xlu0 %1706, %v1511
    %v1708 = vpop.permute.xlu0 %1707
    %1710 = vset.pattern.permute.xlu0 2
    %1711 = vperm.xlu0 %1710, %v1512
    %v1712 = vpop.permute.xlu0 %1711
    %1714 = vset.pattern.permute.xlu0 2
    %1715 = vperm.xlu0 %1714, %v1513
    %v1716 = vpop.permute.xlu0 %1715
    %1718 = vset.pattern.permute.xlu0 2
    %1719 = vperm.xlu0 %1718, %v1514
    %v1720 = vpop.permute.xlu0 %1719
    %1722 = vset.pattern.permute.xlu0 2
    %1723 = vperm.xlu0 %1722, %v1515
    %v1724 = vpop.permute.xlu0 %1723
    %v1726 = vmul.f32 %v1680, %v1677
    %v1727 = vmul.f32 %v1684, %v1677
    %v1728 = vmul.f32 %v1688, %v1677
    %v1729 = vmul.f32 %v1692, %v1677
    %v1730 = vmul.f32 %v1696, %v1677
    %v1731 = vmul.f32 %v1700, %v1677
    %v1732 = vmul.f32 %v1704, %v1677
    %v1733 = vmul.f32 %v1708, %v1677
    %v1734 = vmul.f32 %v1712, %v1677
    %v1735 = vmul.f32 %v1716, %v1677
    %v1736 = vmul.f32 %v1720, %v1677
    %v1737 = vmul.f32 %v1724, %v1677
    %v1738 = vadd.f32 %v1664, %v1726
    %v1739 = vadd.f32 %v1665, %v1727
    %v1740 = vadd.f32 %v1666, %v1728
    %v1741 = vadd.f32 %v1667, %v1729
    %v1742 = vadd.f32 %v1668, %v1730
    %v1743 = vadd.f32 %v1669, %v1731
    %v1744 = vadd.f32 %v1670, %v1732
    %v1745 = vadd.f32 %v1671, %v1733
    %v1746 = vadd.f32 %v1672, %v1734
    %v1747 = vadd.f32 %v1673, %v1735
    %v1748 = vadd.f32 %v1674, %v1736
    %v1749 = vadd.f32 %v1675, %v1737
    %v1750 = vld [vmem:[%s1503 + $0x1] sm:$0x3f]
    %v1751 = vld [vmem:[%s1503 + $0x9] sm:$0x3f]
    %v1752 = vld [vmem:[%s1503 + $0x11] sm:$0x3f]
    %v1753 = vld [vmem:[%s1503 + $0x19] sm:$0x3f]
    %v1754 = vld [vmem:[%s1503 + $0x21] sm:$0x3f]
    %v1755 = vld [vmem:[%s1503 + $0x29] sm:$0x3f]
    %v1756 = vld [vmem:[%s1503 + $0x41] sm:$0x3f]
    %v1757 = vld [vmem:[%s1503 + $0x49] sm:$0x3f]
    %v1758 = vld [vmem:[%s1503 + $0x51] sm:$0x3f]
    %v1759 = vld [vmem:[%s1503 + $0x59] sm:$0x3f]
    %v1760 = vld [vmem:[%s1503 + $0x61] sm:$0x3f]
    %v1761 = vld [vmem:[%s1503 + $0x69] sm:$0x3f]
    %s1762 = scalar_lea.vmem %s1, 168
    %v1763 = vld [vmem:[%s1762] sm:$0x3f]
    %1765 = vset.pattern.permute.xlu0 0
    %1766 = vperm.xlu0 %1765, %v1750
    %v1767 = vpop.permute.xlu0 %1766
    %1770 = vset.pattern.permute.xlu0 0
    %1771 = vperm.xlu0 %1770, %v1751
    %v1772 = vpop.permute.xlu0 %1771
    %1775 = vset.pattern.permute.xlu0 0
    %1776 = vperm.xlu0 %1775, %v1752
    %v1777 = vpop.permute.xlu0 %1776
    %1780 = vset.pattern.permute.xlu0 0
    %1781 = vperm.xlu0 %1780, %v1753
    %v1782 = vpop.permute.xlu0 %1781
    %1785 = vset.pattern.permute.xlu0 0
    %1786 = vperm.xlu0 %1785, %v1754
    %v1787 = vpop.permute.xlu0 %1786
    %1790 = vset.pattern.permute.xlu0 0
    %1791 = vperm.xlu0 %1790, %v1755
    %v1792 = vpop.permute.xlu0 %1791
    %1795 = vset.pattern.permute.xlu0 0
    %1796 = vperm.xlu0 %1795, %v1756
    %v1797 = vpop.permute.xlu0 %1796
    %1800 = vset.pattern.permute.xlu0 0
    %1801 = vperm.xlu0 %1800, %v1757
    %v1802 = vpop.permute.xlu0 %1801
    %1805 = vset.pattern.permute.xlu0 0
    %1806 = vperm.xlu0 %1805, %v1758
    %v1807 = vpop.permute.xlu0 %1806
    %1810 = vset.pattern.permute.xlu0 0
    %1811 = vperm.xlu0 %1810, %v1759
    %v1812 = vpop.permute.xlu0 %1811
    %1815 = vset.pattern.permute.xlu0 0
    %1816 = vperm.xlu0 %1815, %v1760
    %v1817 = vpop.permute.xlu0 %1816
    %1820 = vset.pattern.permute.xlu0 0
    %1821 = vperm.xlu0 %1820, %v1761
    %v1822 = vpop.permute.xlu0 %1821
    %v1824 = vmul.f32 %v1767, %v1763
    %v1825 = vmul.f32 %v1772, %v1763
    %v1826 = vmul.f32 %v1777, %v1763
    %v1827 = vmul.f32 %v1782, %v1763
    %v1828 = vmul.f32 %v1787, %v1763
    %v1829 = vmul.f32 %v1792, %v1763
    %v1830 = vmul.f32 %v1797, %v1763
    %v1831 = vmul.f32 %v1802, %v1763
    %v1832 = vmul.f32 %v1807, %v1763
    %v1833 = vmul.f32 %v1812, %v1763
    %v1834 = vmul.f32 %v1817, %v1763
    %v1835 = vmul.f32 %v1822, %v1763
    %v1836 = vadd.f32 %v1738, %v1824
    %v1837 = vadd.f32 %v1739, %v1825
    %v1838 = vadd.f32 %v1740, %v1826
    %v1839 = vadd.f32 %v1741, %v1827
    %v1840 = vadd.f32 %v1742, %v1828
    %v1841 = vadd.f32 %v1743, %v1829
    %v1842 = vadd.f32 %v1744, %v1830
    %v1843 = vadd.f32 %v1745, %v1831
    %v1844 = vadd.f32 %v1746, %v1832
    %v1845 = vadd.f32 %v1747, %v1833
    %v1846 = vadd.f32 %v1748, %v1834
    %v1847 = vadd.f32 %v1749, %v1835
    %s1848 = scalar_lea.vmem %s1, 176
    %v1849 = vld [vmem:[%s1848] sm:$0x3f]
    %1850 = vset.pattern.permute.xlu0 1
    %1851 = vperm.xlu0 %1850, %v1750
    %v1852 = vpop.permute.xlu0 %1851
    %1854 = vset.pattern.permute.xlu0 1
    %1855 = vperm.xlu0 %1854, %v1751
    %v1856 = vpop.permute.xlu0 %1855
    %1858 = vset.pattern.permute.xlu0 1
    %1859 = vperm.xlu0 %1858, %v1752
    %v1860 = vpop.permute.xlu0 %1859
    %1862 = vset.pattern.permute.xlu0 1
    %1863 = vperm.xlu0 %1862, %v1753
    %v1864 = vpop.permute.xlu0 %1863
    %1866 = vset.pattern.permute.xlu0 1
    %1867 = vperm.xlu0 %1866, %v1754
    %v1868 = vpop.permute.xlu0 %1867
    %1870 = vset.pattern.permute.xlu0 1
    %1871 = vperm.xlu0 %1870, %v1755
    %v1872 = vpop.permute.xlu0 %1871
    %1874 = vset.pattern.permute.xlu0 1
    %1875 = vperm.xlu0 %1874, %v1756
    %v1876 = vpop.permute.xlu0 %1875
    %1878 = vset.pattern.permute.xlu0 1
    %1879 = vperm.xlu0 %1878, %v1757
    %v1880 = vpop.permute.xlu0 %1879
    %1882 = vset.pattern.permute.xlu0 1
    %1883 = vperm.xlu0 %1882, %v1758
    %v1884 = vpop.permute.xlu0 %1883
    %1886 = vset.pattern.permute.xlu0 1
    %1887 = vperm.xlu0 %1886, %v1759
    %v1888 = vpop.permute.xlu0 %1887
    %1890 = vset.pattern.permute.xlu0 1
    %1891 = vperm.xlu0 %1890, %v1760
    %v1892 = vpop.permute.xlu0 %1891
    %1894 = vset.pattern.permute.xlu0 1
    %1895 = vperm.xlu0 %1894, %v1761
    %v1896 = vpop.permute.xlu0 %1895
    %v1898 = vmul.f32 %v1852, %v1849
    %v1899 = vmul.f32 %v1856, %v1849
    %v1900 = vmul.f32 %v1860, %v1849
    %v1901 = vmul.f32 %v1864, %v1849
    %v1902 = vmul.f32 %v1868, %v1849
    %v1903 = vmul.f32 %v1872, %v1849
    %v1904 = vmul.f32 %v1876, %v1849
    %v1905 = vmul.f32 %v1880, %v1849
    %v1906 = vmul.f32 %v1884, %v1849
    %v1907 = vmul.f32 %v1888, %v1849
    %v1908 = vmul.f32 %v1892, %v1849
    %v1909 = vmul.f32 %v1896, %v1849
    %v1910 = vadd.f32 %v1836, %v1898
    %v1911 = vadd.f32 %v1837, %v1899
    %v1912 = vadd.f32 %v1838, %v1900
    %v1913 = vadd.f32 %v1839, %v1901
    %v1914 = vadd.f32 %v1840, %v1902
    %v1915 = vadd.f32 %v1841, %v1903
    %v1916 = vadd.f32 %v1842, %v1904
    %v1917 = vadd.f32 %v1843, %v1905
    %v1918 = vadd.f32 %v1844, %v1906
    %v1919 = vadd.f32 %v1845, %v1907
    %v1920 = vadd.f32 %v1846, %v1908
    %v1921 = vadd.f32 %v1847, %v1909
    %s1922 = scalar_lea.vmem %s1, 184
    %v1923 = vld [vmem:[%s1922] sm:$0x3f]
    %1924 = vset.pattern.permute.xlu0 2
    %1925 = vperm.xlu0 %1924, %v1750
    %v1926 = vpop.permute.xlu0 %1925
    %1928 = vset.pattern.permute.xlu0 2
    %1929 = vperm.xlu0 %1928, %v1751
    %v1930 = vpop.permute.xlu0 %1929
    %1932 = vset.pattern.permute.xlu0 2
    %1933 = vperm.xlu0 %1932, %v1752
    %v1934 = vpop.permute.xlu0 %1933
    %1936 = vset.pattern.permute.xlu0 2
    %1937 = vperm.xlu0 %1936, %v1753
    %v1938 = vpop.permute.xlu0 %1937
    %1940 = vset.pattern.permute.xlu0 2
    %1941 = vperm.xlu0 %1940, %v1754
    %v1942 = vpop.permute.xlu0 %1941
    %1944 = vset.pattern.permute.xlu0 2
    %1945 = vperm.xlu0 %1944, %v1755
    %v1946 = vpop.permute.xlu0 %1945
    %1948 = vset.pattern.permute.xlu0 2
    %1949 = vperm.xlu0 %1948, %v1756
    %v1950 = vpop.permute.xlu0 %1949
    %1952 = vset.pattern.permute.xlu0 2
    %1953 = vperm.xlu0 %1952, %v1757
    %v1954 = vpop.permute.xlu0 %1953
    %1956 = vset.pattern.permute.xlu0 2
    %1957 = vperm.xlu0 %1956, %v1758
    %v1958 = vpop.permute.xlu0 %1957
    %1960 = vset.pattern.permute.xlu0 2
    %1961 = vperm.xlu0 %1960, %v1759
    %v1962 = vpop.permute.xlu0 %1961
    %1964 = vset.pattern.permute.xlu0 2
    %1965 = vperm.xlu0 %1964, %v1760
    %v1966 = vpop.permute.xlu0 %1965
    %1968 = vset.pattern.permute.xlu0 2
    %1969 = vperm.xlu0 %1968, %v1761
    %v1970 = vpop.permute.xlu0 %1969
    %v1972 = vmul.f32 %v1926, %v1923
    %v1973 = vmul.f32 %v1930, %v1923
    %v1974 = vmul.f32 %v1934, %v1923
    %v1975 = vmul.f32 %v1938, %v1923
    %v1976 = vmul.f32 %v1942, %v1923
    %v1977 = vmul.f32 %v1946, %v1923
    %v1978 = vmul.f32 %v1950, %v1923
    %v1979 = vmul.f32 %v1954, %v1923
    %v1980 = vmul.f32 %v1958, %v1923
    %v1981 = vmul.f32 %v1962, %v1923
    %v1982 = vmul.f32 %v1966, %v1923
    %v1983 = vmul.f32 %v1970, %v1923
    %v1984 = vadd.f32 %v1910, %v1972
    %v1985 = vadd.f32 %v1911, %v1973
    %v1986 = vadd.f32 %v1912, %v1974
    %v1987 = vadd.f32 %v1913, %v1975
    %v1988 = vadd.f32 %v1914, %v1976
    %v1989 = vadd.f32 %v1915, %v1977
    %v1990 = vadd.f32 %v1916, %v1978
    %v1991 = vadd.f32 %v1917, %v1979
    %v1992 = vadd.f32 %v1918, %v1980
    %v1993 = vadd.f32 %v1919, %v1981
    %v1994 = vadd.f32 %v1920, %v1982
    %v1995 = vadd.f32 %v1921, %v1983
    %v1996 = vld [vmem:[%s1503 + $0x2] sm:$0x3f]
    %v1997 = vld [vmem:[%s1503 + $0xa] sm:$0x3f]
    %v1998 = vld [vmem:[%s1503 + $0x12] sm:$0x3f]
    %v1999 = vld [vmem:[%s1503 + $0x1a] sm:$0x3f]
    %v2000 = vld [vmem:[%s1503 + $0x22] sm:$0x3f]
    %v2001 = vld [vmem:[%s1503 + $0x2a] sm:$0x3f]
    %v2002 = vld [vmem:[%s1503 + $0x42] sm:$0x3f]
    %v2003 = vld [vmem:[%s1503 + $0x4a] sm:$0x3f]
    %v2004 = vld [vmem:[%s1503 + $0x52] sm:$0x3f]
    %v2005 = vld [vmem:[%s1503 + $0x5a] sm:$0x3f]
    %v2006 = vld [vmem:[%s1503 + $0x62] sm:$0x3f]
    %v2007 = vld [vmem:[%s1503 + $0x6a] sm:$0x3f]
    %s2008 = scalar_lea.vmem %s1, 192
    %v2009 = vld [vmem:[%s2008] sm:$0x3f]
    %2011 = vset.pattern.permute.xlu0 0
    %2012 = vperm.xlu0 %2011, %v1996
    %v2013 = vpop.permute.xlu0 %2012
    %2016 = vset.pattern.permute.xlu0 0
    %2017 = vperm.xlu0 %2016, %v1997
    %v2018 = vpop.permute.xlu0 %2017
    %2021 = vset.pattern.permute.xlu0 0
    %2022 = vperm.xlu0 %2021, %v1998
    %v2023 = vpop.permute.xlu0 %2022
    %2026 = vset.pattern.permute.xlu0 0
    %2027 = vperm.xlu0 %2026, %v1999
    %v2028 = vpop.permute.xlu0 %2027
    %2031 = vset.pattern.permute.xlu0 0
    %2032 = vperm.xlu0 %2031, %v2000
    %v2033 = vpop.permute.xlu0 %2032
    %2036 = vset.pattern.permute.xlu0 0
    %2037 = vperm.xlu0 %2036, %v2001
    %v2038 = vpop.permute.xlu0 %2037
    %2041 = vset.pattern.permute.xlu0 0
    %2042 = vperm.xlu0 %2041, %v2002
    %v2043 = vpop.permute.xlu0 %2042
    %2046 = vset.pattern.permute.xlu0 0
    %2047 = vperm.xlu0 %2046, %v2003
    %v2048 = vpop.permute.xlu0 %2047
    %2051 = vset.pattern.permute.xlu0 0
    %2052 = vperm.xlu0 %2051, %v2004
    %v2053 = vpop.permute.xlu0 %2052
    %2056 = vset.pattern.permute.xlu0 0
    %2057 = vperm.xlu0 %2056, %v2005
    %v2058 = vpop.permute.xlu0 %2057
    %2061 = vset.pattern.permute.xlu0 0
    %2062 = vperm.xlu0 %2061, %v2006
    %v2063 = vpop.permute.xlu0 %2062
    %2066 = vset.pattern.permute.xlu0 0
    %2067 = vperm.xlu0 %2066, %v2007
    %v2068 = vpop.permute.xlu0 %2067
    %v2070 = vmul.f32 %v2013, %v2009
    %v2071 = vmul.f32 %v2018, %v2009
    %v2072 = vmul.f32 %v2023, %v2009
    %v2073 = vmul.f32 %v2028, %v2009
    %v2074 = vmul.f32 %v2033, %v2009
    %v2075 = vmul.f32 %v2038, %v2009
    %v2076 = vmul.f32 %v2043, %v2009
    %v2077 = vmul.f32 %v2048, %v2009
    %v2078 = vmul.f32 %v2053, %v2009
    %v2079 = vmul.f32 %v2058, %v2009
    %v2080 = vmul.f32 %v2063, %v2009
    %v2081 = vmul.f32 %v2068, %v2009
    %v2082 = vadd.f32 %v1984, %v2070
    %v2083 = vadd.f32 %v1985, %v2071
    %v2084 = vadd.f32 %v1986, %v2072
    %v2085 = vadd.f32 %v1987, %v2073
    %v2086 = vadd.f32 %v1988, %v2074
    %v2087 = vadd.f32 %v1989, %v2075
    %v2088 = vadd.f32 %v1990, %v2076
    %v2089 = vadd.f32 %v1991, %v2077
    %v2090 = vadd.f32 %v1992, %v2078
    %v2091 = vadd.f32 %v1993, %v2079
    %v2092 = vadd.f32 %v1994, %v2080
    %v2093 = vadd.f32 %v1995, %v2081
    %s2094 = scalar_lea.vmem %s1, 200
    %v2095 = vld [vmem:[%s2094] sm:$0x3f]
    %2096 = vset.pattern.permute.xlu0 1
    %2097 = vperm.xlu0 %2096, %v1996
    %v2098 = vpop.permute.xlu0 %2097
    %2100 = vset.pattern.permute.xlu0 1
    %2101 = vperm.xlu0 %2100, %v1997
    %v2102 = vpop.permute.xlu0 %2101
    %2104 = vset.pattern.permute.xlu0 1
    %2105 = vperm.xlu0 %2104, %v1998
    %v2106 = vpop.permute.xlu0 %2105
    %2108 = vset.pattern.permute.xlu0 1
    %2109 = vperm.xlu0 %2108, %v1999
    %v2110 = vpop.permute.xlu0 %2109
    %2112 = vset.pattern.permute.xlu0 1
    %2113 = vperm.xlu0 %2112, %v2000
    %v2114 = vpop.permute.xlu0 %2113
    %2116 = vset.pattern.permute.xlu0 1
    %2117 = vperm.xlu0 %2116, %v2001
    %v2118 = vpop.permute.xlu0 %2117
    %2120 = vset.pattern.permute.xlu0 1
    %2121 = vperm.xlu0 %2120, %v2002
    %v2122 = vpop.permute.xlu0 %2121
    %2124 = vset.pattern.permute.xlu0 1
    %2125 = vperm.xlu0 %2124, %v2003
    %v2126 = vpop.permute.xlu0 %2125
    %2128 = vset.pattern.permute.xlu0 1
    %2129 = vperm.xlu0 %2128, %v2004
    %v2130 = vpop.permute.xlu0 %2129
    %2132 = vset.pattern.permute.xlu0 1
    %2133 = vperm.xlu0 %2132, %v2005
    %v2134 = vpop.permute.xlu0 %2133
    %2136 = vset.pattern.permute.xlu0 1
    %2137 = vperm.xlu0 %2136, %v2006
    %v2138 = vpop.permute.xlu0 %2137
    %2140 = vset.pattern.permute.xlu0 1
    %2141 = vperm.xlu0 %2140, %v2007
    %v2142 = vpop.permute.xlu0 %2141
    %v2144 = vmul.f32 %v2098, %v2095
    %v2145 = vmul.f32 %v2102, %v2095
    %v2146 = vmul.f32 %v2106, %v2095
    %v2147 = vmul.f32 %v2110, %v2095
    %v2148 = vmul.f32 %v2114, %v2095
    %v2149 = vmul.f32 %v2118, %v2095
    %v2150 = vmul.f32 %v2122, %v2095
    %v2151 = vmul.f32 %v2126, %v2095
    %v2152 = vmul.f32 %v2130, %v2095
    %v2153 = vmul.f32 %v2134, %v2095
    %v2154 = vmul.f32 %v2138, %v2095
    %v2155 = vmul.f32 %v2142, %v2095
    %v2156 = vadd.f32 %v2082, %v2144
    %v2157 = vadd.f32 %v2083, %v2145
    %v2158 = vadd.f32 %v2084, %v2146
    %v2159 = vadd.f32 %v2085, %v2147
    %v2160 = vadd.f32 %v2086, %v2148
    %v2161 = vadd.f32 %v2087, %v2149
    %v2162 = vadd.f32 %v2088, %v2150
    %v2163 = vadd.f32 %v2089, %v2151
    %v2164 = vadd.f32 %v2090, %v2152
    %v2165 = vadd.f32 %v2091, %v2153
    %v2166 = vadd.f32 %v2092, %v2154
    %v2167 = vadd.f32 %v2093, %v2155
    %s2168 = scalar_lea.vmem %s1, 208
    %v2169 = vld [vmem:[%s2168] sm:$0x3f]
    %2170 = vset.pattern.permute.xlu0 2
    %2171 = vperm.xlu0 %2170, %v1996
    %v2172 = vpop.permute.xlu0 %2171
    %2174 = vset.pattern.permute.xlu0 2
    %2175 = vperm.xlu0 %2174, %v1997
    %v2176 = vpop.permute.xlu0 %2175
    %2178 = vset.pattern.permute.xlu0 2
    %2179 = vperm.xlu0 %2178, %v1998
    %v2180 = vpop.permute.xlu0 %2179
    %2182 = vset.pattern.permute.xlu0 2
    %2183 = vperm.xlu0 %2182, %v1999
    %v2184 = vpop.permute.xlu0 %2183
    %2186 = vset.pattern.permute.xlu0 2
    %2187 = vperm.xlu0 %2186, %v2000
    %v2188 = vpop.permute.xlu0 %2187
    %2190 = vset.pattern.permute.xlu0 2
    %2191 = vperm.xlu0 %2190, %v2001
    %v2192 = vpop.permute.xlu0 %2191
    %2194 = vset.pattern.permute.xlu0 2
    %2195 = vperm.xlu0 %2194, %v2002
    %v2196 = vpop.permute.xlu0 %2195
    %2198 = vset.pattern.permute.xlu0 2
    %2199 = vperm.xlu0 %2198, %v2003
    %v2200 = vpop.permute.xlu0 %2199
    %2202 = vset.pattern.permute.xlu0 2
    %2203 = vperm.xlu0 %2202, %v2004
    %v2204 = vpop.permute.xlu0 %2203
    %2206 = vset.pattern.permute.xlu0 2
    %2207 = vperm.xlu0 %2206, %v2005
    %v2208 = vpop.permute.xlu0 %2207
    %2210 = vset.pattern.permute.xlu0 2
    %2211 = vperm.xlu0 %2210, %v2006
    %v2212 = vpop.permute.xlu0 %2211
    %2214 = vset.pattern.permute.xlu0 2
    %2215 = vperm.xlu0 %2214, %v2007
    %v2216 = vpop.permute.xlu0 %2215
    %v2218 = vmul.f32 %v2172, %v2169
    %v2219 = vmul.f32 %v2176, %v2169
    %v2220 = vmul.f32 %v2180, %v2169
    %v2221 = vmul.f32 %v2184, %v2169
    %v2222 = vmul.f32 %v2188, %v2169
    %v2223 = vmul.f32 %v2192, %v2169
    %v2224 = vmul.f32 %v2196, %v2169
    %v2225 = vmul.f32 %v2200, %v2169
    %v2226 = vmul.f32 %v2204, %v2169
    %v2227 = vmul.f32 %v2208, %v2169
    %v2228 = vmul.f32 %v2212, %v2169
    %v2229 = vmul.f32 %v2216, %v2169
    %v2230 = vadd.f32 %v2156, %v2218
    %v2231 = vadd.f32 %v2157, %v2219
    %v2232 = vadd.f32 %v2158, %v2220
    %v2233 = vadd.f32 %v2159, %v2221
    %v2234 = vadd.f32 %v2160, %v2222
    %v2235 = vadd.f32 %v2161, %v2223
    %v2236 = vadd.f32 %v2162, %v2224
    %v2237 = vadd.f32 %v2163, %v2225
    %v2238 = vadd.f32 %v2164, %v2226
    %v2239 = vadd.f32 %v2165, %v2227
    %v2240 = vadd.f32 %v2166, %v2228
    %v2241 = vadd.f32 %v2167, %v2229
    %v2242 = vld [vmem:[%s2] sm:$0x1]
    %v2243 = vld [vmem:[%s4] sm:$0x1]
    %v2245 = vlaneseq
    %v2246 = vshrl.u32 %v2245, 7
    %v2247 = vsub.s32 0, %v2246
    %v2248 = vrot.slane %v2243, %v2247
    %v2250 = vadd.f32 %v2248, 0.0
    %v2253 = vrot.slane %v2230, 1
    %v2254 = vrot.slane %v2236, 1
    %v2257 = vmax.f32 %v2230, %v2253
    %v2258 = vmax.f32 %v2236, %v2254
    %v2261 = vrot.slane %v2231, 1
    %v2262 = vrot.slane %v2237, 1
    %v2265 = vmax.f32 %v2231, %v2261
    %v2266 = vmax.f32 %v2237, %v2262
    %v2267 = vmax.f32 %v2257, %v2265
    %v2268 = vmax.f32 %v2258, %v2266
    %v2270 = vlaneseq
    %v2271 = vshrl.u32 %v2270, 7
    %v2272 = vsub.s32 0, %v2271
    %v2273 = vrot.slane %v2242, %v2272
    %v2275 = vadd.f32 %v2267, %v2273
    %v2276 = vadd.f32 %v2268, %v2273
    %v2277 = vmax.f32 %v2275, 0.0
    %v2278 = vmax.f32 %v2276, 0.0
    %v2279 = vld [vmem:[%s3] sm:$0xff]
    %v2280 = vld [vmem:[%s3 + $0x8] sm:$0xff]
    %v2281 = vld [vmem:[%s3 + $0x10] sm:$0xff]
    %v2282 = vld [vmem:[%s3 + $0x18] sm:$0xff]
    %v2285 = vrot.slane %v2278, 7
    %vm2286 = vcmask 1041409
    %v2287 = vsel %vm2286, %v2285, %v2277
    %vm2288 = vcmask 261120
    %v2289 = vsel %vm2288, %v2287, 0
    %2291 = vmatprep.subr.mxu0 0.0
    %2292 = vmatpush1.msra.mxu0 0.0
    %2293 = vmatprep.subr.mxu0 0.0
    %2294 = vmatpush1.msra.mxu0 0.0
    %2295 = vmatprep.subr.mxu0 0.0
    %2296 = vmatpush1.msra.mxu0 0.0
    %2297 = vmatprep.subr.mxu0 0.0
    %2298 = vmatpush1.msra.mxu0 0.0
    %2299 = vmatprep.subr.mxu0 0.0
    %2300 = vmatpush1.msra.mxu0 0.0
    %2301 = vmatprep.subr.mxu0 0.0
    %2302 = vmatpush1.msra.mxu0 0.0
    %2303 = vmatprep.subr.mxu0 0.0
    %2304 = vmatpush1.msra.mxu0 0.0
    %2305 = vmatprep.subr.mxu0 0.0
    %2306 = vmatpush1.msra.mxu0 0.0
    %2307 = vmatprep.subr.mxu0 0.0
    %2308 = vmatpush1.msra.mxu0 0.0
    %2309 = vmatprep.subr.mxu0 0.0
    %2310 = vmatpush1.msra.mxu0 0.0
    %2311 = vmatprep.subr.mxu0 0.0
    %2312 = vmatpush1.msra.mxu0 0.0
    %2313 = vmatprep.subr.mxu0 0.0
    %2314 = vmatpush1.msra.mxu0 0.0
    %2315 = vmatprep.subr.mxu0 0.0
    %2316 = vmatpush1.msra.mxu0 %v2282
    %2317 = vmatprep.subr.mxu0 0.0
    %2318 = vmatpush1.msra.mxu0 %v2281
    %2319 = vmatprep.subr.mxu0 0.0
    %2320 = vmatpush1.msra.mxu0 %v2280
    %2321 = vmatprep.subr.mxu0 0.0
    %2322 = vmatpush1.msra.mxu0 %v2279
    %2323 = vmatprep.subr.mxu0 0.0
    %2324 = vmatpush2.msra.mxu0 0.0
    %2325 = vmatprep.subr.mxu0 0.0
    %2326 = vmatpush2.msra.mxu0 0.0
    %2327 = vmatprep.subr.mxu0 0.0
    %2328 = vmatpush2.msra.mxu0 0.0
    %2329 = vmatprep.subr.mxu0 0.0
    %2330 = vmatpush2.msra.mxu0 0.0
    %2331 = vmatprep.subr.mxu0 0.0
    %2332 = vmatpush2.msra.mxu0 0.0
    %2333 = vmatprep.subr.mxu0 0.0
    %2334 = vmatpush2.msra.mxu0 0.0
    %2335 = vmatprep.subr.mxu0 0.0
    %2336 = vmatpush2.msra.mxu0 0.0
    %2337 = vmatprep.subr.mxu0 0.0
    %2338 = vmatpush2.msra.mxu0 0.0
    %2339 = vmatprep.subr.mxu0 0.0
    %2340 = vmatpush2.msra.mxu0 0.0
    %2341 = vmatprep.subr.mxu0 0.0
    %2342 = vmatpush2.msra.mxu0 0.0
    %2343 = vmatprep.subr.mxu0 0.0
    %2344 = vmatpush2.msra.mxu0 0.0
    %2345 = vmatprep.subr.mxu0 0.0
    %2346 = vmatpush2.msra.mxu0 0.0
    %2347 = vmatprep.subr.mxu0 0.0
    %2348 = vmatpush2.msra.mxu0 0.0
    %2349 = vmatprep.subr.mxu0 0.0
    %2350 = vmatpush2.msra.mxu0 0.0
    %2351 = vmatprep.subr.mxu0 0.0
    %2352 = vmatpush2.msra.mxu0 0.0
    %2353 = vmatprep.subr.mxu0 0.0
    %2354 = vmatpush2.msra.mxu0 0.0
    %2355 = vmatprep.mubr.f32.mxu0 0.0
    %2356 = vmatmul.mubr.f32.gmra.mxu0 %v2289
    %v2357 = vpop.f32.mrf.mxu0
    %v2358 = vadd.f32 0.0, %v2357
    %v2359 = vpop.f32.mrf.mxu0
    %2360 = vdwg.mxu0
    %v2361 = vadd.f32 %v2250, %v2358
    %s2362 = scalar_lea.vmem %s3, 32
    %v2363 = vld [vmem:[%s2362] sm:$0xff]
    %v2364 = vld [vmem:[%s2362 + $0x8] sm:$0xff]
    %v2365 = vld [vmem:[%s2362 + $0x10] sm:$0xff]
    %v2366 = vld [vmem:[%s2362 + $0x18] sm:$0xff]
    %v2367 = vrot.slane %v2277, 2
    %v2368 = vrot.slane %v2278, 1
    %v2369 = vsel %vm2286, %v2368, %v2367
    %v2370 = vsel %vm2288, %v2369, 0
    %2372 = vmatprep.subr.mxu0 0.0
    %2373 = vmatpush1.msra.mxu0 0.0
    %2374 = vmatprep.subr.mxu0 0.0
    %2375 = vmatpush1.msra.mxu0 0.0
    %2376 = vmatprep.subr.mxu0 0.0
    %2377 = vmatpush1.msra.mxu0 0.0
    %2378 = vmatprep.subr.mxu0 0.0
    %2379 = vmatpush1.msra.mxu0 0.0
    %2380 = vmatprep.subr.mxu0 0.0
    %2381 = vmatpush1.msra.mxu0 0.0
    %2382 = vmatprep.subr.mxu0 0.0
    %2383 = vmatpush1.msra.mxu0 0.0
    %2384 = vmatprep.subr.mxu0 0.0
    %2385 = vmatpush1.msra.mxu0 0.0
    %2386 = vmatprep.subr.mxu0 0.0
    %2387 = vmatpush1.msra.mxu0 0.0
    %2388 = vmatprep.subr.mxu0 0.0
    %2389 = vmatpush1.msra.mxu0 0.0
    %2390 = vmatprep.subr.mxu0 0.0
    %2391 = vmatpush1.msra.mxu0 0.0
    %2392 = vmatprep.subr.mxu0 0.0
    %2393 = vmatpush1.msra.mxu0 0.0
    %2394 = vmatprep.subr.mxu0 0.0
    %2395 = vmatpush1.msra.mxu0 0.0
    %2396 = vmatprep.subr.mxu0 0.0
    %2397 = vmatpush1.msra.mxu0 %v2366
    %2398 = vmatprep.subr.mxu0 0.0
    %2399 = vmatpush1.msra.mxu0 %v2365
    %2400 = vmatprep.subr.mxu0 0.0
    %2401 = vmatpush1.msra.mxu0 %v2364
    %2402 = vmatprep.subr.mxu0 0.0
    %2403 = vmatpush1.msra.mxu0 %v2363
    %2404 = vmatprep.subr.mxu0 0.0
    %2405 = vmatpush2.msra.mxu0 0.0
    %2406 = vmatprep.subr.mxu0 0.0
    %2407 = vmatpush2.msra.mxu0 0.0
    %2408 = vmatprep.subr.mxu0 0.0
    %2409 = vmatpush2.msra.mxu0 0.0
    %2410 = vmatprep.subr.mxu0 0.0
    %2411 = vmatpush2.msra.mxu0 0.0
    %2412 = vmatprep.subr.mxu0 0.0
    %2413 = vmatpush2.msra.mxu0 0.0
    %2414 = vmatprep.subr.mxu0 0.0
    %2415 = vmatpush2.msra.mxu0 0.0
    %2416 = vmatprep.subr.mxu0 0.0
    %2417 = vmatpush2.msra.mxu0 0.0
    %2418 = vmatprep.subr.mxu0 0.0
    %2419 = vmatpush2.msra.mxu0 0.0
    %2420 = vmatprep.subr.mxu0 0.0
    %2421 = vmatpush2.msra.mxu0 0.0
    %2422 = vmatprep.subr.mxu0 0.0
    %2423 = vmatpush2.msra.mxu0 0.0
    %2424 = vmatprep.subr.mxu0 0.0
    %2425 = vmatpush2.msra.mxu0 0.0
    %2426 = vmatprep.subr.mxu0 0.0
    %2427 = vmatpush2.msra.mxu0 0.0
    %2428 = vmatprep.subr.mxu0 0.0
    %2429 = vmatpush2.msra.mxu0 0.0
    %2430 = vmatprep.subr.mxu0 0.0
    %2431 = vmatpush2.msra.mxu0 0.0
    %2432 = vmatprep.subr.mxu0 0.0
    %2433 = vmatpush2.msra.mxu0 0.0
    %2434 = vmatprep.subr.mxu0 0.0
    %2435 = vmatpush2.msra.mxu0 0.0
    %2436 = vmatprep.mubr.f32.mxu0 0.0
    %2437 = vmatmul.mubr.f32.gmra.mxu0 %v2370
    %v2438 = vpop.f32.mrf.mxu0
    %v2439 = vadd.f32 0.0, %v2438
    %v2440 = vpop.f32.mrf.mxu0
    %2441 = vdwg.mxu0
    %v2442 = vadd.f32 %v2361, %v2439
    %s2443 = scalar_lea.vmem %s3, 64
    %v2444 = vld [vmem:[%s2443] sm:$0xff]
    %v2445 = vld [vmem:[%s2443 + $0x8] sm:$0xff]
    %v2446 = vld [vmem:[%s2443 + $0x10] sm:$0xff]
    %v2447 = vld [vmem:[%s2443 + $0x18] sm:$0xff]
    %v2448 = vrot.slane %v2277, 4
    %v2449 = vrot.slane %v2278, 3
    %v2450 = vsel %vm2286, %v2449, %v2448
    %v2451 = vsel %vm2288, %v2450, 0
    %2453 = vmatprep.subr.mxu0 0.0
    %2454 = vmatpush1.msra.mxu0 0.0
    %2455 = vmatprep.subr.mxu0 0.0
    %2456 = vmatpush1.msra.mxu0 0.0
    %2457 = vmatprep.subr.mxu0 0.0
    %2458 = vmatpush1.msra.mxu0 0.0
    %2459 = vmatprep.subr.mxu0 0.0
    %2460 = vmatpush1.msra.mxu0 0.0
    %2461 = vmatprep.subr.mxu0 0.0
    %2462 = vmatpush1.msra.mxu0 0.0
    %2463 = vmatprep.subr.mxu0 0.0
    %2464 = vmatpush1.msra.mxu0 0.0
    %2465 = vmatprep.subr.mxu0 0.0
    %2466 = vmatpush1.msra.mxu0 0.0
    %2467 = vmatprep.subr.mxu0 0.0
    %2468 = vmatpush1.msra.mxu0 0.0
    %2469 = vmatprep.subr.mxu0 0.0
    %2470 = vmatpush1.msra.mxu0 0.0
    %2471 = vmatprep.subr.mxu0 0.0
    %2472 = vmatpush1.msra.mxu0 0.0
    %2473 = vmatprep.subr.mxu0 0.0
    %2474 = vmatpush1.msra.mxu0 0.0
    %2475 = vmatprep.subr.mxu0 0.0
    %2476 = vmatpush1.msra.mxu0 0.0
    %2477 = vmatprep.subr.mxu0 0.0
    %2478 = vmatpush1.msra.mxu0 %v2447
    %2479 = vmatprep.subr.mxu0 0.0
    %2480 = vmatpush1.msra.mxu0 %v2446
    %2481 = vmatprep.subr.mxu0 0.0
    %2482 = vmatpush1.msra.mxu0 %v2445
    %2483 = vmatprep.subr.mxu0 0.0
    %2484 = vmatpush1.msra.mxu0 %v2444
    %2485 = vmatprep.subr.mxu0 0.0
    %2486 = vmatpush2.msra.mxu0 0.0
    %2487 = vmatprep.subr.mxu0 0.0
    %2488 = vmatpush2.msra.mxu0 0.0
    %2489 = vmatprep.subr.mxu0 0.0
    %2490 = vmatpush2.msra.mxu0 0.0
    %2491 = vmatprep.subr.mxu0 0.0
    %2492 = vmatpush2.msra.mxu0 0.0
    %2493 = vmatprep.subr.mxu0 0.0
    %2494 = vmatpush2.msra.mxu0 0.0
    %2495 = vmatprep.subr.mxu0 0.0
    %2496 = vmatpush2.msra.mxu0 0.0
    %2497 = vmatprep.subr.mxu0 0.0
    %2498 = vmatpush2.msra.mxu0 0.0
    %2499 = vmatprep.subr.mxu0 0.0
    %2500 = vmatpush2.msra.mxu0 0.0
    %2501 = vmatprep.subr.mxu0 0.0
    %2502 = vmatpush2.msra.mxu0 0.0
    %2503 = vmatprep.subr.mxu0 0.0
    %2504 = vmatpush2.msra.mxu0 0.0
    %2505 = vmatprep.subr.mxu0 0.0
    %2506 = vmatpush2.msra.mxu0 0.0
    %2507 = vmatprep.subr.mxu0 0.0
    %2508 = vmatpush2.msra.mxu0 0.0
    %2509 = vmatprep.subr.mxu0 0.0
    %2510 = vmatpush2.msra.mxu0 0.0
    %2511 = vmatprep.subr.mxu0 0.0
    %2512 = vmatpush2.msra.mxu0 0.0
    %2513 = vmatprep.subr.mxu0 0.0
    %2514 = vmatpush2.msra.mxu0 0.0
    %2515 = vmatprep.subr.mxu0 0.0
    %2516 = vmatpush2.msra.mxu0 0.0
    %2517 = vmatprep.mubr.f32.mxu0 0.0
    %2518 = vmatmul.mubr.f32.gmra.mxu0 %v2451
    %v2519 = vpop.f32.mrf.mxu0
    %v2520 = vadd.f32 0.0, %v2519
    %v2521 = vpop.f32.mrf.mxu0
    %2522 = vdwg.mxu0
    %v2523 = vadd.f32 %v2442, %v2520
    %v2526 = vrot.slane %v2232, 1
    %v2527 = vrot.slane %v2238, 1
    %v2530 = vmax.f32 %v2232, %v2526
    %v2531 = vmax.f32 %v2238, %v2527
    %v2534 = vrot.slane %v2233, 1
    %v2535 = vrot.slane %v2239, 1
    %v2538 = vmax.f32 %v2233, %v2534
    %v2539 = vmax.f32 %v2239, %v2535
    %v2540 = vmax.f32 %v2530, %v2538
    %v2541 = vmax.f32 %v2531, %v2539
    %v2542 = vadd.f32 %v2540, %v2273
    %v2543 = vadd.f32 %v2541, %v2273
    %v2544 = vmax.f32 %v2542, 0.0
    %v2545 = vmax.f32 %v2543, 0.0
    %s2546 = scalar_lea.vmem %s3, 96
    %v2547 = vld [vmem:[%s2546] sm:$0xff]
    %v2548 = vld [vmem:[%s2546 + $0x8] sm:$0xff]
    %v2549 = vld [vmem:[%s2546 + $0x10] sm:$0xff]
    %v2550 = vld [vmem:[%s2546 + $0x18] sm:$0xff]
    %v2553 = vrot.slane %v2545, 7
    %v2554 = vsel %vm2286, %v2553, %v2544
    %v2555 = vsel %vm2288, %v2554, 0
    %2557 = vmatprep.subr.mxu0 0.0
    %2558 = vmatpush1.msra.mxu0 0.0
    %2559 = vmatprep.subr.mxu0 0.0
    %2560 = vmatpush1.msra.mxu0 0.0
    %2561 = vmatprep.subr.mxu0 0.0
    %2562 = vmatpush1.msra.mxu0 0.0
    %2563 = vmatprep.subr.mxu0 0.0
    %2564 = vmatpush1.msra.mxu0 0.0
    %2565 = vmatprep.subr.mxu0 0.0
    %2566 = vmatpush1.msra.mxu0 0.0
    %2567 = vmatprep.subr.mxu0 0.0
    %2568 = vmatpush1.msra.mxu0 0.0
    %2569 = vmatprep.subr.mxu0 0.0
    %2570 = vmatpush1.msra.mxu0 0.0
    %2571 = vmatprep.subr.mxu0 0.0
    %2572 = vmatpush1.msra.mxu0 0.0
    %2573 = vmatprep.subr.mxu0 0.0
    %2574 = vmatpush1.msra.mxu0 0.0
    %2575 = vmatprep.subr.mxu0 0.0
    %2576 = vmatpush1.msra.mxu0 0.0
    %2577 = vmatprep.subr.mxu0 0.0
    %2578 = vmatpush1.msra.mxu0 0.0
    %2579 = vmatprep.subr.mxu0 0.0
    %2580 = vmatpush1.msra.mxu0 0.0
    %2581 = vmatprep.subr.mxu0 0.0
    %2582 = vmatpush1.msra.mxu0 %v2550
    %2583 = vmatprep.subr.mxu0 0.0
    %2584 = vmatpush1.msra.mxu0 %v2549
    %2585 = vmatprep.subr.mxu0 0.0
    %2586 = vmatpush1.msra.mxu0 %v2548
    %2587 = vmatprep.subr.mxu0 0.0
    %2588 = vmatpush1.msra.mxu0 %v2547
    %2589 = vmatprep.subr.mxu0 0.0
    %2590 = vmatpush2.msra.mxu0 0.0
    %2591 = vmatprep.subr.mxu0 0.0
    %2592 = vmatpush2.msra.mxu0 0.0
    %2593 = vmatprep.subr.mxu0 0.0
    %2594 = vmatpush2.msra.mxu0 0.0
    %2595 = vmatprep.subr.mxu0 0.0
    %2596 = vmatpush2.msra.mxu0 0.0
    %2597 = vmatprep.subr.mxu0 0.0
    %2598 = vmatpush2.msra.mxu0 0.0
    %2599 = vmatprep.subr.mxu0 0.0
    %2600 = vmatpush2.msra.mxu0 0.0
    %2601 = vmatprep.subr.mxu0 0.0
    %2602 = vmatpush2.msra.mxu0 0.0
    %2603 = vmatprep.subr.mxu0 0.0
    %2604 = vmatpush2.msra.mxu0 0.0
    %2605 = vmatprep.subr.mxu0 0.0
    %2606 = vmatpush2.msra.mxu0 0.0
    %2607 = vmatprep.subr.mxu0 0.0
    %2608 = vmatpush2.msra.mxu0 0.0
    %2609 = vmatprep.subr.mxu0 0.0
    %2610 = vmatpush2.msra.mxu0 0.0
    %2611 = vmatprep.subr.mxu0 0.0
    %2612 = vmatpush2.msra.mxu0 0.0
    %2613 = vmatprep.subr.mxu0 0.0
    %2614 = vmatpush2.msra.mxu0 0.0
    %2615 = vmatprep.subr.mxu0 0.0
    %2616 = vmatpush2.msra.mxu0 0.0
    %2617 = vmatprep.subr.mxu0 0.0
    %2618 = vmatpush2.msra.mxu0 0.0
    %2619 = vmatprep.subr.mxu0 0.0
    %2620 = vmatpush2.msra.mxu0 0.0
    %2621 = vmatprep.mubr.f32.mxu0 0.0
    %2622 = vmatmul.mubr.f32.gmra.mxu0 %v2555
    %v2623 = vpop.f32.mrf.mxu0
    %v2624 = vadd.f32 0.0, %v2623
    %v2625 = vpop.f32.mrf.mxu0
    %2626 = vdwg.mxu0
    %v2627 = vadd.f32 %v2523, %v2624
    %s2628 = scalar_lea.vmem %s3, 128
    %v2629 = vld [vmem:[%s2628] sm:$0xff]
    %v2630 = vld [vmem:[%s2628 + $0x8] sm:$0xff]
    %v2631 = vld [vmem:[%s2628 + $0x10] sm:$0xff]
    %v2632 = vld [vmem:[%s2628 + $0x18] sm:$0xff]
    %v2633 = vrot.slane %v2544, 2
    %v2634 = vrot.slane %v2545, 1
    %v2635 = vsel %vm2286, %v2634, %v2633
    %v2636 = vsel %vm2288, %v2635, 0
    %2638 = vmatprep.subr.mxu0 0.0
    %2639 = vmatpush1.msra.mxu0 0.0
    %2640 = vmatprep.subr.mxu0 0.0
    %2641 = vmatpush1.msra.mxu0 0.0
    %2642 = vmatprep.subr.mxu0 0.0
    %2643 = vmatpush1.msra.mxu0 0.0
    %2644 = vmatprep.subr.mxu0 0.0
    %2645 = vmatpush1.msra.mxu0 0.0
    %2646 = vmatprep.subr.mxu0 0.0
    %2647 = vmatpush1.msra.mxu0 0.0
    %2648 = vmatprep.subr.mxu0 0.0
    %2649 = vmatpush1.msra.mxu0 0.0
    %2650 = vmatprep.subr.mxu0 0.0
    %2651 = vmatpush1.msra.mxu0 0.0
    %2652 = vmatprep.subr.mxu0 0.0
    %2653 = vmatpush1.msra.mxu0 0.0
    %2654 = vmatprep.subr.mxu0 0.0
    %2655 = vmatpush1.msra.mxu0 0.0
    %2656 = vmatprep.subr.mxu0 0.0
    %2657 = vmatpush1.msra.mxu0 0.0
    %2658 = vmatprep.subr.mxu0 0.0
    %2659 = vmatpush1.msra.mxu0 0.0
    %2660 = vmatprep.subr.mxu0 0.0
    %2661 = vmatpush1.msra.mxu0 0.0
    %2662 = vmatprep.subr.mxu0 0.0
    %2663 = vmatpush1.msra.mxu0 %v2632
    %2664 = vmatprep.subr.mxu0 0.0
    %2665 = vmatpush1.msra.mxu0 %v2631
    %2666 = vmatprep.subr.mxu0 0.0
    %2667 = vmatpush1.msra.mxu0 %v2630
    %2668 = vmatprep.subr.mxu0 0.0
    %2669 = vmatpush1.msra.mxu0 %v2629
    %2670 = vmatprep.subr.mxu0 0.0
    %2671 = vmatpush2.msra.mxu0 0.0
    %2672 = vmatprep.subr.mxu0 0.0
    %2673 = vmatpush2.msra.mxu0 0.0
    %2674 = vmatprep.subr.mxu0 0.0
    %2675 = vmatpush2.msra.mxu0 0.0
    %2676 = vmatprep.subr.mxu0 0.0
    %2677 = vmatpush2.msra.mxu0 0.0
    %2678 = vmatprep.subr.mxu0 0.0
    %2679 = vmatpush2.msra.mxu0 0.0
    %2680 = vmatprep.subr.mxu0 0.0
    %2681 = vmatpush2.msra.mxu0 0.0
    %2682 = vmatprep.subr.mxu0 0.0
    %2683 = vmatpush2.msra.mxu0 0.0
    %2684 = vmatprep.subr.mxu0 0.0
    %2685 = vmatpush2.msra.mxu0 0.0
    %2686 = vmatprep.subr.mxu0 0.0
    %2687 = vmatpush2.msra.mxu0 0.0
    %2688 = vmatprep.subr.mxu0 0.0
    %2689 = vmatpush2.msra.mxu0 0.0
    %2690 = vmatprep.subr.mxu0 0.0
    %2691 = vmatpush2.msra.mxu0 0.0
    %2692 = vmatprep.subr.mxu0 0.0
    %2693 = vmatpush2.msra.mxu0 0.0
    %2694 = vmatprep.subr.mxu0 0.0
    %2695 = vmatpush2.msra.mxu0 0.0
    %2696 = vmatprep.subr.mxu0 0.0
    %2697 = vmatpush2.msra.mxu0 0.0
    %2698 = vmatprep.subr.mxu0 0.0
    %2699 = vmatpush2.msra.mxu0 0.0
    %2700 = vmatprep.subr.mxu0 0.0
    %2701 = vmatpush2.msra.mxu0 0.0
    %2702 = vmatprep.mubr.f32.mxu0 0.0
    %2703 = vmatmul.mubr.f32.gmra.mxu0 %v2636
    %v2704 = vpop.f32.mrf.mxu0
    %v2705 = vadd.f32 0.0, %v2704
    %v2706 = vpop.f32.mrf.mxu0
    %2707 = vdwg.mxu0
    %v2708 = vadd.f32 %v2627, %v2705
    %s2709 = scalar_lea.vmem %s3, 160
    %v2710 = vld [vmem:[%s2709] sm:$0xff]
    %v2711 = vld [vmem:[%s2709 + $0x8] sm:$0xff]
    %v2712 = vld [vmem:[%s2709 + $0x10] sm:$0xff]
    %v2713 = vld [vmem:[%s2709 + $0x18] sm:$0xff]
    %v2714 = vrot.slane %v2544, 4
    %v2715 = vrot.slane %v2545, 3
    %v2716 = vsel %vm2286, %v2715, %v2714
    %v2717 = vsel %vm2288, %v2716, 0
    %2719 = vmatprep.subr.mxu0 0.0
    %2720 = vmatpush1.msra.mxu0 0.0
    %2721 = vmatprep.subr.mxu0 0.0
    %2722 = vmatpush1.msra.mxu0 0.0
    %2723 = vmatprep.subr.mxu0 0.0
    %2724 = vmatpush1.msra.mxu0 0.0
    %2725 = vmatprep.subr.mxu0 0.0
    %2726 = vmatpush1.msra.mxu0 0.0
    %2727 = vmatprep.subr.mxu0 0.0
    %2728 = vmatpush1.msra.mxu0 0.0
    %2729 = vmatprep.subr.mxu0 0.0
    %2730 = vmatpush1.msra.mxu0 0.0
    %2731 = vmatprep.subr.mxu0 0.0
    %2732 = vmatpush1.msra.mxu0 0.0
    %2733 = vmatprep.subr.mxu0 0.0
    %2734 = vmatpush1.msra.mxu0 0.0
    %2735 = vmatprep.subr.mxu0 0.0
    %2736 = vmatpush1.msra.mxu0 0.0
    %2737 = vmatprep.subr.mxu0 0.0
    %2738 = vmatpush1.msra.mxu0 0.0
    %2739 = vmatprep.subr.mxu0 0.0
    %2740 = vmatpush1.msra.mxu0 0.0
    %2741 = vmatprep.subr.mxu0 0.0
    %2742 = vmatpush1.msra.mxu0 0.0
    %2743 = vmatprep.subr.mxu0 0.0
    %2744 = vmatpush1.msra.mxu0 %v2713
    %2745 = vmatprep.subr.mxu0 0.0
    %2746 = vmatpush1.msra.mxu0 %v2712
    %2747 = vmatprep.subr.mxu0 0.0
    %2748 = vmatpush1.msra.mxu0 %v2711
    %2749 = vmatprep.subr.mxu0 0.0
    %2750 = vmatpush1.msra.mxu0 %v2710
    %2751 = vmatprep.subr.mxu0 0.0
    %2752 = vmatpush2.msra.mxu0 0.0
    %2753 = vmatprep.subr.mxu0 0.0
    %2754 = vmatpush2.msra.mxu0 0.0
    %2755 = vmatprep.subr.mxu0 0.0
    %2756 = vmatpush2.msra.mxu0 0.0
    %2757 = vmatprep.subr.mxu0 0.0
    %2758 = vmatpush2.msra.mxu0 0.0
    %2759 = vmatprep.subr.mxu0 0.0
    %2760 = vmatpush2.msra.mxu0 0.0
    %2761 = vmatprep.subr.mxu0 0.0
    %2762 = vmatpush2.msra.mxu0 0.0
    %2763 = vmatprep.subr.mxu0 0.0
    %2764 = vmatpush2.msra.mxu0 0.0
    %2765 = vmatprep.subr.mxu0 0.0
    %2766 = vmatpush2.msra.mxu0 0.0
    %2767 = vmatprep.subr.mxu0 0.0
    %2768 = vmatpush2.msra.mxu0 0.0
    %2769 = vmatprep.subr.mxu0 0.0
    %2770 = vmatpush2.msra.mxu0 0.0
    %2771 = vmatprep.subr.mxu0 0.0
    %2772 = vmatpush2.msra.mxu0 0.0
    %2773 = vmatprep.subr.mxu0 0.0
    %2774 = vmatpush2.msra.mxu0 0.0
    %2775 = vmatprep.subr.mxu0 0.0
    %2776 = vmatpush2.msra.mxu0 0.0
    %2777 = vmatprep.subr.mxu0 0.0
    %2778 = vmatpush2.msra.mxu0 0.0
    %2779 = vmatprep.subr.mxu0 0.0
    %2780 = vmatpush2.msra.mxu0 0.0
    %2781 = vmatprep.subr.mxu0 0.0
    %2782 = vmatpush2.msra.mxu0 0.0
    %2783 = vmatprep.mubr.f32.mxu0 0.0
    %2784 = vmatmul.mubr.f32.gmra.mxu0 %v2717
    %v2785 = vpop.f32.mrf.mxu0
    %v2786 = vadd.f32 0.0, %v2785
    %v2787 = vpop.f32.mrf.mxu0
    %2788 = vdwg.mxu0
    %v2789 = vadd.f32 %v2708, %v2786
    %v2792 = vrot.slane %v2234, 1
    %v2793 = vrot.slane %v2240, 1
    %v2796 = vmax.f32 %v2234, %v2792
    %v2797 = vmax.f32 %v2240, %v2793
    %v2800 = vrot.slane %v2235, 1
    %v2801 = vrot.slane %v2241, 1
    %v2804 = vmax.f32 %v2235, %v2800
    %v2805 = vmax.f32 %v2241, %v2801
    %v2806 = vmax.f32 %v2796, %v2804
    %v2807 = vmax.f32 %v2797, %v2805
    %v2808 = vadd.f32 %v2806, %v2273
    %v2809 = vadd.f32 %v2807, %v2273
    %v2810 = vmax.f32 %v2808, 0.0
    %v2811 = vmax.f32 %v2809, 0.0
    %s2812 = scalar_lea.vmem %s3, 192
    %v2813 = vld [vmem:[%s2812] sm:$0xff]
    %v2814 = vld [vmem:[%s2812 + $0x8] sm:$0xff]
    %v2815 = vld [vmem:[%s2812 + $0x10] sm:$0xff]
    %v2816 = vld [vmem:[%s2812 + $0x18] sm:$0xff]
    %v2819 = vrot.slane %v2811, 7
    %v2820 = vsel %vm2286, %v2819, %v2810
    %v2821 = vsel %vm2288, %v2820, 0
    %2823 = vmatprep.subr.mxu0 0.0
    %2824 = vmatpush1.msra.mxu0 0.0
    %2825 = vmatprep.subr.mxu0 0.0
    %2826 = vmatpush1.msra.mxu0 0.0
    %2827 = vmatprep.subr.mxu0 0.0
    %2828 = vmatpush1.msra.mxu0 0.0
    %2829 = vmatprep.subr.mxu0 0.0
    %2830 = vmatpush1.msra.mxu0 0.0
    %2831 = vmatprep.subr.mxu0 0.0
    %2832 = vmatpush1.msra.mxu0 0.0
    %2833 = vmatprep.subr.mxu0 0.0
    %2834 = vmatpush1.msra.mxu0 0.0
    %2835 = vmatprep.subr.mxu0 0.0
    %2836 = vmatpush1.msra.mxu0 0.0
    %2837 = vmatprep.subr.mxu0 0.0
    %2838 = vmatpush1.msra.mxu0 0.0
    %2839 = vmatprep.subr.mxu0 0.0
    %2840 = vmatpush1.msra.mxu0 0.0
    %2841 = vmatprep.subr.mxu0 0.0
    %2842 = vmatpush1.msra.mxu0 0.0
    %2843 = vmatprep.subr.mxu0 0.0
    %2844 = vmatpush1.msra.mxu0 0.0
    %2845 = vmatprep.subr.mxu0 0.0
    %2846 = vmatpush1.msra.mxu0 0.0
    %2847 = vmatprep.subr.mxu0 0.0
    %2848 = vmatpush1.msra.mxu0 %v2816
    %2849 = vmatprep.subr.mxu0 0.0
    %2850 = vmatpush1.msra.mxu0 %v2815
    %2851 = vmatprep.subr.mxu0 0.0
    %2852 = vmatpush1.msra.mxu0 %v2814
    %2853 = vmatprep.subr.mxu0 0.0
    %2854 = vmatpush1.msra.mxu0 %v2813
    %2855 = vmatprep.subr.mxu0 0.0
    %2856 = vmatpush2.msra.mxu0 0.0
    %2857 = vmatprep.subr.mxu0 0.0
    %2858 = vmatpush2.msra.mxu0 0.0
    %2859 = vmatprep.subr.mxu0 0.0
    %2860 = vmatpush2.msra.mxu0 0.0
    %2861 = vmatprep.subr.mxu0 0.0
    %2862 = vmatpush2.msra.mxu0 0.0
    %2863 = vmatprep.subr.mxu0 0.0
    %2864 = vmatpush2.msra.mxu0 0.0
    %2865 = vmatprep.subr.mxu0 0.0
    %2866 = vmatpush2.msra.mxu0 0.0
    %2867 = vmatprep.subr.mxu0 0.0
    %2868 = vmatpush2.msra.mxu0 0.0
    %2869 = vmatprep.subr.mxu0 0.0
    %2870 = vmatpush2.msra.mxu0 0.0
    %2871 = vmatprep.subr.mxu0 0.0
    %2872 = vmatpush2.msra.mxu0 0.0
    %2873 = vmatprep.subr.mxu0 0.0
    %2874 = vmatpush2.msra.mxu0 0.0
    %2875 = vmatprep.subr.mxu0 0.0
    %2876 = vmatpush2.msra.mxu0 0.0
    %2877 = vmatprep.subr.mxu0 0.0
    %2878 = vmatpush2.msra.mxu0 0.0
    %2879 = vmatprep.subr.mxu0 0.0
    %2880 = vmatpush2.msra.mxu0 0.0
    %2881 = vmatprep.subr.mxu0 0.0
    %2882 = vmatpush2.msra.mxu0 0.0
    %2883 = vmatprep.subr.mxu0 0.0
    %2884 = vmatpush2.msra.mxu0 0.0
    %2885 = vmatprep.subr.mxu0 0.0
    %2886 = vmatpush2.msra.mxu0 0.0
    %2887 = vmatprep.mubr.f32.mxu0 0.0
    %2888 = vmatmul.mubr.f32.gmra.mxu0 %v2821
    %v2889 = vpop.f32.mrf.mxu0
    %v2890 = vadd.f32 0.0, %v2889
    %v2891 = vpop.f32.mrf.mxu0
    %2892 = vdwg.mxu0
    %v2893 = vadd.f32 %v2789, %v2890
    %s2894 = scalar_lea.vmem %s3, 224
    %v2895 = vld [vmem:[%s2894] sm:$0xff]
    %v2896 = vld [vmem:[%s2894 + $0x8] sm:$0xff]
    %v2897 = vld [vmem:[%s2894 + $0x10] sm:$0xff]
    %v2898 = vld [vmem:[%s2894 + $0x18] sm:$0xff]
    %v2899 = vrot.slane %v2810, 2
    %v2900 = vrot.slane %v2811, 1
    %v2901 = vsel %vm2286, %v2900, %v2899
    %v2902 = vsel %vm2288, %v2901, 0
    %2904 = vmatprep.subr.mxu0 0.0
    %2905 = vmatpush1.msra.mxu0 0.0
    %2906 = vmatprep.subr.mxu0 0.0
    %2907 = vmatpush1.msra.mxu0 0.0
    %2908 = vmatprep.subr.mxu0 0.0
    %2909 = vmatpush1.msra.mxu0 0.0
    %2910 = vmatprep.subr.mxu0 0.0
    %2911 = vmatpush1.msra.mxu0 0.0
    %2912 = vmatprep.subr.mxu0 0.0
    %2913 = vmatpush1.msra.mxu0 0.0
    %2914 = vmatprep.subr.mxu0 0.0
    %2915 = vmatpush1.msra.mxu0 0.0
    %2916 = vmatprep.subr.mxu0 0.0
    %2917 = vmatpush1.msra.mxu0 0.0
    %2918 = vmatprep.subr.mxu0 0.0
    %2919 = vmatpush1.msra.mxu0 0.0
    %2920 = vmatprep.subr.mxu0 0.0
    %2921 = vmatpush1.msra.mxu0 0.0
    %2922 = vmatprep.subr.mxu0 0.0
    %2923 = vmatpush1.msra.mxu0 0.0
    %2924 = vmatprep.subr.mxu0 0.0
    %2925 = vmatpush1.msra.mxu0 0.0
    %2926 = vmatprep.subr.mxu0 0.0
    %2927 = vmatpush1.msra.mxu0 0.0
    %2928 = vmatprep.subr.mxu0 0.0
    %2929 = vmatpush1.msra.mxu0 %v2898
    %2930 = vmatprep.subr.mxu0 0.0
    %2931 = vmatpush1.msra.mxu0 %v2897
    %2932 = vmatprep.subr.mxu0 0.0
    %2933 = vmatpush1.msra.mxu0 %v2896
    %2934 = vmatprep.subr.mxu0 0.0
    %2935 = vmatpush1.msra.mxu0 %v2895
    %2936 = vmatprep.subr.mxu0 0.0
    %2937 = vmatpush2.msra.mxu0 0.0
    %2938 = vmatprep.subr.mxu0 0.0
    %2939 = vmatpush2.msra.mxu0 0.0
    %2940 = vmatprep.subr.mxu0 0.0
    %2941 = vmatpush2.msra.mxu0 0.0
    %2942 = vmatprep.subr.mxu0 0.0
    %2943 = vmatpush2.msra.mxu0 0.0
    %2944 = vmatprep.subr.mxu0 0.0
    %2945 = vmatpush2.msra.mxu0 0.0
    %2946 = vmatprep.subr.mxu0 0.0
    %2947 = vmatpush2.msra.mxu0 0.0
    %2948 = vmatprep.subr.mxu0 0.0
    %2949 = vmatpush2.msra.mxu0 0.0
    %2950 = vmatprep.subr.mxu0 0.0
    %2951 = vmatpush2.msra.mxu0 0.0
    %2952 = vmatprep.subr.mxu0 0.0
    %2953 = vmatpush2.msra.mxu0 0.0
    %2954 = vmatprep.subr.mxu0 0.0
    %2955 = vmatpush2.msra.mxu0 0.0
    %2956 = vmatprep.subr.mxu0 0.0
    %2957 = vmatpush2.msra.mxu0 0.0
    %2958 = vmatprep.subr.mxu0 0.0
    %2959 = vmatpush2.msra.mxu0 0.0
    %2960 = vmatprep.subr.mxu0 0.0
    %2961 = vmatpush2.msra.mxu0 0.0
    %2962 = vmatprep.subr.mxu0 0.0
    %2963 = vmatpush2.msra.mxu0 0.0
    %2964 = vmatprep.subr.mxu0 0.0
    %2965 = vmatpush2.msra.mxu0 0.0
    %2966 = vmatprep.subr.mxu0 0.0
    %2967 = vmatpush2.msra.mxu0 0.0
    %2968 = vmatprep.mubr.f32.mxu0 0.0
    %2969 = vmatmul.mubr.f32.gmra.mxu0 %v2902
    %v2970 = vpop.f32.mrf.mxu0
    %v2971 = vadd.f32 0.0, %v2970
    %v2972 = vpop.f32.mrf.mxu0
    %2973 = vdwg.mxu0
    %v2974 = vadd.f32 %v2893, %v2971
    %s2975 = scalar_lea.vmem %s3, 256
    %v2976 = vld [vmem:[%s2975] sm:$0xff]
    %v2977 = vld [vmem:[%s2975 + $0x8] sm:$0xff]
    %v2978 = vld [vmem:[%s2975 + $0x10] sm:$0xff]
    %v2979 = vld [vmem:[%s2975 + $0x18] sm:$0xff]
    %v2980 = vrot.slane %v2810, 4
    %v2981 = vrot.slane %v2811, 3
    %v2982 = vsel %vm2286, %v2981, %v2980
    %v2983 = vsel %vm2288, %v2982, 0
    %2985 = vmatprep.subr.mxu0 0.0
    %2986 = vmatpush1.msra.mxu0 0.0
    %2987 = vmatprep.subr.mxu0 0.0
    %2988 = vmatpush1.msra.mxu0 0.0
    %2989 = vmatprep.subr.mxu0 0.0
    %2990 = vmatpush1.msra.mxu0 0.0
    %2991 = vmatprep.subr.mxu0 0.0
    %2992 = vmatpush1.msra.mxu0 0.0
    %2993 = vmatprep.subr.mxu0 0.0
    %2994 = vmatpush1.msra.mxu0 0.0
    %2995 = vmatprep.subr.mxu0 0.0
    %2996 = vmatpush1.msra.mxu0 0.0
    %2997 = vmatprep.subr.mxu0 0.0
    %2998 = vmatpush1.msra.mxu0 0.0
    %2999 = vmatprep.subr.mxu0 0.0
    %3000 = vmatpush1.msra.mxu0 0.0
    %3001 = vmatprep.subr.mxu0 0.0
    %3002 = vmatpush1.msra.mxu0 0.0
    %3003 = vmatprep.subr.mxu0 0.0
    %3004 = vmatpush1.msra.mxu0 0.0
    %3005 = vmatprep.subr.mxu0 0.0
    %3006 = vmatpush1.msra.mxu0 0.0
    %3007 = vmatprep.subr.mxu0 0.0
    %3008 = vmatpush1.msra.mxu0 0.0
    %3009 = vmatprep.subr.mxu0 0.0
    %3010 = vmatpush1.msra.mxu0 %v2979
    %3011 = vmatprep.subr.mxu0 0.0
    %3012 = vmatpush1.msra.mxu0 %v2978
    %3013 = vmatprep.subr.mxu0 0.0
    %3014 = vmatpush1.msra.mxu0 %v2977
    %3015 = vmatprep.subr.mxu0 0.0
    %3016 = vmatpush1.msra.mxu0 %v2976
    %3017 = vmatprep.subr.mxu0 0.0
    %3018 = vmatpush2.msra.mxu0 0.0
    %3019 = vmatprep.subr.mxu0 0.0
    %3020 = vmatpush2.msra.mxu0 0.0
    %3021 = vmatprep.subr.mxu0 0.0
    %3022 = vmatpush2.msra.mxu0 0.0
    %3023 = vmatprep.subr.mxu0 0.0
    %3024 = vmatpush2.msra.mxu0 0.0
    %3025 = vmatprep.subr.mxu0 0.0
    %3026 = vmatpush2.msra.mxu0 0.0
    %3027 = vmatprep.subr.mxu0 0.0
    %3028 = vmatpush2.msra.mxu0 0.0
    %3029 = vmatprep.subr.mxu0 0.0
    %3030 = vmatpush2.msra.mxu0 0.0
    %3031 = vmatprep.subr.mxu0 0.0
    %3032 = vmatpush2.msra.mxu0 0.0
    %3033 = vmatprep.subr.mxu0 0.0
    %3034 = vmatpush2.msra.mxu0 0.0
    %3035 = vmatprep.subr.mxu0 0.0
    %3036 = vmatpush2.msra.mxu0 0.0
    %3037 = vmatprep.subr.mxu0 0.0
    %3038 = vmatpush2.msra.mxu0 0.0
    %3039 = vmatprep.subr.mxu0 0.0
    %3040 = vmatpush2.msra.mxu0 0.0
    %3041 = vmatprep.subr.mxu0 0.0
    %3042 = vmatpush2.msra.mxu0 0.0
    %3043 = vmatprep.subr.mxu0 0.0
    %3044 = vmatpush2.msra.mxu0 0.0
    %3045 = vmatprep.subr.mxu0 0.0
    %3046 = vmatpush2.msra.mxu0 0.0
    %3047 = vmatprep.subr.mxu0 0.0
    %3048 = vmatpush2.msra.mxu0 0.0
    %3049 = vmatprep.mubr.f32.mxu0 0.0
    %3050 = vmatmul.mubr.f32.gmra.mxu0 %v2983
    %v3051 = vpop.f32.mrf.mxu0
    %v3052 = vadd.f32 0.0, %v3051
    %v3053 = vpop.f32.mrf.mxu0
    %3054 = vdwg.mxu0
    %v3055 = vadd.f32 %v2974, %v3052
    %v3056 = vmax.f32 %v3055, 0.0
    %v3057 = vld [vmem:[%s5] sm:$0xff]
    %v3058 = vld [vmem:[%s5 + $0x8] sm:$0xff]
    %v3059 = vld [vmem:[%s5 + $0x10] sm:$0xff]
    %v3060 = vld [vmem:[%s5 + $0x18] sm:$0xff]
    %v3061 = vld [vmem:[%s5 + $0x20] sm:$0xff]
    %v3062 = vld [vmem:[%s5 + $0x28] sm:$0xff]
    %v3063 = vld [vmem:[%s5 + $0x30] sm:$0xff]
    %v3064 = vld [vmem:[%s5 + $0x38] sm:$0xff]
    %v3065 = vld [vmem:[%s5 + $0x40] sm:$0xff]
    %v3066 = vld [vmem:[%s5 + $0x48] sm:$0xff]
    %v3067 = vld [vmem:[%s5 + $0x50] sm:$0xff]
    %v3068 = vld [vmem:[%s5 + $0x58] sm:$0xff]
    %v3069 = vld [vmem:[%s5 + $0x60] sm:$0xff]
    %v3070 = vld [vmem:[%s5 + $0x68] sm:$0xff]
    %v3071 = vld [vmem:[%s5 + $0x70] sm:$0xff]
    %v3072 = vld [vmem:[%s5 + $0x78] sm:$0xff]
    %v3073 = vld [vmem:[%s6] sm:$0x1]
    %v3075 = vlaneseq
    %v3076 = vshrl.u32 %v3075, 7
    %v3077 = vsub.s32 0, %v3076
    %v3078 = vrot.slane %v3073, %v3077
    %3080 = vmatprep.subr.mxu0 0.0
    %3081 = vmatpush1.msra.mxu0 %v3072
    %3082 = vmatprep.subr.mxu0 0.0
    %3083 = vmatpush1.msra.mxu0 %v3071
    %3084 = vmatprep.subr.mxu0 0.0
    %3085 = vmatpush1.msra.mxu0 %v3070
    %3086 = vmatprep.subr.mxu0 0.0
    %3087 = vmatpush1.msra.mxu0 %v3069
    %3088 = vmatprep.subr.mxu0 0.0
    %3089 = vmatpush1.msra.mxu0 %v3068
    %3090 = vmatprep.subr.mxu0 0.0
    %3091 = vmatpush1.msra.mxu0 %v3067
    %3092 = vmatprep.subr.mxu0 0.0
    %3093 = vmatpush1.msra.mxu0 %v3066
    %3094 = vmatprep.subr.mxu0 0.0
    %3095 = vmatpush1.msra.mxu0 %v3065
    %3096 = vmatprep.subr.mxu0 0.0
    %3097 = vmatpush1.msra.mxu0 %v3064
    %3098 = vmatprep.subr.mxu0 0.0
    %3099 = vmatpush1.msra.mxu0 %v3063
    %3100 = vmatprep.subr.mxu0 0.0
    %3101 = vmatpush1.msra.mxu0 %v3062
    %3102 = vmatprep.subr.mxu0 0.0
    %3103 = vmatpush1.msra.mxu0 %v3061
    %3104 = vmatprep.subr.mxu0 0.0
    %3105 = vmatpush1.msra.mxu0 %v3060
    %3106 = vmatprep.subr.mxu0 0.0
    %3107 = vmatpush1.msra.mxu0 %v3059
    %3108 = vmatprep.subr.mxu0 0.0
    %3109 = vmatpush1.msra.mxu0 %v3058
    %3110 = vmatprep.subr.mxu0 0.0
    %3111 = vmatpush1.msra.mxu0 %v3057
    %3112 = vmatprep.subr.mxu0 0.0
    %3113 = vmatpush2.msra.mxu0 0.0
    %3114 = vmatprep.subr.mxu0 0.0
    %3115 = vmatpush2.msra.mxu0 0.0
    %3116 = vmatprep.subr.mxu0 0.0
    %3117 = vmatpush2.msra.mxu0 0.0
    %3118 = vmatprep.subr.mxu0 0.0
    %3119 = vmatpush2.msra.mxu0 0.0
    %3120 = vmatprep.subr.mxu0 0.0
    %3121 = vmatpush2.msra.mxu0 0.0
    %3122 = vmatprep.subr.mxu0 0.0
    %3123 = vmatpush2.msra.mxu0 0.0
    %3124 = vmatprep.subr.mxu0 0.0
    %3125 = vmatpush2.msra.mxu0 0.0
    %3126 = vmatprep.subr.mxu0 0.0
    %3127 = vmatpush2.msra.mxu0 0.0
    %3128 = vmatprep.subr.mxu0 0.0
    %3129 = vmatpush2.msra.mxu0 0.0
    %3130 = vmatprep.subr.mxu0 0.0
    %3131 = vmatpush2.msra.mxu0 0.0
    %3132 = vmatprep.subr.mxu0 0.0
    %3133 = vmatpush2.msra.mxu0 0.0
    %3134 = vmatprep.subr.mxu0 0.0
    %3135 = vmatpush2.msra.mxu0 0.0
    %3136 = vmatprep.subr.mxu0 0.0
    %3137 = vmatpush2.msra.mxu0 0.0
    %3138 = vmatprep.subr.mxu0 0.0
    %3139 = vmatpush2.msra.mxu0 0.0
    %3140 = vmatprep.subr.mxu0 0.0
    %3141 = vmatpush2.msra.mxu0 0.0
    %3142 = vmatprep.subr.mxu0 0.0
    %3143 = vmatpush2.msra.mxu0 0.0
    %3144 = vmatprep.mubr.f32.mxu0 0.0
    %3145 = vmatmul.mubr.f32.gmra.mxu0 %v3056
    %v3146 = vpop.f32.mrf.mxu0
    %v3147 = vadd.f32 %v3078, %v3146
    %v3148 = vpop.f32.mrf.mxu0
    %3149 = vdwg.mxu0
    %3150 = vst [vmem:[#allocation2] sm:$0x3] %v3147
    // Predicated region
    $region30: #{net2_forward.1} parent=1 // pred_check
      _
    $region31: #{net2_forward.1} parent=1 // pred_check_branch
      %3152 = sbr.rel (0) target = $region33
    $region32: #{net2_forward.1} parent=1 // pred_region
      %s3154 = ssub.s32 32, 32
      %3155 = vsyncadd [#allocation3], %s3154
      %s3157 = sshll.u32 [#allocation2], 4
      %s3158 = int_to_ptr.vmem [resolvable:$true] %s3157
      %3160 = dma.vmem_to_hbm [thread:$0]  %s3158, 32, %s7, [#allocation3]
    $region33: #{net2_forward.1} parent=1 // pred_fallthru
      _
    // Predicated region
    $region34: #{net2_forward.1} parent=1 // pred_check
      _
    $region35: #{net2_forward.1} parent=1 // pred_check_branch
      %3162 = sbr.rel (0) target = $region37
    $region36: #{net2_forward.1} parent=1 // pred_region
      %3163 = dma.done [#allocation3], 32
    $region37: #{net2_forward.1} parent=1 // pred_fallthru
      _
    %3164 = vsyncpa [#allocation3], 1

</llo_original>
